<compile_context>
chip_gen: v6e
topology: v6e:2x2x1
jax: 0.10.0
libtpu: 0.0.40
codegen_flags: <defaults>
</compile_context>

<pallas_src>
import jax
import jax.numpy as jnp
from jax.experimental import pallas as pl
from jax.experimental.pallas import tpu as pltpu

LANE = 128
SUBLANE = 8


def _round_up(x, m):
    return ((x + m - 1) // m) * m


def _cdiv(a, b):
    return -(-a // b)


def _pad2(a, rows, cols):
    r, c = a.shape
    return jnp.pad(a, ((0, rows - r), (0, cols - c)))


# ----------------------------------------------------------------------------
# Kernel
# ----------------------------------------------------------------------------
def deers_kernel(
    x_ref,
    w_enc_ref, b_enc_ref,
    w_dd_ref, b_dd_ref,
    w_cd_ref, b_cd_ref,
    w_f1_ref, b_f1_ref,
    w_f2_ref, b_f2_ref,
    pred_ref, drug_rec_ref, cell_rec_ref,
):
    f32 = jnp.float32
    cdt = w_enc_ref.dtype  # MXU compute dtype (bfloat16)

    # Fused block-diagonal encoder: one (TB, in_cat) x (in_cat, code_cat) MXU pass
    # produces [drug_code | np_code | cell_code] -- already the concat for the
    # forward network, so no jnp.concatenate is needed.
    codes = jnp.maximum(
        jnp.dot(x_ref[...], w_enc_ref[...], preferred_element_type=f32)
        + b_enc_ref[...],
        0.0,
    )
    codes_c = codes.astype(cdt)

    cdp = w_dd_ref.shape[0]          # padded drug-code width (128-aligned)
    ccp = w_cd_ref.shape[0]          # padded cell-code width (128-aligned)
    code_cat = codes_c.shape[-1]

    # Decoders read 128-lane-aligned slices of the fused code block (cheap views).
    drug_code = codes_c[:, :cdp]
    cell_code = codes_c[:, code_cat - ccp:]

    drug_rec_ref[...] = (
        jnp.dot(drug_code, w_dd_ref[...], preferred_element_type=f32)
        + b_dd_ref[...]
    ).astype(drug_rec_ref.dtype)
    cell_rec_ref[...] = (
        jnp.dot(cell_code, w_cd_ref[...], preferred_element_type=f32)
        + b_cd_ref[...]
    ).astype(cell_rec_ref.dtype)

    # forward_network: Linear + ReLU on the fused code block, then the
    # Linear(hidden -> 1) head as a VPU lane reduction (w_f2 stored as (1, hp)).
    h = jnp.maximum(
        jnp.dot(codes_c, w_f1_ref[...], preferred_element_type=f32) + b_f1_ref[...],
        0.0,
    )
    pred = jnp.sum(h * w_f2_ref[...], axis=-1, keepdims=True) + b_f2_ref[...]
    pred_ref[...] = pred.astype(pred_ref.dtype)


# ----------------------------------------------------------------------------
# Parameter preparation (block-diagonal encoder, 128-lane padding, bf16 cast)
# ----------------------------------------------------------------------------
def prepare_params(params, *, drug_code, np_code, cell_code,
                   compute_dtype=jnp.bfloat16):
    f32 = jnp.float32
    drug_dim = params["w_de"].shape[0]
    cell_dim = params["w_ce"].shape[0]
    np_dim = params["w_np"].shape[0]
    hidden = params["w_f1"].shape[1]

    ddp = _round_up(drug_dim, LANE)
    ndp = _round_up(np_dim, LANE)
    cldp = _round_up(cell_dim, LANE)
    cdp = _round_up(drug_code, LANE)
    cnp = _round_up(np_code, LANE)
    ccp = _round_up(cell_code, LANE)
    hp = _round_up(hidden, LANE)

    in_cat = ddp + ndp + cldp          # input order:  [drug | np | cell]
    code_cat = cdp + cnp + ccp         # code order:   [drug | np | cell]

    # Block-diagonal encoder weight + concatenated encoder bias.
    w_enc = jnp.zeros((in_cat, code_cat), f32)
    w_enc = w_enc.at[:drug_dim, :drug_code].set(params["w_de"])
    w_enc = w_enc.at[ddp:ddp + np_dim, cdp:cdp + np_code].set(params["w_np"])
    w_enc = w_enc.at[ddp + ndp:ddp + ndp + cell_dim,
                     cdp + cnp:cdp + cnp + cell_code].set(params["w_ce"])
    b_enc = jnp.zeros((1, code_cat), f32)
    b_enc = b_enc.at[:, :drug_code].set(params["b_de"])
    b_enc = b_enc.at[:, cdp:cdp + np_code].set(params["b_np"])
    b_enc = b_enc.at[:, cdp + cnp:cdp + cnp + cell_code].set(params["b_ce"])

    # First forward-network weight, row-split to match the (drug, np, cell)
    # code order, each block padded to its 128-aligned code width.
    w_f1 = params["w_f1"]
    w_f1_cat = jnp.concatenate(
        [_pad2(w_f1[:drug_code], cdp, hp),
         _pad2(w_f1[drug_code:drug_code + np_code], cnp, hp),
         _pad2(w_f1[drug_code + np_code:], ccp, hp)],
        axis=0,
    )

    return dict(
        w_enc=w_enc.astype(compute_dtype),
        b_enc=b_enc.astype(f32),
        w_dd=_pad2(params["w_dd"], cdp, ddp).astype(compute_dtype),
        b_dd=_pad2(params["b_dd"], 1, ddp).astype(f32),
        w_cd=_pad2(params["w_cd"], ccp, cldp).astype(compute_dtype),
        b_cd=_pad2(params["b_cd"], 1, cldp).astype(f32),
        w_f1=w_f1_cat.astype(compute_dtype),
        b_f1=_pad2(params["b_f1"], 1, hp).astype(f32),
        w_f2=_pad2(params["w_f2"].T, 1, hp).astype(f32),
        b_f2=params["b_f2"].reshape(1, 1).astype(f32),
        dims=dict(drug_dim=drug_dim, cell_dim=cell_dim, np_dim=np_dim,
                  ddp=ddp, ndp=ndp, cldp=cldp,
                  cdp=cdp, cnp=cnp, ccp=ccp, hp=hp),
    )


def prepare_inputs(drug_features, cell_line_features, np_features, prepared):
    """Pad each feature block to its 128-lane width, concatenate in
    (drug | np | cell) order and cast to the MXU compute dtype.  Store / pass
    features in this layout (or call under jit so it fuses into one pass) so
    the kernel's input reads are a single lane-dense bf16 DMA."""
    d = prepared["dims"]

    def padf(x, dp):
        return jnp.pad(x, ((0, 0), (0, dp - x.shape[1])))

    x_cat = jnp.concatenate(
        [padf(drug_features, d["ddp"]),
         padf(np_features, d["ndp"]),
         padf(cell_line_features, d["cldp"])],
        axis=1,
    )
    return x_cat.astype(prepared["w_enc"].dtype)


# ----------------------------------------------------------------------------
# Wrapper
# ----------------------------------------------------------------------------
def deers_concat_forward(drug_features, cell_line_features, np_features,
                         prepared, *, batch_tile=512,
                         recon_dtype=jnp.bfloat16):
    d = prepared["dims"]
    B = drug_features.shape[0]
    drug_dim, cell_dim = d["drug_dim"], d["cell_dim"]
    ddp, ndp, cldp = d["ddp"], d["ndp"], d["cldp"]
    in_cat = ddp + ndp + cldp
    code_cat = d["cdp"] + d["cnp"] + d["ccp"]
    hp = d["hp"]

    # One-time input layout (hoist in production; fuses to one pass under jit).
    x_cat = prepare_inputs(drug_features, cell_line_features, np_features, prepared)
    c_item = jnp.dtype(x_cat.dtype).itemsize
    r_item = jnp.dtype(recon_dtype).itemsize

    weights = (prepared["w_enc"], prepared["b_enc"],
               prepared["w_dd"], prepared["b_dd"],
               prepared["w_cd"], prepared["b_cd"],
               prepared["w_f1"], prepared["b_f1"],
               prepared["w_f2"], prepared["b_f2"])
    weight_bytes = sum(int(w.size) * w.dtype.itemsize for w in weights)

    def vmem_estimate(tb):
        in_b = tb * in_cat * c_item                       # bf16 input tile
        out_b = tb * (1 * 4 + (ddp + cldp) * r_item)      # pred + recon tiles
        # Kernel intermediates: codes (f32 + bf16 copy), h, recon temps (f32).
        inter = tb * (code_cat * (4 + c_item) + hp * 4 + (ddp + cldp) * 4)
        # 2x for double buffering of streamed tiles + (default) 2x weights.
        return 2 * (in_b + out_b) + 2 * weight_bytes + inter + (4 << 20)

    VMEM_BUDGET = 48 << 20   # headroom below v7x's 64 MiB physical VMEM

    # Batch tiling: choose the tile count first so TB divides the 8-rounded
    # batch (no round-up waste); keep the count even when > 1 so a "parallel"
    # batch axis splits evenly across v7x's two TensorCores; small batches run
    # as a single resident grid step (best for v5e/v6e: no pipeline overhead).
    B8 = _round_up(max(B, 1), SUBLANE)
    n_tiles = max(1, _cdiv(B8, max(SUBLANE, batch_tile)))
    if n_tiles > 1 and n_tiles % 2:
        n_tiles += 1
    TB = _round_up(_cdiv(B8, n_tiles), SUBLANE)
    while TB > SUBLANE and vmem_estimate(TB) > VMEM_BUDGET:
        n_tiles *= 2                                  # stays even
        TB = _round_up(_cdiv(B8, n_tiles), SUBLANE)
    B_pad = TB * n_tiles

    x_cat = jnp.pad(x_cat, ((0, B_pad - B), (0, 0)))

    def batch_spec(dim):
        return pl.BlockSpec((TB, dim), lambda i: (i, 0))

    def const_spec(arr):
        # Full-array block + constant index_map -> stays resident in VMEM.
        return pl.BlockSpec(arr.shape, lambda i: (0, 0))

    in_specs = [batch_spec(in_cat)] + [const_spec(w) for w in weights]
    out_specs = (batch_spec(1), batch_spec(ddp), batch_spec(cldp))
    out_shapes = (
        jax.ShapeDtypeStruct((B_pad, 1), jnp.float32),      # prediction
        jax.ShapeDtypeStruct((B_pad, ddp), recon_dtype),    # drug reconstruction
        jax.ShapeDtypeStruct((B_pad, cldp), recon_dtype),   # cell reconstruction
    )

    flops = 2 * B_pad * (in_cat * code_cat + d["cdp"] * ddp + d["ccp"] * cldp
                         + code_cat * hp + hp)
    bytes_accessed = (B_pad * in_cat * c_item + weight_bytes
                      + B_pad * (4 + (ddp + cldp) * r_item))
    cost = pl.CostEstimate(flops=int(flops), transcendentals=0,
                           bytes_accessed=int(bytes_accessed))

    vmem_limit = int(min(VMEM_BUDGET, max(24 << 20, vmem_estimate(TB))))

    pred, drug_rec, cell_rec = pl.pallas_call(
        deers_kernel,
        out_shape=out_shapes,
        grid_spec=pltpu.PrefetchScalarGridSpec(
            num_scalar_prefetch=0,
            grid=(n_tiles,),
            in_specs=in_specs,
            out_specs=out_specs,
        ),
        compiler_params=pltpu.CompilerParams(
            dimension_semantics=("parallel",),   # v7x: shard batch over both TCs
            vmem_limit_bytes=vmem_limit,
        ),
        cost_estimate=cost,
    )(x_cat, *weights)

    # Strip batch / lane padding.
    return pred[:B], drug_rec[:B, :drug_dim], cell_rec[:B, :cell_dim]


# ----------------------------------------------------------------------------
# Parameters & references
# ----------------------------------------------------------------------------
def init_params(key, drug_dim, cell_dim, np_dim, drug_code, cell_code, np_code,
                hidden):
    ks = jax.random.split(key, 7)

    def lin(k, fan_in, fan_out):
        kw, kb = jax.random.split(k)
        w = jax.random.normal(kw, (fan_in, fan_out), jnp.float32) / jnp.sqrt(fan_in)
        b = 0.1 * jax.random.normal(kb, (1, fan_out), jnp.float32)
        return w, b

    w_np, b_np = lin(ks[0], np_dim, np_code)
    w_de, b_de = lin(ks[1], drug_dim, drug_code)
    w_dd, b_dd = lin(ks[2], drug_code, drug_dim)
    w_ce, b_ce = lin(ks[3], cell_dim, cell_code)
    w_cd, b_cd = lin(ks[4], cell_code, cell_dim)
    concat_dim = drug_code + np_code + cell_code
    w_f1, b_f1 = lin(ks[5], concat_dim, hidden)
    w_f2, b_f2 = lin(ks[6], hidden, 1)

    return dict(w_np=w_np, b_np=b_np, w_de=w_de, b_de=b_de, w_dd=w_dd, b_dd=b_dd,
                w_ce=w_ce, b_ce=b_ce, w_cd=w_cd, b_cd=b_cd,
                w_f1=w_f1, b_f1=b_f1, w_f2=w_f2, b_f2=b_f2)


def reference_forward_f32(drug, cell, npf, p):
    """Pure-f32 reference matching the original PyTorch module."""
    np_code = jnp.maximum(npf @ p["w_np"] + p["b_np"], 0.0)
    drug_code = jnp.maximum(drug @ p["w_de"] + p["b_de"], 0.0)
    drug_rec = drug_code @ p["w_dd"] + p["b_dd"]
    cell_code = jnp.maximum(cell @ p["w_ce"] + p["b_ce"], 0.0)
    cell_rec = cell_code @ p["w_cd"] + p["b_cd"]
    x = jnp.concatenate([drug_code, np_code, cell_code], axis=1)
    h = jnp.maximum(x @ p["w_f1"] + p["b_f1"], 0.0)
    pred = h @ p["w_f2"] + p["b_f2"]
    return pred, drug_rec, cell_rec


def reference_forward_prepared(x_cat, pp, recon_dtype=jnp.bfloat16):
    """Mirror of the kernel math on the fused / padded / bf16 params."""
    f32 = jnp.float32
    cdt = pp["w_enc"].dtype
    codes = jnp.maximum(
        jnp.dot(x_cat, pp["w_enc"], preferred_element_type=f32) + pp["b_enc"], 0.0)
    codes_c = codes.astype(cdt)
    cdp = pp["w_dd"].shape[0]
    ccp = pp["w_cd"].shape[0]
    drug_rec = (jnp.dot(codes_c[:, :cdp], pp["w_dd"], preferred_element_type=f32)
                + pp["b_dd"]).astype(recon_dtype)
    cell_rec = (jnp.dot(codes_c[:, codes_c.shape[-1] - ccp:], pp["w_cd"],
                        preferred_element_type=f32) + pp["b_cd"]).astype(recon_dtype)
    h = jnp.maximum(
        jnp.dot(codes_c, pp["w_f1"], preferred_element_type=f32) + pp["b_f1"], 0.0)
    pred = jnp.sum(h * pp["w_f2"], axis=-1, keepdims=True) + pp["b_f2"]
    return pred, drug_rec, cell_rec


# ----------------------------------------------------------------------------
# Demo / correctness check
# ----------------------------------------------------------------------------
if __name__ == "__main__":
    B = 300
    drug_dim, cell_dim, np_dim = 70, 200, 30
    drug_code, cell_code, np_code = 16, 16, 8
    hidden = 32

    key = jax.random.PRNGKey(0)
    k_drug, k_cell, k_np, k_params = jax.random.split(key, 4)

    drug_features = jax.random.normal(k_drug, (B, drug_dim), jnp.float32)
    cell_line_features = jax.random.normal(k_cell, (B, cell_dim), jnp.float32)
    np_features = jax.random.normal(k_np, (B, np_dim), jnp.float32)

    params = init_params(k_params, drug_dim, cell_dim, np_dim,
                         drug_code, cell_code, np_code, hidden)
    prepared = prepare_params(params, drug_code=drug_code, np_code=np_code,
                              cell_code=cell_code)

    fwd = jax.jit(lambda a, b, c: deers_concat_forward(a, b, c, prepared))
    pred, drug_rec, cell_rec = fwd(drug_features, cell_line_features, np_features)
    jax.block_until_ready((pred, drug_rec, cell_rec))

    f32 = jnp.float32

    # (1) Tight check against a reference that mirrors the kernel math
    #     (same fused bf16 padded params, f32 accumulation, bf16 recon cast).
    x_cat_ref = prepare_inputs(drug_features, cell_line_features, np_features,
                               prepared)
    m_pred, m_drec, m_crec = reference_forward_prepared(x_cat_ref, prepared)
    assert jnp.allclose(pred, m_pred, atol=2e-2, rtol=2e-2)
    assert jnp.allclose(drug_rec.astype(f32), m_drec[:, :drug_dim].astype(f32),
                        atol=2e-2, rtol=2e-2)
    assert jnp.allclose(cell_rec.astype(f32), m_crec[:, :cell_dim].astype(f32),
                        atol=2e-2, rtol=2e-2)

    # (2) Loose check against the full-f32 module semantics (bf16 compute path).
    f_pred, f_drec, f_crec = reference_forward_f32(
        drug_features, cell_line_features, np_features, params)
    assert jnp.allclose(pred, f_pred, atol=1e-1, rtol=1e-1)
    assert jnp.allclose(drug_rec.astype(f32), f_drec, atol=1e-1, rtol=1e-1)
    assert jnp.allclose(cell_rec.astype(f32), f_crec, atol=1e-1, rtol=1e-1)

    print("KERNEL_OK")
</pallas_src>

<mosaic_0001>
module attributes {stable_mosaic.version = 11 : i64} {
  func.func @deers_kernel(%arg0: i32, %arg1: memref<304x512xbf16, #tpu.memory_space<vmem>>, %arg2: memref<512x384xbf16, #tpu.memory_space<vmem>>, %arg3: memref<1x384xf32, #tpu.memory_space<vmem>>, %arg4: memref<128x128xbf16, #tpu.memory_space<vmem>>, %arg5: memref<1x128xf32, #tpu.memory_space<vmem>>, %arg6: memref<128x256xbf16, #tpu.memory_space<vmem>>, %arg7: memref<1x256xf32, #tpu.memory_space<vmem>>, %arg8: memref<384x128xbf16, #tpu.memory_space<vmem>>, %arg9: memref<1x128xf32, #tpu.memory_space<vmem>>, %arg10: memref<1x128xf32, #tpu.memory_space<vmem>>, %arg11: memref<1x1xf32, #tpu.memory_space<vmem>>, %arg12: memref<304x1xf32, #tpu.memory_space<vmem>>, %arg13: memref<304x128xbf16, #tpu.memory_space<vmem>>, %arg14: memref<304x256xbf16, #tpu.memory_space<vmem>>) attributes {dimension_semantics = [#tpu.dimension_semantics<parallel>], iteration_bounds = array<i64: 1>, scalar_prefetch = 0 : i64, scratch_operands = 0 : i64, tpu.core_type = #tpu.core_type<tc>, window_params = [{transform_indices = @transform_0, window_bounds = array<i64: 304, 512>}, {pipeline_mode = #tpu.pipeline_mode<synchronous>, transform_indices = @transform_1, window_bounds = array<i64: 512, 384>}, {pipeline_mode = #tpu.pipeline_mode<synchronous>, transform_indices = @transform_2, window_bounds = array<i64: 1, 384>}, {pipeline_mode = #tpu.pipeline_mode<synchronous>, transform_indices = @transform_3, window_bounds = array<i64: 128, 128>}, {pipeline_mode = #tpu.pipeline_mode<synchronous>, transform_indices = @transform_4, window_bounds = array<i64: 1, 128>}, {pipeline_mode = #tpu.pipeline_mode<synchronous>, transform_indices = @transform_5, window_bounds = array<i64: 128, 256>}, {pipeline_mode = #tpu.pipeline_mode<synchronous>, transform_indices = @transform_6, window_bounds = array<i64: 1, 256>}, {pipeline_mode = #tpu.pipeline_mode<synchronous>, transform_indices = @transform_7, window_bounds = array<i64: 384, 128>}, {pipeline_mode = #tpu.pipeline_mode<synchronous>, transform_indices = @transform_8, window_bounds = array<i64: 1, 128>}, {pipeline_mode = #tpu.pipeline_mode<synchronous>, transform_indices = @transform_9, window_bounds = array<i64: 1, 128>}, {pipeline_mode = #tpu.pipeline_mode<synchronous>, transform_indices = @transform_10, window_bounds = array<i64: 1, 1>}, {transform_indices = @transform_11, window_bounds = array<i64: 304, 1>}, {transform_indices = @transform_12, window_bounds = array<i64: 304, 128>}, {transform_indices = @transform_13, window_bounds = array<i64: 304, 256>}]} {
    %c0 = arith.constant 0 : index
    %c0_0 = arith.constant 0 : index
    %0 = vector.load %arg1[%c0, %c0_0] : memref<304x512xbf16, #tpu.memory_space<vmem>>, vector<304x512xbf16>
    %c0_1 = arith.constant 0 : index
    %c0_2 = arith.constant 0 : index
    %1 = vector.load %arg2[%c0_1, %c0_2] : memref<512x384xbf16, #tpu.memory_space<vmem>>, vector<512x384xbf16>
    %cst = arith.constant dense<0.000000e+00> : vector<304x384xf32>
    %2 = tpu.matmul %0, %1, %cst {dimension_numbers = #tpu.dot_dimension_numbers<[1], [0], [0], [1], [0, 0, 1, 1], [], []>} : vector<304x512xbf16>, vector<512x384xbf16>, vector<304x384xf32> -> vector<304x384xf32>
    %c0_3 = arith.constant 0 : index
    %c0_4 = arith.constant 0 : index
    %3 = vector.load %arg3[%c0_3, %c0_4] : memref<1x384xf32, #tpu.memory_space<vmem>>, vector<1x384xf32>
    %4 = vector.broadcast %3 : vector<1x384xf32> to vector<304x384xf32>
    %5 = arith.addf %2, %4 : vector<304x384xf32>
    %cst_5 = arith.constant 0.000000e+00 : f32
    %6 = vector.broadcast %cst_5 : f32 to vector<304x384xf32>
    %7 = arith.maximumf %5, %6 : vector<304x384xf32>
    %8 = arith.truncf %7 : vector<304x384xf32> to vector<304x384xbf16>
    %9 = vector.extract_strided_slice %8 {offsets = [0, 0], sizes = [304, 128], strides = [1, 1]} : vector<304x384xbf16> to vector<304x128xbf16>
    %10 = vector.extract_strided_slice %8 {offsets = [0, 256], sizes = [304, 128], strides = [1, 1]} : vector<304x384xbf16> to vector<304x128xbf16>
    %c0_6 = arith.constant 0 : index
    %c0_7 = arith.constant 0 : index
    %11 = vector.load %arg4[%c0_6, %c0_7] : memref<128x128xbf16, #tpu.memory_space<vmem>>, vector<128x128xbf16>
    %cst_8 = arith.constant dense<0.000000e+00> : vector<304x128xf32>
    %12 = tpu.matmul %9, %11, %cst_8 {dimension_numbers = #tpu.dot_dimension_numbers<[1], [0], [0], [1], [0, 0, 1, 1], [], []>} : vector<304x128xbf16>, vector<128x128xbf16>, vector<304x128xf32> -> vector<304x128xf32>
    %c0_9 = arith.constant 0 : index
    %c0_10 = arith.constant 0 : index
    %13 = vector.load %arg5[%c0_9, %c0_10] : memref<1x128xf32, #tpu.memory_space<vmem>>, vector<1x128xf32>
    %14 = vector.broadcast %13 : vector<1x128xf32> to vector<304x128xf32>
    %15 = arith.addf %12, %14 : vector<304x128xf32>
    %16 = arith.truncf %15 : vector<304x128xf32> to vector<304x128xbf16>
    %c0_11 = arith.constant 0 : index
    %c0_12 = arith.constant 0 : index
    %17 = vector.load %arg13[%c0_11, %c0_12] : memref<304x128xbf16, #tpu.memory_space<vmem>>, vector<304x128xbf16>
    tpu.vector_store %arg13[%c0_11, %c0_12], %16 {strides = array<i32>} : memref<304x128xbf16, #tpu.memory_space<vmem>>, vector<304x128xbf16>,
    %c0_13 = arith.constant 0 : index
    %c0_14 = arith.constant 0 : index
    %18 = vector.load %arg6[%c0_13, %c0_14] : memref<128x256xbf16, #tpu.memory_space<vmem>>, vector<128x256xbf16>
    %cst_15 = arith.constant dense<0.000000e+00> : vector<304x256xf32>
    %19 = tpu.matmul %10, %18, %cst_15 {dimension_numbers = #tpu.dot_dimension_numbers<[1], [0], [0], [1], [0, 0, 1, 1], [], []>} : vector<304x128xbf16>, vector<128x256xbf16>, vector<304x256xf32> -> vector<304x256xf32>
    %c0_16 = arith.constant 0 : index
    %c0_17 = arith.constant 0 : index
    %20 = vector.load %arg7[%c0_16, %c0_17] : memref<1x256xf32, #tpu.memory_space<vmem>>, vector<1x256xf32>
    %21 = vector.broadcast %20 : vector<1x256xf32> to vector<304x256xf32>
    %22 = arith.addf %19, %21 : vector<304x256xf32>
    %23 = arith.truncf %22 : vector<304x256xf32> to vector<304x256xbf16>
    %c0_18 = arith.constant 0 : index
    %c0_19 = arith.constant 0 : index
    %24 = vector.load %arg14[%c0_18, %c0_19] : memref<304x256xbf16, #tpu.memory_space<vmem>>, vector<304x256xbf16>
    tpu.vector_store %arg14[%c0_18, %c0_19], %23 {strides = array<i32>} : memref<304x256xbf16, #tpu.memory_space<vmem>>, vector<304x256xbf16>,
    %c0_20 = arith.constant 0 : index
    %c0_21 = arith.constant 0 : index
    %25 = vector.load %arg8[%c0_20, %c0_21] : memref<384x128xbf16, #tpu.memory_space<vmem>>, vector<384x128xbf16>
    %cst_22 = arith.constant dense<0.000000e+00> : vector<304x128xf32>
    %26 = tpu.matmul %8, %25, %cst_22 {dimension_numbers = #tpu.dot_dimension_numbers<[1], [0], [0], [1], [0, 0, 1, 1], [], []>} : vector<304x384xbf16>, vector<384x128xbf16>, vector<304x128xf32> -> vector<304x128xf32>
    %c0_23 = arith.constant 0 : index
    %c0_24 = arith.constant 0 : index
    %27 = vector.load %arg9[%c0_23, %c0_24] : memref<1x128xf32, #tpu.memory_space<vmem>>, vector<1x128xf32>
    %28 = vector.broadcast %27 : vector<1x128xf32> to vector<304x128xf32>
    %29 = arith.addf %26, %28 : vector<304x128xf32>
    %cst_25 = arith.constant 0.000000e+00 : f32
    %30 = vector.broadcast %cst_25 : f32 to vector<304x128xf32>
    %31 = arith.maximumf %29, %30 : vector<304x128xf32>
    %c0_26 = arith.constant 0 : index
    %c0_27 = arith.constant 0 : index
    %32 = vector.load %arg10[%c0_26, %c0_27] : memref<1x128xf32, #tpu.memory_space<vmem>>, vector<1x128xf32>
    %33 = vector.broadcast %32 : vector<1x128xf32> to vector<304x128xf32>
    %34 = arith.mulf %31, %33 : vector<304x128xf32>
    %cst_28 = arith.constant dense<0.000000e+00> : vector<304xf32>
    %35 = vector.multi_reduction <add>, %34, %cst_28 [1] : vector<304x128xf32> to vector<304xf32>
    %36 = vector.shape_cast %35 : vector<304xf32> to vector<304x1xf32>
    %c0_29 = arith.constant 0 : index
    %c0_30 = arith.constant 0 : index
    %37 = vector.load %arg11[%c0_29, %c0_30] : memref<1x1xf32, #tpu.memory_space<vmem>>, vector<1x1xf32>
    %38 = vector.broadcast %37 : vector<1x1xf32> to vector<304x1xf32>
    %39 = arith.addf %36, %38 : vector<304x1xf32>
    %c0_31 = arith.constant 0 : index
    %c0_32 = arith.constant 0 : index
    %40 = vector.load %arg12[%c0_31, %c0_32] : memref<304x1xf32, #tpu.memory_space<vmem>>, vector<304x1xf32>
    tpu.vector_store %arg12[%c0_31, %c0_32], %39 {strides = array<i32>} : memref<304x1xf32, #tpu.memory_space<vmem>>, vector<304x1xf32>,
    return
  }
  func.func @transform_0(%arg0: i32) -> (i32, i32) {
    %c0_i32 = arith.constant 0 : i32
    %c0_i32_0 = arith.constant 0 : i32
    return %arg0, %c0_i32 : i32, i32
  }
  func.func @transform_1(%arg0: i32) -> (i32, i32) {
    %c0_i32 = arith.constant 0 : i32
    %c0_i32_0 = arith.constant 0 : i32
    %c0_i32_1 = arith.constant 0 : i32
    return %c0_i32, %c0_i32_0 : i32, i32
  }
  func.func @transform_2(%arg0: i32) -> (i32, i32) {
    %c0_i32 = arith.constant 0 : i32
    %c0_i32_0 = arith.constant 0 : i32
    %c0_i32_1 = arith.constant 0 : i32
    return %c0_i32, %c0_i32_0 : i32, i32
  }
  func.func @transform_3(%arg0: i32) -> (i32, i32) {
    %c0_i32 = arith.constant 0 : i32
    %c0_i32_0 = arith.constant 0 : i32
    %c0_i32_1 = arith.constant 0 : i32
    return %c0_i32, %c0_i32_0 : i32, i32
  }
  func.func @transform_4(%arg0: i32) -> (i32, i32) {
    %c0_i32 = arith.constant 0 : i32
    %c0_i32_0 = arith.constant 0 : i32
    %c0_i32_1 = arith.constant 0 : i32
    return %c0_i32, %c0_i32_0 : i32, i32
  }
  func.func @transform_5(%arg0: i32) -> (i32, i32) {
    %c0_i32 = arith.constant 0 : i32
    %c0_i32_0 = arith.constant 0 : i32
    %c0_i32_1 = arith.constant 0 : i32
    return %c0_i32, %c0_i32_0 : i32, i32
  }
  func.func @transform_6(%arg0: i32) -> (i32, i32) {
    %c0_i32 = arith.constant 0 : i32
    %c0_i32_0 = arith.constant 0 : i32
    %c0_i32_1 = arith.constant 0 : i32
    return %c0_i32, %c0_i32_0 : i32, i32
  }
  func.func @transform_7(%arg0: i32) -> (i32, i32) {
    %c0_i32 = arith.constant 0 : i32
    %c0_i32_0 = arith.constant 0 : i32
    %c0_i32_1 = arith.constant 0 : i32
    return %c0_i32, %c0_i32_0 : i32, i32
  }
  func.func @transform_8(%arg0: i32) -> (i32, i32) {
    %c0_i32 = arith.constant 0 : i32
    %c0_i32_0 = arith.constant 0 : i32
    %c0_i32_1 = arith.constant 0 : i32
    return %c0_i32, %c0_i32_0 : i32, i32
  }
  func.func @transform_9(%arg0: i32) -> (i32, i32) {
    %c0_i32 = arith.constant 0 : i32
    %c0_i32_0 = arith.constant 0 : i32
    %c0_i32_1 = arith.constant 0 : i32
    return %c0_i32, %c0_i32_0 : i32, i32
  }
  func.func @transform_10(%arg0: i32) -> (i32, i32) {
    %c0_i32 = arith.constant 0 : i32
    %c0_i32_0 = arith.constant 0 : i32
    %c0_i32_1 = arith.constant 0 : i32
    return %c0_i32, %c0_i32_0 : i32, i32
  }
  func.func @transform_11(%arg0: i32) -> (i32, i32) {
    %c0_i32 = arith.constant 0 : i32
    %c0_i32_0 = arith.constant 0 : i32
    return %arg0, %c0_i32 : i32, i32
  }
  func.func @transform_12(%arg0: i32) -> (i32, i32) {
    %c0_i32 = arith.constant 0 : i32
    %c0_i32_0 = arith.constant 0 : i32
    return %arg0, %c0_i32 : i32, i32
  }
  func.func @transform_13(%arg0: i32) -> (i32, i32) {
    %c0_i32 = arith.constant 0 : i32
    %c0_i32_0 = arith.constant 0 : i32
    return %arg0, %c0_i32 : i32, i32
  }
}

</mosaic_0001>

<llo_original>
// kernel: _lambda_.1
$region0: #{_lambda_.1}
  #allocation0 [shape = 'u32[]', space=smem, size = 0x4, offset = 0x4, fixed_abs, tag = 'smem constant byte address 0x4 - core index']
  #allocation1 [shape = 'u32[144,128]{1,0:T(1,128)}', space=vmem, size = 0x12000, scoped, tag = 'internal scratch']
  #allocation2 [shape = 'f32[1,1]{1,0:T(1,128)S(1)}', space=vmem, size = 0x200, scoped, tag = 'scoped memory for _lambda_.1']
  %s0 = inlined_call_operand.vmem [shape: bf16[304,512], index: 0, kind: input, shape index: {}]
  %s1 = inlined_call_operand.vmem [shape: bf16[512,384], index: 1, kind: input, shape index: {}]
  %s2 = inlined_call_operand.vmem [shape: f32[1,384], index: 2, kind: input, shape index: {}]
  %s3 = inlined_call_operand.vmem [shape: bf16[128,128], index: 3, kind: input, shape index: {}]
  %s4 = inlined_call_operand.vmem [shape: f32[1,128], index: 4, kind: input, shape index: {}]
  %s5 = inlined_call_operand.vmem [shape: bf16[128,256], index: 5, kind: input, shape index: {}]
  %s6 = inlined_call_operand.vmem [shape: f32[1,256], index: 6, kind: input, shape index: {}]
  %s7 = inlined_call_operand.vmem [shape: bf16[384,128], index: 7, kind: input, shape index: {}]
  %s8 = inlined_call_operand.vmem [shape: f32[1,128], index: 8, kind: input, shape index: {}]
  %s9 = inlined_call_operand.vmem [shape: f32[1,128], index: 9, kind: input, shape index: {}]
  %s10 = inlined_call_operand.<no memory space> [shape: f32[1,1], index: 10, kind: input, shape index: {}]
  %s11 = inlined_call_operand.vmem [shape: f32[304,1], index: 11, kind: output, shape index: {0}]
  %s12 = inlined_call_operand.vmem [shape: bf16[304,128], index: 12, kind: output, shape index: {1}]
  %s13 = inlined_call_operand.vmem [shape: bf16[304,256], index: 13, kind: output, shape index: {2}]
  %14 = xla_tuple %s11, %s12, %s13
  %s15 = sld [smem:[#allocation0]]
  $region70: #{_lambda_.1} parent=0
    _
  %s17 = ssub.s32 1, %s15
  %s18 = scalar_select 0, %s17, %s15
  %v19 = vstv %s10
  %20 = vst [vmem:[#allocation2] sm:$0x1] %v19
  // Predicated region
  $region2: #{_lambda_.1} parent=0 // pred_check
    _
  $region3: #{_lambda_.1} parent=0 // pred_check_branch
    %22 = sbr.rel (0) target = $region5
  $region4: #{_lambda_.1} parent=0 // pred_region
    _
  $region5: #{_lambda_.1} parent=0 // pred_fallthru
    _
  // Predicated region
  $region6: #{_lambda_.1} parent=0 // pred_check
    _
  $region7: #{_lambda_.1} parent=0 // pred_check_branch
    %24 = sbr.rel (0) target = $region9
  $region8: #{_lambda_.1} parent=0 // pred_region
    _
  $region9: #{_lambda_.1} parent=0 // pred_fallthru
    _
  // Predicated region
  $region10: #{_lambda_.1} parent=0 // pred_check
    _
  $region11: #{_lambda_.1} parent=0 // pred_check_branch
    %26 = sbr.rel (0) target = $region13
  $region12: #{_lambda_.1} parent=0 // pred_region
    _
  $region13: #{_lambda_.1} parent=0 // pred_fallthru
    _
  // Predicated region
  $region14: #{_lambda_.1} parent=0 // pred_check
    _
  $region15: #{_lambda_.1} parent=0 // pred_check_branch
    %28 = sbr.rel (0) target = $region17
  $region16: #{_lambda_.1} parent=0 // pred_region
    _
  $region17: #{_lambda_.1} parent=0 // pred_fallthru
    _
  // Predicated region
  $region18: #{_lambda_.1} parent=0 // pred_check
    _
  $region19: #{_lambda_.1} parent=0 // pred_check_branch
    %30 = sbr.rel (0) target = $region21
  $region20: #{_lambda_.1} parent=0 // pred_region
    _
  $region21: #{_lambda_.1} parent=0 // pred_fallthru
    _
  // Predicated region
  $region22: #{_lambda_.1} parent=0 // pred_check
    _
  $region23: #{_lambda_.1} parent=0 // pred_check_branch
    %32 = sbr.rel (0) target = $region25
  $region24: #{_lambda_.1} parent=0 // pred_region
    _
  $region25: #{_lambda_.1} parent=0 // pred_fallthru
    _
  // Predicated region
  $region26: #{_lambda_.1} parent=0 // pred_check
    _
  $region27: #{_lambda_.1} parent=0 // pred_check_branch
    %34 = sbr.rel (0) target = $region29
  $region28: #{_lambda_.1} parent=0 // pred_region
    _
  $region29: #{_lambda_.1} parent=0 // pred_fallthru
    _
  // Predicated region
  $region30: #{_lambda_.1} parent=0 // pred_check
    _
  $region31: #{_lambda_.1} parent=0 // pred_check_branch
    %36 = sbr.rel (0) target = $region33
  $region32: #{_lambda_.1} parent=0 // pred_region
    _
  $region33: #{_lambda_.1} parent=0 // pred_fallthru
    _
  // Predicated region
  $region34: #{_lambda_.1} parent=0 // pred_check
    _
  $region35: #{_lambda_.1} parent=0 // pred_check_branch
    %38 = sbr.rel (0) target = $region37
  $region36: #{_lambda_.1} parent=0 // pred_region
    _
  $region37: #{_lambda_.1} parent=0 // pred_fallthru
    _
  // Predicated region
  $region38: #{_lambda_.1} parent=0 // pred_check
    _
  $region39: #{_lambda_.1} parent=0 // pred_check_branch
    %40 = sbr.rel (0) target = $region41
  $region40: #{_lambda_.1} parent=0 // pred_region
    _
  $region41: #{_lambda_.1} parent=0 // pred_fallthru
    _
  // Predicated region
  $region42: #{_lambda_.1} parent=0 // pred_check
    _
  $region43: #{_lambda_.1} parent=0 // pred_check_branch
    %42 = sbr.rel (0) target = $region45
  $region44: #{_lambda_.1} parent=0 // pred_region
    _
  $region45: #{_lambda_.1} parent=0 // pred_fallthru
    _
  %v44 = vld [vmem:[%s0] sm:$0xff]
  %v45 = vld [vmem:[%s0 + $0x8] sm:$0xff]
  %v46 = vld [vmem:[%s0 + $0x10] sm:$0xff]
  %v47 = vld [vmem:[%s0 + $0x18] sm:$0xff]
  %v48 = vld [vmem:[%s0 + $0x20] sm:$0xff]
  %v49 = vld [vmem:[%s0 + $0x28] sm:$0xff]
  %v50 = vld [vmem:[%s0 + $0x30] sm:$0xff]
  %v51 = vld [vmem:[%s0 + $0x38] sm:$0xff]
  %v52 = vld [vmem:[%s0 + $0x40] sm:$0xff]
  %v53 = vld [vmem:[%s0 + $0x48] sm:$0xff]
  %v54 = vld [vmem:[%s0 + $0x50] sm:$0xff]
  %v55 = vld [vmem:[%s0 + $0x58] sm:$0xff]
  %v56 = vld [vmem:[%s0 + $0x60] sm:$0xff]
  %v57 = vld [vmem:[%s0 + $0x68] sm:$0xff]
  %v58 = vld [vmem:[%s0 + $0x70] sm:$0xff]
  %v59 = vld [vmem:[%s0 + $0x78] sm:$0xff]
  %v60 = vld [vmem:[%s0 + $0x80] sm:$0xff]
  %v61 = vld [vmem:[%s0 + $0x88] sm:$0xff]
  %v62 = vld [vmem:[%s0 + $0x90] sm:$0xff]
  %v63 = vld [vmem:[%s0 + $0x98] sm:$0xff]
  %v64 = vld [vmem:[%s0 + $0xa0] sm:$0xff]
  %v65 = vld [vmem:[%s0 + $0xa8] sm:$0xff]
  %v66 = vld [vmem:[%s0 + $0xb0] sm:$0xff]
  %v67 = vld [vmem:[%s0 + $0xb8] sm:$0xff]
  %v68 = vld [vmem:[%s0 + $0xc0] sm:$0xff]
  %v69 = vld [vmem:[%s0 + $0xc8] sm:$0xff]
  %v70 = vld [vmem:[%s0 + $0xd0] sm:$0xff]
  %v71 = vld [vmem:[%s0 + $0xd8] sm:$0xff]
  %v72 = vld [vmem:[%s0 + $0xe0] sm:$0xff]
  %v73 = vld [vmem:[%s0 + $0xe8] sm:$0xff]
  %v74 = vld [vmem:[%s0 + $0xf0] sm:$0xff]
  %v75 = vld [vmem:[%s0 + $0xf8] sm:$0xff]
  %v76 = vld [vmem:[%s0 + $0x100] sm:$0xff]
  %v77 = vld [vmem:[%s0 + $0x108] sm:$0xff]
  %v78 = vld [vmem:[%s0 + $0x110] sm:$0xff]
  %v79 = vld [vmem:[%s0 + $0x118] sm:$0xff]
  %v80 = vld [vmem:[%s0 + $0x120] sm:$0xff]
  %v81 = vld [vmem:[%s0 + $0x128] sm:$0xff]
  %v82 = vld [vmem:[%s0 + $0x130] sm:$0xff]
  %v83 = vld [vmem:[%s0 + $0x138] sm:$0xff]
  %v84 = vld [vmem:[%s0 + $0x140] sm:$0xff]
  %v85 = vld [vmem:[%s0 + $0x148] sm:$0xff]
  %v86 = vld [vmem:[%s0 + $0x150] sm:$0xff]
  %v87 = vld [vmem:[%s0 + $0x158] sm:$0xff]
  %v88 = vld [vmem:[%s0 + $0x160] sm:$0xff]
  %v89 = vld [vmem:[%s0 + $0x168] sm:$0xff]
  %v90 = vld [vmem:[%s0 + $0x170] sm:$0xff]
  %v91 = vld [vmem:[%s0 + $0x178] sm:$0xff]
  %v92 = vld [vmem:[%s0 + $0x180] sm:$0xff]
  %v93 = vld [vmem:[%s0 + $0x188] sm:$0xff]
  %v94 = vld [vmem:[%s0 + $0x190] sm:$0xff]
  %v95 = vld [vmem:[%s0 + $0x198] sm:$0xff]
  %v96 = vld [vmem:[%s0 + $0x1a0] sm:$0xff]
  %v97 = vld [vmem:[%s0 + $0x1a8] sm:$0xff]
  %v98 = vld [vmem:[%s0 + $0x1b0] sm:$0xff]
  %v99 = vld [vmem:[%s0 + $0x1b8] sm:$0xff]
  %v100 = vld [vmem:[%s0 + $0x1c0] sm:$0xff]
  %v101 = vld [vmem:[%s0 + $0x1c8] sm:$0xff]
  %v102 = vld [vmem:[%s0 + $0x1d0] sm:$0xff]
  %v103 = vld [vmem:[%s0 + $0x1d8] sm:$0xff]
  %v104 = vld [vmem:[%s0 + $0x1e0] sm:$0xff]
  %v105 = vld [vmem:[%s0 + $0x1e8] sm:$0xff]
  %v106 = vld [vmem:[%s0 + $0x1f0] sm:$0xff]
  %v107 = vld [vmem:[%s0 + $0x1f8] sm:$0xff]
  %v108 = vld [vmem:[%s0 + $0x200] sm:$0xff]
  %v109 = vld [vmem:[%s0 + $0x208] sm:$0xff]
  %v110 = vld [vmem:[%s0 + $0x210] sm:$0xff]
  %v111 = vld [vmem:[%s0 + $0x218] sm:$0xff]
  %v112 = vld [vmem:[%s0 + $0x220] sm:$0xff]
  %v113 = vld [vmem:[%s0 + $0x228] sm:$0xff]
  %v114 = vld [vmem:[%s0 + $0x230] sm:$0xff]
  %v115 = vld [vmem:[%s0 + $0x238] sm:$0xff]
  %v116 = vld [vmem:[%s0 + $0x240] sm:$0xff]
  %v117 = vld [vmem:[%s0 + $0x248] sm:$0xff]
  %v118 = vld [vmem:[%s0 + $0x250] sm:$0xff]
  %v119 = vld [vmem:[%s0 + $0x258] sm:$0xff]
  %v120 = vld [vmem:[%s1] sm:$0xff]
  %v121 = vld [vmem:[%s1 + $0x8] sm:$0xf]
  %v122 = vld [vmem:[%s1 + $0xc] sm:$0xff]
  %v123 = vld [vmem:[%s1 + $0x14] sm:$0xf]
  %v124 = vld [vmem:[%s1 + $0x18] sm:$0xff]
  %v125 = vld [vmem:[%s1 + $0x20] sm:$0xf]
  %v126 = vld [vmem:[%s1 + $0x24] sm:$0xff]
  %v127 = vld [vmem:[%s1 + $0x2c] sm:$0xf]
  %v128 = vld [vmem:[%s1 + $0x30] sm:$0xff]
  %v129 = vld [vmem:[%s1 + $0x38] sm:$0xf]
  %v130 = vld [vmem:[%s1 + $0x3c] sm:$0xff]
  %v131 = vld [vmem:[%s1 + $0x44] sm:$0xf]
  %v132 = vld [vmem:[%s1 + $0x48] sm:$0xff]
  %v133 = vld [vmem:[%s1 + $0x50] sm:$0xf]
  %v134 = vld [vmem:[%s1 + $0x54] sm:$0xff]
  %v135 = vld [vmem:[%s1 + $0x5c] sm:$0xf]
  %v136 = vld [vmem:[%s1 + $0x60] sm:$0xff]
  %v137 = vld [vmem:[%s1 + $0x68] sm:$0xf]
  %v138 = vld [vmem:[%s1 + $0x6c] sm:$0xff]
  %v139 = vld [vmem:[%s1 + $0x74] sm:$0xf]
  %v140 = vld [vmem:[%s1 + $0x78] sm:$0xff]
  %v141 = vld [vmem:[%s1 + $0x80] sm:$0xf]
  %v142 = vld [vmem:[%s1 + $0x84] sm:$0xff]
  %v143 = vld [vmem:[%s1 + $0x8c] sm:$0xf]
  %v144 = vld [vmem:[%s1 + $0x90] sm:$0xff]
  %v145 = vld [vmem:[%s1 + $0x98] sm:$0xf]
  %v146 = vld [vmem:[%s1 + $0x9c] sm:$0xff]
  %v147 = vld [vmem:[%s1 + $0xa4] sm:$0xf]
  %v148 = vld [vmem:[%s1 + $0xa8] sm:$0xff]
  %v149 = vld [vmem:[%s1 + $0xb0] sm:$0xf]
  %v150 = vld [vmem:[%s1 + $0xb4] sm:$0xff]
  %v151 = vld [vmem:[%s1 + $0xbc] sm:$0xf]
  %v152 = vld [vmem:[%s1 + $0xc0] sm:$0xff]
  %v153 = vld [vmem:[%s1 + $0xc8] sm:$0xf]
  %v154 = vld [vmem:[%s1 + $0xcc] sm:$0xff]
  %v155 = vld [vmem:[%s1 + $0xd4] sm:$0xf]
  %v156 = vld [vmem:[%s1 + $0xd8] sm:$0xff]
  %v157 = vld [vmem:[%s1 + $0xe0] sm:$0xf]
  %v158 = vld [vmem:[%s1 + $0xe4] sm:$0xff]
  %v159 = vld [vmem:[%s1 + $0xec] sm:$0xf]
  %v160 = vld [vmem:[%s1 + $0xf0] sm:$0xff]
  %v161 = vld [vmem:[%s1 + $0xf8] sm:$0xf]
  %v162 = vld [vmem:[%s1 + $0xfc] sm:$0xff]
  %v163 = vld [vmem:[%s1 + $0x104] sm:$0xf]
  %v164 = vld [vmem:[%s1 + $0x108] sm:$0xff]
  %v165 = vld [vmem:[%s1 + $0x110] sm:$0xf]
  %v166 = vld [vmem:[%s1 + $0x114] sm:$0xff]
  %v167 = vld [vmem:[%s1 + $0x11c] sm:$0xf]
  %v168 = vld [vmem:[%s1 + $0x120] sm:$0xff]
  %v169 = vld [vmem:[%s1 + $0x128] sm:$0xf]
  %v170 = vld [vmem:[%s1 + $0x12c] sm:$0xff]
  %v171 = vld [vmem:[%s1 + $0x134] sm:$0xf]
  %v172 = vld [vmem:[%s1 + $0x138] sm:$0xff]
  %v173 = vld [vmem:[%s1 + $0x140] sm:$0xf]
  %v174 = vld [vmem:[%s1 + $0x144] sm:$0xff]
  %v175 = vld [vmem:[%s1 + $0x14c] sm:$0xf]
  %v176 = vld [vmem:[%s1 + $0x150] sm:$0xff]
  %v177 = vld [vmem:[%s1 + $0x158] sm:$0xf]
  %v178 = vld [vmem:[%s1 + $0x15c] sm:$0xff]
  %v179 = vld [vmem:[%s1 + $0x164] sm:$0xf]
  %v180 = vld [vmem:[%s1 + $0x168] sm:$0xff]
  %v181 = vld [vmem:[%s1 + $0x170] sm:$0xf]
  %v182 = vld [vmem:[%s1 + $0x174] sm:$0xff]
  %v183 = vld [vmem:[%s1 + $0x17c] sm:$0xf]
  %v184 = vld [vmem:[%s1 + $0x180] sm:$0xff]
  %v185 = vld [vmem:[%s1 + $0x188] sm:$0xf]
  %v186 = vld [vmem:[%s1 + $0x18c] sm:$0xff]
  %v187 = vld [vmem:[%s1 + $0x194] sm:$0xf]
  %v188 = vld [vmem:[%s1 + $0x198] sm:$0xff]
  %v189 = vld [vmem:[%s1 + $0x1a0] sm:$0xf]
  %v190 = vld [vmem:[%s1 + $0x1a4] sm:$0xff]
  %v191 = vld [vmem:[%s1 + $0x1ac] sm:$0xf]
  %v192 = vld [vmem:[%s1 + $0x1b0] sm:$0xff]
  %v193 = vld [vmem:[%s1 + $0x1b8] sm:$0xf]
  %v194 = vld [vmem:[%s1 + $0x1bc] sm:$0xff]
  %v195 = vld [vmem:[%s1 + $0x1c4] sm:$0xf]
  %v196 = vld [vmem:[%s1 + $0x1c8] sm:$0xff]
  %v197 = vld [vmem:[%s1 + $0x1d0] sm:$0xf]
  %v198 = vld [vmem:[%s1 + $0x1d4] sm:$0xff]
  %v199 = vld [vmem:[%s1 + $0x1dc] sm:$0xf]
  %v200 = vld [vmem:[%s1 + $0x1e0] sm:$0xff]
  %v201 = vld [vmem:[%s1 + $0x1e8] sm:$0xf]
  %v202 = vld [vmem:[%s1 + $0x1ec] sm:$0xff]
  %v203 = vld [vmem:[%s1 + $0x1f4] sm:$0xf]
  %v204 = vld [vmem:[%s1 + $0x1f8] sm:$0xff]
  %v205 = vld [vmem:[%s1 + $0x200] sm:$0xf]
  %v206 = vld [vmem:[%s1 + $0x204] sm:$0xff]
  %v207 = vld [vmem:[%s1 + $0x20c] sm:$0xf]
  %v208 = vld [vmem:[%s1 + $0x210] sm:$0xff]
  %v209 = vld [vmem:[%s1 + $0x218] sm:$0xf]
  %v210 = vld [vmem:[%s1 + $0x21c] sm:$0xff]
  %v211 = vld [vmem:[%s1 + $0x224] sm:$0xf]
  %v212 = vld [vmem:[%s1 + $0x228] sm:$0xff]
  %v213 = vld [vmem:[%s1 + $0x230] sm:$0xf]
  %v214 = vld [vmem:[%s1 + $0x234] sm:$0xff]
  %v215 = vld [vmem:[%s1 + $0x23c] sm:$0xf]
  %v216 = vld [vmem:[%s1 + $0x240] sm:$0xff]
  %v217 = vld [vmem:[%s1 + $0x248] sm:$0xf]
  %v218 = vld [vmem:[%s1 + $0x24c] sm:$0xff]
  %v219 = vld [vmem:[%s1 + $0x254] sm:$0xf]
  %v220 = vld [vmem:[%s1 + $0x258] sm:$0xff]
  %v221 = vld [vmem:[%s1 + $0x260] sm:$0xf]
  %v222 = vld [vmem:[%s1 + $0x264] sm:$0xff]
  %v223 = vld [vmem:[%s1 + $0x26c] sm:$0xf]
  %v224 = vld [vmem:[%s1 + $0x270] sm:$0xff]
  %v225 = vld [vmem:[%s1 + $0x278] sm:$0xf]
  %v226 = vld [vmem:[%s1 + $0x27c] sm:$0xff]
  %v227 = vld [vmem:[%s1 + $0x284] sm:$0xf]
  %v228 = vld [vmem:[%s1 + $0x288] sm:$0xff]
  %v229 = vld [vmem:[%s1 + $0x290] sm:$0xf]
  %v230 = vld [vmem:[%s1 + $0x294] sm:$0xff]
  %v231 = vld [vmem:[%s1 + $0x29c] sm:$0xf]
  %v232 = vld [vmem:[%s1 + $0x2a0] sm:$0xff]
  %v233 = vld [vmem:[%s1 + $0x2a8] sm:$0xf]
  %v234 = vld [vmem:[%s1 + $0x2ac] sm:$0xff]
  %v235 = vld [vmem:[%s1 + $0x2b4] sm:$0xf]
  %v236 = vld [vmem:[%s1 + $0x2b8] sm:$0xff]
  %v237 = vld [vmem:[%s1 + $0x2c0] sm:$0xf]
  %v238 = vld [vmem:[%s1 + $0x2c4] sm:$0xff]
  %v239 = vld [vmem:[%s1 + $0x2cc] sm:$0xf]
  %v240 = vld [vmem:[%s1 + $0x2d0] sm:$0xff]
  %v241 = vld [vmem:[%s1 + $0x2d8] sm:$0xf]
  %v242 = vld [vmem:[%s1 + $0x2dc] sm:$0xff]
  %v243 = vld [vmem:[%s1 + $0x2e4] sm:$0xf]
  %v244 = vld [vmem:[%s1 + $0x2e8] sm:$0xff]
  %v245 = vld [vmem:[%s1 + $0x2f0] sm:$0xf]
  %v246 = vld [vmem:[%s1 + $0x2f4] sm:$0xff]
  %v247 = vld [vmem:[%s1 + $0x2fc] sm:$0xf]
  %v248 = vld [vmem:[%s2] sm:$0x7]
  %v250 = vlaneseq
  %v251 = vshrl.u32 %v250, 7
  %v252 = vsub.s32 0, %v251
  %v253 = vrot.slane %v248, %v252
  %v254 = vlaneseq
  %v255 = vshrl.u32 %v254, 7
  %v256 = vsub.s32 1, %v255
  %v257 = vrot.slane %v248, %v256
  %v258 = vlaneseq
  %v259 = vshrl.u32 %v258, 7
  %v260 = vsub.s32 2, %v259
  %v261 = vrot.slane %v248, %v260
  %v341 = vunpack.c.l.b16 %v44
  %v342 = vunpack.c.h.b16 %v44
  %v343 = vunpack.c.l.b16 %v45
  %v344 = vunpack.c.h.b16 %v45
  %v345 = vunpack.c.l.b16 %v46
  %v346 = vunpack.c.h.b16 %v46
  %v347 = vunpack.c.l.b16 %v47
  %v348 = vunpack.c.h.b16 %v47
  %v349 = vunpack.c.l.b16 %v48
  %v350 = vunpack.c.h.b16 %v48
  %v351 = vunpack.c.l.b16 %v49
  %v352 = vunpack.c.h.b16 %v49
  %v353 = vunpack.c.l.b16 %v50
  %v354 = vunpack.c.h.b16 %v50
  %v355 = vunpack.c.l.b16 %v51
  %v356 = vunpack.c.h.b16 %v51
  %v357 = vunpack.c.l.b16 %v52
  %v358 = vunpack.c.h.b16 %v52
  %v359 = vunpack.c.l.b16 %v53
  %v360 = vunpack.c.h.b16 %v53
  %v361 = vunpack.c.l.b16 %v54
  %v362 = vunpack.c.h.b16 %v54
  %v363 = vunpack.c.l.b16 %v55
  %v364 = vunpack.c.h.b16 %v55
  %v365 = vunpack.c.l.b16 %v56
  %v366 = vunpack.c.h.b16 %v56
  %v367 = vunpack.c.l.b16 %v57
  %v368 = vunpack.c.h.b16 %v57
  %v369 = vunpack.c.l.b16 %v58
  %v370 = vunpack.c.h.b16 %v58
  %v371 = vunpack.c.l.b16 %v59
  %v372 = vunpack.c.h.b16 %v59
  %v373 = vunpack.c.l.b16 %v60
  %v374 = vunpack.c.h.b16 %v60
  %v375 = vunpack.c.l.b16 %v61
  %v376 = vunpack.c.h.b16 %v61
  %v377 = vunpack.c.l.b16 %v62
  %v378 = vunpack.c.h.b16 %v62
  %v379 = vunpack.c.l.b16 %v63
  %v380 = vunpack.c.h.b16 %v63
  %v381 = vunpack.c.l.b16 %v64
  %v382 = vunpack.c.h.b16 %v64
  %v383 = vunpack.c.l.b16 %v65
  %v384 = vunpack.c.h.b16 %v65
  %v385 = vunpack.c.l.b16 %v66
  %v386 = vunpack.c.h.b16 %v66
  %v387 = vunpack.c.l.b16 %v67
  %v388 = vunpack.c.h.b16 %v67
  %v389 = vunpack.c.l.b16 %v68
  %v390 = vunpack.c.h.b16 %v68
  %v391 = vunpack.c.l.b16 %v69
  %v392 = vunpack.c.h.b16 %v69
  %v393 = vunpack.c.l.b16 %v70
  %v394 = vunpack.c.h.b16 %v70
  %v395 = vunpack.c.l.b16 %v71
  %v396 = vunpack.c.h.b16 %v71
  %v397 = vunpack.c.l.b16 %v72
  %v398 = vunpack.c.h.b16 %v72
  %v399 = vunpack.c.l.b16 %v73
  %v400 = vunpack.c.h.b16 %v73
  %v401 = vunpack.c.l.b16 %v74
  %v402 = vunpack.c.h.b16 %v74
  %v403 = vunpack.c.l.b16 %v75
  %v404 = vunpack.c.h.b16 %v75
  %v405 = vunpack.c.l.b16 %v76
  %v406 = vunpack.c.h.b16 %v76
  %v407 = vunpack.c.l.b16 %v77
  %v408 = vunpack.c.h.b16 %v77
  %v409 = vunpack.c.l.b16 %v78
  %v410 = vunpack.c.h.b16 %v78
  %v411 = vunpack.c.l.b16 %v79
  %v412 = vunpack.c.h.b16 %v79
  %v413 = vunpack.c.l.b16 %v80
  %v414 = vunpack.c.h.b16 %v80
  %v415 = vunpack.c.l.b16 %v81
  %v416 = vunpack.c.h.b16 %v81
  %v417 = vunpack.c.l.b16 %v82
  %v418 = vunpack.c.h.b16 %v82
  %v419 = vunpack.c.l.b16 %v83
  %v420 = vunpack.c.h.b16 %v83
  %v421 = vunpack.c.l.b16 %v84
  %v422 = vunpack.c.h.b16 %v84
  %v423 = vunpack.c.l.b16 %v85
  %v424 = vunpack.c.h.b16 %v85
  %v425 = vunpack.c.l.b16 %v86
  %v426 = vunpack.c.h.b16 %v86
  %v427 = vunpack.c.l.b16 %v87
  %v428 = vunpack.c.h.b16 %v87
  %v429 = vunpack.c.l.b16 %v88
  %v430 = vunpack.c.h.b16 %v88
  %v431 = vunpack.c.l.b16 %v89
  %v432 = vunpack.c.h.b16 %v89
  %v433 = vunpack.c.l.b16 %v90
  %v434 = vunpack.c.h.b16 %v90
  %v435 = vunpack.c.l.b16 %v91
  %v436 = vunpack.c.h.b16 %v91
  %v437 = vunpack.c.l.b16 %v92
  %v438 = vunpack.c.h.b16 %v92
  %v439 = vunpack.c.l.b16 %v93
  %v440 = vunpack.c.h.b16 %v93
  %v441 = vunpack.c.l.b16 %v94
  %v442 = vunpack.c.h.b16 %v94
  %v443 = vunpack.c.l.b16 %v95
  %v444 = vunpack.c.h.b16 %v95
  %v445 = vunpack.c.l.b16 %v96
  %v446 = vunpack.c.h.b16 %v96
  %v447 = vunpack.c.l.b16 %v97
  %v448 = vunpack.c.h.b16 %v97
  %v449 = vunpack.c.l.b16 %v98
  %v450 = vunpack.c.h.b16 %v98
  %v451 = vunpack.c.l.b16 %v99
  %v452 = vunpack.c.h.b16 %v99
  %v453 = vunpack.c.l.b16 %v100
  %v454 = vunpack.c.h.b16 %v100
  %v455 = vunpack.c.l.b16 %v101
  %v456 = vunpack.c.h.b16 %v101
  %v457 = vunpack.c.l.b16 %v102
  %v458 = vunpack.c.h.b16 %v102
  %v459 = vunpack.c.l.b16 %v103
  %v460 = vunpack.c.h.b16 %v103
  %v461 = vunpack.c.l.b16 %v104
  %v462 = vunpack.c.h.b16 %v104
  %v463 = vunpack.c.l.b16 %v105
  %v464 = vunpack.c.h.b16 %v105
  %v465 = vunpack.c.l.b16 %v106
  %v466 = vunpack.c.h.b16 %v106
  %v467 = vunpack.c.l.b16 %v107
  %v468 = vunpack.c.h.b16 %v107
  %v469 = vunpack.c.l.b16 %v108
  %v470 = vunpack.c.h.b16 %v108
  %v471 = vunpack.c.l.b16 %v109
  %v472 = vunpack.c.h.b16 %v109
  %v473 = vunpack.c.l.b16 %v110
  %v474 = vunpack.c.h.b16 %v110
  %v475 = vunpack.c.l.b16 %v111
  %v476 = vunpack.c.h.b16 %v111
  %v477 = vunpack.c.l.b16 %v112
  %v478 = vunpack.c.h.b16 %v112
  %v479 = vunpack.c.l.b16 %v113
  %v480 = vunpack.c.h.b16 %v113
  %v481 = vunpack.c.l.b16 %v114
  %v482 = vunpack.c.h.b16 %v114
  %v483 = vunpack.c.l.b16 %v115
  %v484 = vunpack.c.h.b16 %v115
  %v485 = vunpack.c.l.b16 %v116
  %v486 = vunpack.c.h.b16 %v116
  %v487 = vunpack.c.l.b16 %v117
  %v488 = vunpack.c.h.b16 %v117
  %v489 = vunpack.c.l.b16 %v118
  %v490 = vunpack.c.h.b16 %v118
  %v491 = vunpack.c.l.b16 %v119
  %v492 = vunpack.c.h.b16 %v119
  %v493 = vpack.c.b16 %v345, %v341
  %v494 = vpack.c.b16 %v346, %v342
  %v495 = vpack.c.b16 %v347, %v343
  %v496 = vpack.c.b16 %v348, %v344
  %v497 = vpack.c.b16 %v353, %v349
  %v498 = vpack.c.b16 %v354, %v350
  %v499 = vpack.c.b16 %v355, %v351
  %v500 = vpack.c.b16 %v356, %v352
  %v501 = vpack.c.b16 %v361, %v357
  %v502 = vpack.c.b16 %v362, %v358
  %v503 = vpack.c.b16 %v363, %v359
  %v504 = vpack.c.b16 %v364, %v360
  %v505 = vpack.c.b16 %v369, %v365
  %v506 = vpack.c.b16 %v370, %v366
  %v507 = vpack.c.b16 %v371, %v367
  %v508 = vpack.c.b16 %v372, %v368
  %v509 = vpack.c.b16 %v377, %v373
  %v510 = vpack.c.b16 %v378, %v374
  %v511 = vpack.c.b16 %v379, %v375
  %v512 = vpack.c.b16 %v380, %v376
  %v513 = vpack.c.b16 %v385, %v381
  %v514 = vpack.c.b16 %v386, %v382
  %v515 = vpack.c.b16 %v387, %v383
  %v516 = vpack.c.b16 %v388, %v384
  %v517 = vpack.c.b16 %v393, %v389
  %v518 = vpack.c.b16 %v394, %v390
  %v519 = vpack.c.b16 %v395, %v391
  %v520 = vpack.c.b16 %v396, %v392
  %v521 = vpack.c.b16 %v401, %v397
  %v522 = vpack.c.b16 %v402, %v398
  %v523 = vpack.c.b16 %v403, %v399
  %v524 = vpack.c.b16 %v404, %v400
  %v525 = vpack.c.b16 %v409, %v405
  %v526 = vpack.c.b16 %v410, %v406
  %v527 = vpack.c.b16 %v411, %v407
  %v528 = vpack.c.b16 %v412, %v408
  %v529 = vpack.c.b16 %v417, %v413
  %v530 = vpack.c.b16 %v418, %v414
  %v531 = vpack.c.b16 %v419, %v415
  %v532 = vpack.c.b16 %v420, %v416
  %v533 = vpack.c.b16 %v425, %v421
  %v534 = vpack.c.b16 %v426, %v422
  %v535 = vpack.c.b16 %v427, %v423
  %v536 = vpack.c.b16 %v428, %v424
  %v537 = vpack.c.b16 %v433, %v429
  %v538 = vpack.c.b16 %v434, %v430
  %v539 = vpack.c.b16 %v435, %v431
  %v540 = vpack.c.b16 %v436, %v432
  %v541 = vpack.c.b16 %v441, %v437
  %v542 = vpack.c.b16 %v442, %v438
  %v543 = vpack.c.b16 %v443, %v439
  %v544 = vpack.c.b16 %v444, %v440
  %v545 = vpack.c.b16 %v449, %v445
  %v546 = vpack.c.b16 %v450, %v446
  %v547 = vpack.c.b16 %v451, %v447
  %v548 = vpack.c.b16 %v452, %v448
  %v549 = vpack.c.b16 %v457, %v453
  %v550 = vpack.c.b16 %v458, %v454
  %v551 = vpack.c.b16 %v459, %v455
  %v552 = vpack.c.b16 %v460, %v456
  %v553 = vpack.c.b16 %v465, %v461
  %v554 = vpack.c.b16 %v466, %v462
  %v555 = vpack.c.b16 %v467, %v463
  %v556 = vpack.c.b16 %v468, %v464
  %v557 = vpack.c.b16 %v473, %v469
  %v558 = vpack.c.b16 %v474, %v470
  %v559 = vpack.c.b16 %v475, %v471
  %v560 = vpack.c.b16 %v476, %v472
  %v561 = vpack.c.b16 %v481, %v477
  %v562 = vpack.c.b16 %v482, %v478
  %v563 = vpack.c.b16 %v483, %v479
  %v564 = vpack.c.b16 %v484, %v480
  %v565 = vpack.c.b16 %v489, %v485
  %v566 = vpack.c.b16 %v490, %v486
  %v567 = vpack.c.b16 %v491, %v487
  %v568 = vpack.c.b16 %v492, %v488
  %v773 = vunpack.c.l.b16 %v120
  %v774 = vunpack.c.h.b16 %v120
  %v775 = vunpack.c.l.b16 %v121
  %v776 = vunpack.c.l.b16 %v122
  %v777 = vunpack.c.h.b16 %v122
  %v778 = vunpack.c.l.b16 %v123
  %v779 = vunpack.c.l.b16 %v124
  %v780 = vunpack.c.h.b16 %v124
  %v781 = vunpack.c.l.b16 %v125
  %v782 = vunpack.c.l.b16 %v126
  %v783 = vunpack.c.h.b16 %v126
  %v784 = vunpack.c.l.b16 %v127
  %v785 = vunpack.c.l.b16 %v128
  %v786 = vunpack.c.h.b16 %v128
  %v787 = vunpack.c.l.b16 %v129
  %v788 = vunpack.c.l.b16 %v130
  %v789 = vunpack.c.h.b16 %v130
  %v790 = vunpack.c.l.b16 %v131
  %v791 = vunpack.c.l.b16 %v132
  %v792 = vunpack.c.h.b16 %v132
  %v793 = vunpack.c.l.b16 %v133
  %v794 = vunpack.c.l.b16 %v134
  %v795 = vunpack.c.h.b16 %v134
  %v796 = vunpack.c.l.b16 %v135
  %v797 = vunpack.c.l.b16 %v136
  %v798 = vunpack.c.h.b16 %v136
  %v799 = vunpack.c.l.b16 %v137
  %v800 = vunpack.c.l.b16 %v138
  %v801 = vunpack.c.h.b16 %v138
  %v802 = vunpack.c.l.b16 %v139
  %v803 = vunpack.c.l.b16 %v140
  %v804 = vunpack.c.h.b16 %v140
  %v805 = vunpack.c.l.b16 %v141
  %v806 = vunpack.c.l.b16 %v142
  %v807 = vunpack.c.h.b16 %v142
  %v808 = vunpack.c.l.b16 %v143
  %v809 = vunpack.c.l.b16 %v144
  %v810 = vunpack.c.h.b16 %v144
  %v811 = vunpack.c.l.b16 %v145
  %v812 = vunpack.c.l.b16 %v146
  %v813 = vunpack.c.h.b16 %v146
  %v814 = vunpack.c.l.b16 %v147
  %v815 = vunpack.c.l.b16 %v148
  %v816 = vunpack.c.h.b16 %v148
  %v817 = vunpack.c.l.b16 %v149
  %v818 = vunpack.c.l.b16 %v150
  %v819 = vunpack.c.h.b16 %v150
  %v820 = vunpack.c.l.b16 %v151
  %v821 = vunpack.c.l.b16 %v152
  %v822 = vunpack.c.h.b16 %v152
  %v823 = vunpack.c.l.b16 %v153
  %v824 = vunpack.c.l.b16 %v154
  %v825 = vunpack.c.h.b16 %v154
  %v826 = vunpack.c.l.b16 %v155
  %v827 = vunpack.c.l.b16 %v156
  %v828 = vunpack.c.h.b16 %v156
  %v829 = vunpack.c.l.b16 %v157
  %v830 = vunpack.c.l.b16 %v158
  %v831 = vunpack.c.h.b16 %v158
  %v832 = vunpack.c.l.b16 %v159
  %v833 = vunpack.c.l.b16 %v160
  %v834 = vunpack.c.h.b16 %v160
  %v835 = vunpack.c.l.b16 %v161
  %v836 = vunpack.c.l.b16 %v162
  %v837 = vunpack.c.h.b16 %v162
  %v838 = vunpack.c.l.b16 %v163
  %v839 = vunpack.c.l.b16 %v164
  %v840 = vunpack.c.h.b16 %v164
  %v841 = vunpack.c.l.b16 %v165
  %v842 = vunpack.c.l.b16 %v166
  %v843 = vunpack.c.h.b16 %v166
  %v844 = vunpack.c.l.b16 %v167
  %v845 = vunpack.c.l.b16 %v168
  %v846 = vunpack.c.h.b16 %v168
  %v847 = vunpack.c.l.b16 %v169
  %v848 = vunpack.c.l.b16 %v170
  %v849 = vunpack.c.h.b16 %v170
  %v850 = vunpack.c.l.b16 %v171
  %v851 = vunpack.c.l.b16 %v172
  %v852 = vunpack.c.h.b16 %v172
  %v853 = vunpack.c.l.b16 %v173
  %v854 = vunpack.c.l.b16 %v174
  %v855 = vunpack.c.h.b16 %v174
  %v856 = vunpack.c.l.b16 %v175
  %v857 = vunpack.c.l.b16 %v176
  %v858 = vunpack.c.h.b16 %v176
  %v859 = vunpack.c.l.b16 %v177
  %v860 = vunpack.c.l.b16 %v178
  %v861 = vunpack.c.h.b16 %v178
  %v862 = vunpack.c.l.b16 %v179
  %v863 = vunpack.c.l.b16 %v180
  %v864 = vunpack.c.h.b16 %v180
  %v865 = vunpack.c.l.b16 %v181
  %v866 = vunpack.c.l.b16 %v182
  %v867 = vunpack.c.h.b16 %v182
  %v868 = vunpack.c.l.b16 %v183
  %v869 = vunpack.c.l.b16 %v184
  %v870 = vunpack.c.h.b16 %v184
  %v871 = vunpack.c.l.b16 %v185
  %v872 = vunpack.c.l.b16 %v186
  %v873 = vunpack.c.h.b16 %v186
  %v874 = vunpack.c.l.b16 %v187
  %v875 = vunpack.c.l.b16 %v188
  %v876 = vunpack.c.h.b16 %v188
  %v877 = vunpack.c.l.b16 %v189
  %v878 = vunpack.c.l.b16 %v190
  %v879 = vunpack.c.h.b16 %v190
  %v880 = vunpack.c.l.b16 %v191
  %v881 = vunpack.c.l.b16 %v192
  %v882 = vunpack.c.h.b16 %v192
  %v883 = vunpack.c.l.b16 %v193
  %v884 = vunpack.c.l.b16 %v194
  %v885 = vunpack.c.h.b16 %v194
  %v886 = vunpack.c.l.b16 %v195
  %v887 = vunpack.c.l.b16 %v196
  %v888 = vunpack.c.h.b16 %v196
  %v889 = vunpack.c.l.b16 %v197
  %v890 = vunpack.c.l.b16 %v198
  %v891 = vunpack.c.h.b16 %v198
  %v892 = vunpack.c.l.b16 %v199
  %v893 = vunpack.c.l.b16 %v200
  %v894 = vunpack.c.h.b16 %v200
  %v895 = vunpack.c.l.b16 %v201
  %v896 = vunpack.c.l.b16 %v202
  %v897 = vunpack.c.h.b16 %v202
  %v898 = vunpack.c.l.b16 %v203
  %v899 = vunpack.c.l.b16 %v204
  %v900 = vunpack.c.h.b16 %v204
  %v901 = vunpack.c.l.b16 %v205
  %v902 = vunpack.c.l.b16 %v206
  %v903 = vunpack.c.h.b16 %v206
  %v904 = vunpack.c.l.b16 %v207
  %v905 = vunpack.c.l.b16 %v208
  %v906 = vunpack.c.h.b16 %v208
  %v907 = vunpack.c.l.b16 %v209
  %v908 = vunpack.c.l.b16 %v210
  %v909 = vunpack.c.h.b16 %v210
  %v910 = vunpack.c.l.b16 %v211
  %v911 = vunpack.c.l.b16 %v212
  %v912 = vunpack.c.h.b16 %v212
  %v913 = vunpack.c.l.b16 %v213
  %v914 = vunpack.c.l.b16 %v214
  %v915 = vunpack.c.h.b16 %v214
  %v916 = vunpack.c.l.b16 %v215
  %v917 = vunpack.c.l.b16 %v216
  %v918 = vunpack.c.h.b16 %v216
  %v919 = vunpack.c.l.b16 %v217
  %v920 = vunpack.c.l.b16 %v218
  %v921 = vunpack.c.h.b16 %v218
  %v922 = vunpack.c.l.b16 %v219
  %v923 = vunpack.c.l.b16 %v220
  %v924 = vunpack.c.h.b16 %v220
  %v925 = vunpack.c.l.b16 %v221
  %v926 = vunpack.c.l.b16 %v222
  %v927 = vunpack.c.h.b16 %v222
  %v928 = vunpack.c.l.b16 %v223
  %v929 = vunpack.c.l.b16 %v224
  %v930 = vunpack.c.h.b16 %v224
  %v931 = vunpack.c.l.b16 %v225
  %v932 = vunpack.c.l.b16 %v226
  %v933 = vunpack.c.h.b16 %v226
  %v934 = vunpack.c.l.b16 %v227
  %v935 = vunpack.c.l.b16 %v228
  %v936 = vunpack.c.h.b16 %v228
  %v937 = vunpack.c.l.b16 %v229
  %v938 = vunpack.c.l.b16 %v230
  %v939 = vunpack.c.h.b16 %v230
  %v940 = vunpack.c.l.b16 %v231
  %v941 = vunpack.c.l.b16 %v232
  %v942 = vunpack.c.h.b16 %v232
  %v943 = vunpack.c.l.b16 %v233
  %v944 = vunpack.c.l.b16 %v234
  %v945 = vunpack.c.h.b16 %v234
  %v946 = vunpack.c.l.b16 %v235
  %v947 = vunpack.c.l.b16 %v236
  %v948 = vunpack.c.h.b16 %v236
  %v949 = vunpack.c.l.b16 %v237
  %v950 = vunpack.c.l.b16 %v238
  %v951 = vunpack.c.h.b16 %v238
  %v952 = vunpack.c.l.b16 %v239
  %v953 = vunpack.c.l.b16 %v240
  %v954 = vunpack.c.h.b16 %v240
  %v955 = vunpack.c.l.b16 %v241
  %v956 = vunpack.c.l.b16 %v242
  %v957 = vunpack.c.h.b16 %v242
  %v958 = vunpack.c.l.b16 %v243
  %v959 = vunpack.c.l.b16 %v244
  %v960 = vunpack.c.h.b16 %v244
  %v961 = vunpack.c.l.b16 %v245
  %v962 = vunpack.c.l.b16 %v246
  %v963 = vunpack.c.h.b16 %v246
  %v964 = vunpack.c.l.b16 %v247
  %v965 = vpack.c.b16 %v776, %v773
  %v966 = vpack.c.b16 %v777, %v774
  %v967 = vpack.c.b16 %v778, %v775
  %v968 = vpack.c.b16 %v782, %v779
  %v969 = vpack.c.b16 %v783, %v780
  %v970 = vpack.c.b16 %v784, %v781
  %v971 = vpack.c.b16 %v788, %v785
  %v972 = vpack.c.b16 %v789, %v786
  %v973 = vpack.c.b16 %v790, %v787
  %v974 = vpack.c.b16 %v794, %v791
  %v975 = vpack.c.b16 %v795, %v792
  %v976 = vpack.c.b16 %v796, %v793
  %v977 = vpack.c.b16 %v800, %v797
  %v978 = vpack.c.b16 %v801, %v798
  %v979 = vpack.c.b16 %v802, %v799
  %v980 = vpack.c.b16 %v806, %v803
  %v981 = vpack.c.b16 %v807, %v804
  %v982 = vpack.c.b16 %v808, %v805
  %v983 = vpack.c.b16 %v812, %v809
  %v984 = vpack.c.b16 %v813, %v810
  %v985 = vpack.c.b16 %v814, %v811
  %v986 = vpack.c.b16 %v818, %v815
  %v987 = vpack.c.b16 %v819, %v816
  %v988 = vpack.c.b16 %v820, %v817
  %v989 = vpack.c.b16 %v824, %v821
  %v990 = vpack.c.b16 %v825, %v822
  %v991 = vpack.c.b16 %v826, %v823
  %v992 = vpack.c.b16 %v830, %v827
  %v993 = vpack.c.b16 %v831, %v828
  %v994 = vpack.c.b16 %v832, %v829
  %v995 = vpack.c.b16 %v836, %v833
  %v996 = vpack.c.b16 %v837, %v834
  %v997 = vpack.c.b16 %v838, %v835
  %v998 = vpack.c.b16 %v842, %v839
  %v999 = vpack.c.b16 %v843, %v840
  %v1000 = vpack.c.b16 %v844, %v841
  %v1001 = vpack.c.b16 %v848, %v845
  %v1002 = vpack.c.b16 %v849, %v846
  %v1003 = vpack.c.b16 %v850, %v847
  %v1004 = vpack.c.b16 %v854, %v851
  %v1005 = vpack.c.b16 %v855, %v852
  %v1006 = vpack.c.b16 %v856, %v853
  %v1007 = vpack.c.b16 %v860, %v857
  %v1008 = vpack.c.b16 %v861, %v858
  %v1009 = vpack.c.b16 %v862, %v859
  %v1010 = vpack.c.b16 %v866, %v863
  %v1011 = vpack.c.b16 %v867, %v864
  %v1012 = vpack.c.b16 %v868, %v865
  %v1013 = vpack.c.b16 %v872, %v869
  %v1014 = vpack.c.b16 %v873, %v870
  %v1015 = vpack.c.b16 %v874, %v871
  %v1016 = vpack.c.b16 %v878, %v875
  %v1017 = vpack.c.b16 %v879, %v876
  %v1018 = vpack.c.b16 %v880, %v877
  %v1019 = vpack.c.b16 %v884, %v881
  %v1020 = vpack.c.b16 %v885, %v882
  %v1021 = vpack.c.b16 %v886, %v883
  %v1022 = vpack.c.b16 %v890, %v887
  %v1023 = vpack.c.b16 %v891, %v888
  %v1024 = vpack.c.b16 %v892, %v889
  %v1025 = vpack.c.b16 %v896, %v893
  %v1026 = vpack.c.b16 %v897, %v894
  %v1027 = vpack.c.b16 %v898, %v895
  %v1028 = vpack.c.b16 %v902, %v899
  %v1029 = vpack.c.b16 %v903, %v900
  %v1030 = vpack.c.b16 %v904, %v901
  %v1031 = vpack.c.b16 %v908, %v905
  %v1032 = vpack.c.b16 %v909, %v906
  %v1033 = vpack.c.b16 %v910, %v907
  %v1034 = vpack.c.b16 %v914, %v911
  %v1035 = vpack.c.b16 %v915, %v912
  %v1036 = vpack.c.b16 %v916, %v913
  %v1037 = vpack.c.b16 %v920, %v917
  %v1038 = vpack.c.b16 %v921, %v918
  %v1039 = vpack.c.b16 %v922, %v919
  %v1040 = vpack.c.b16 %v926, %v923
  %v1041 = vpack.c.b16 %v927, %v924
  %v1042 = vpack.c.b16 %v928, %v925
  %v1043 = vpack.c.b16 %v932, %v929
  %v1044 = vpack.c.b16 %v933, %v930
  %v1045 = vpack.c.b16 %v934, %v931
  %v1046 = vpack.c.b16 %v938, %v935
  %v1047 = vpack.c.b16 %v939, %v936
  %v1048 = vpack.c.b16 %v940, %v937
  %v1049 = vpack.c.b16 %v944, %v941
  %v1050 = vpack.c.b16 %v945, %v942
  %v1051 = vpack.c.b16 %v946, %v943
  %v1052 = vpack.c.b16 %v950, %v947
  %v1053 = vpack.c.b16 %v951, %v948
  %v1054 = vpack.c.b16 %v952, %v949
  %v1055 = vpack.c.b16 %v956, %v953
  %v1056 = vpack.c.b16 %v957, %v954
  %v1057 = vpack.c.b16 %v958, %v955
  %v1058 = vpack.c.b16 %v962, %v959
  %v1059 = vpack.c.b16 %v963, %v960
  %v1060 = vpack.c.b16 %v964, %v961
  %1157 = vmatprep.subr.bf16.mxu0 %v987
  %1158 = vmatpush1.bf16.msra.mxu0 %v986
  %1159 = vmatprep.subr.bf16.mxu0 %v984
  %1160 = vmatpush1.bf16.msra.mxu0 %v983
  %1161 = vmatprep.subr.bf16.mxu0 %v981
  %1162 = vmatpush1.bf16.msra.mxu0 %v980
  %1163 = vmatprep.subr.bf16.mxu0 %v978
  %1164 = vmatpush1.bf16.msra.mxu0 %v977
  %1165 = vmatprep.subr.bf16.mxu0 %v975
  %1166 = vmatpush1.bf16.msra.mxu0 %v974
  %1167 = vmatprep.subr.bf16.mxu0 %v972
  %1168 = vmatpush1.bf16.msra.mxu0 %v971
  %1169 = vmatprep.subr.bf16.mxu0 %v969
  %1170 = vmatpush1.bf16.msra.mxu0 %v968
  %1171 = vmatprep.subr.bf16.mxu0 %v966
  %1172 = vmatpush1.bf16.msra.mxu0 %v965
  %1173 = vmatprep.subr.bf16.mxu0 %v1011
  %1174 = vmatpush2.bf16.msra.mxu0 %v1010
  %1175 = vmatprep.subr.bf16.mxu0 %v1008
  %1176 = vmatpush2.bf16.msra.mxu0 %v1007
  %1177 = vmatprep.subr.bf16.mxu0 %v1005
  %1178 = vmatpush2.bf16.msra.mxu0 %v1004
  %1179 = vmatprep.subr.bf16.mxu0 %v1002
  %1180 = vmatpush2.bf16.msra.mxu0 %v1001
  %1181 = vmatprep.subr.bf16.mxu0 %v999
  %1182 = vmatpush2.bf16.msra.mxu0 %v998
  %1183 = vmatprep.subr.bf16.mxu0 %v996
  %1184 = vmatpush2.bf16.msra.mxu0 %v995
  %1185 = vmatprep.subr.bf16.mxu0 %v993
  %1186 = vmatpush2.bf16.msra.mxu0 %v992
  %1187 = vmatprep.subr.bf16.mxu0 %v990
  %1188 = vmatpush2.bf16.msra.mxu0 %v989
  %1189 = vmatprep.mubr.bf16.mxu0 %v494
  %1190 = vmatmul.mubr.bf16.gmra.mxu0 %v493
  %v1191 = vpop.f32.mrf.mxu0
  %v1192 = vadd.f32 %v253, %v1191
  %v1193 = vpop.f32.mrf.mxu0
  %v1194 = vadd.f32 %v257, %v1193
  %v1195 = vpop.f32.mrf.mxu0
  %v1196 = vadd.f32 %v253, %v1195
  %v1197 = vpop.f32.mrf.mxu0
  %v1198 = vadd.f32 %v257, %v1197
  %1199 = vmatprep.mubr.bf16.mxu0 %v498
  %1200 = vmatmul.mubr.bf16.gmra.mxu0 %v497
  %v1201 = vpop.f32.mrf.mxu0
  %v1202 = vadd.f32 %v253, %v1201
  %v1203 = vpop.f32.mrf.mxu0
  %v1204 = vadd.f32 %v257, %v1203
  %v1205 = vpop.f32.mrf.mxu0
  %v1206 = vadd.f32 %v253, %v1205
  %v1207 = vpop.f32.mrf.mxu0
  %v1208 = vadd.f32 %v257, %v1207
  %1209 = vmatprep.mubr.bf16.mxu0 %v502
  %1210 = vmatmul.mubr.bf16.gmra.mxu0 %v501
  %v1211 = vpop.f32.mrf.mxu0
  %v1212 = vadd.f32 %v253, %v1211
  %v1213 = vpop.f32.mrf.mxu0
  %v1214 = vadd.f32 %v257, %v1213
  %v1215 = vpop.f32.mrf.mxu0
  %v1216 = vadd.f32 %v253, %v1215
  %v1217 = vpop.f32.mrf.mxu0
  %v1218 = vadd.f32 %v257, %v1217
  %1219 = vmatprep.mubr.bf16.mxu0 %v506
  %1220 = vmatmul.mubr.bf16.gmra.mxu0 %v505
  %v1221 = vpop.f32.mrf.mxu0
  %v1222 = vadd.f32 %v253, %v1221
  %v1223 = vpop.f32.mrf.mxu0
  %v1224 = vadd.f32 %v257, %v1223
  %v1225 = vpop.f32.mrf.mxu0
  %v1226 = vadd.f32 %v253, %v1225
  %v1227 = vpop.f32.mrf.mxu0
  %v1228 = vadd.f32 %v257, %v1227
  %1229 = vmatprep.mubr.bf16.mxu0 %v510
  %1230 = vmatmul.mubr.bf16.gmra.mxu0 %v509
  %v1231 = vpop.f32.mrf.mxu0
  %v1232 = vadd.f32 %v253, %v1231
  %v1233 = vpop.f32.mrf.mxu0
  %v1234 = vadd.f32 %v257, %v1233
  %v1235 = vpop.f32.mrf.mxu0
  %v1236 = vadd.f32 %v253, %v1235
  %v1237 = vpop.f32.mrf.mxu0
  %v1238 = vadd.f32 %v257, %v1237
  %1239 = vmatprep.mubr.bf16.mxu0 %v514
  %1240 = vmatmul.mubr.bf16.gmra.mxu0 %v513
  %v1241 = vpop.f32.mrf.mxu0
  %v1242 = vadd.f32 %v253, %v1241
  %v1243 = vpop.f32.mrf.mxu0
  %v1244 = vadd.f32 %v257, %v1243
  %v1245 = vpop.f32.mrf.mxu0
  %v1246 = vadd.f32 %v253, %v1245
  %v1247 = vpop.f32.mrf.mxu0
  %v1248 = vadd.f32 %v257, %v1247
  %1249 = vmatprep.mubr.bf16.mxu0 %v518
  %1250 = vmatmul.mubr.bf16.gmra.mxu0 %v517
  %v1251 = vpop.f32.mrf.mxu0
  %v1252 = vadd.f32 %v253, %v1251
  %v1253 = vpop.f32.mrf.mxu0
  %v1254 = vadd.f32 %v257, %v1253
  %v1255 = vpop.f32.mrf.mxu0
  %v1256 = vadd.f32 %v253, %v1255
  %v1257 = vpop.f32.mrf.mxu0
  %v1258 = vadd.f32 %v257, %v1257
  %1259 = vmatprep.mubr.bf16.mxu0 %v522
  %1260 = vmatmul.mubr.bf16.gmra.mxu0 %v521
  %v1261 = vpop.f32.mrf.mxu0
  %v1262 = vadd.f32 %v253, %v1261
  %v1263 = vpop.f32.mrf.mxu0
  %v1264 = vadd.f32 %v257, %v1263
  %v1265 = vpop.f32.mrf.mxu0
  %v1266 = vadd.f32 %v253, %v1265
  %v1267 = vpop.f32.mrf.mxu0
  %v1268 = vadd.f32 %v257, %v1267
  %1269 = vmatprep.mubr.bf16.mxu0 %v526
  %1270 = vmatmul.mubr.bf16.gmra.mxu0 %v525
  %v1271 = vpop.f32.mrf.mxu0
  %v1272 = vadd.f32 %v253, %v1271
  %v1273 = vpop.f32.mrf.mxu0
  %v1274 = vadd.f32 %v257, %v1273
  %v1275 = vpop.f32.mrf.mxu0
  %v1276 = vadd.f32 %v253, %v1275
  %v1277 = vpop.f32.mrf.mxu0
  %v1278 = vadd.f32 %v257, %v1277
  %1279 = vmatprep.mubr.bf16.mxu0 %v530
  %1280 = vmatmul.mubr.bf16.gmra.mxu0 %v529
  %v1281 = vpop.f32.mrf.mxu0
  %v1282 = vadd.f32 %v253, %v1281
  %v1283 = vpop.f32.mrf.mxu0
  %v1284 = vadd.f32 %v257, %v1283
  %v1285 = vpop.f32.mrf.mxu0
  %v1286 = vadd.f32 %v253, %v1285
  %v1287 = vpop.f32.mrf.mxu0
  %v1288 = vadd.f32 %v257, %v1287
  %1289 = vmatprep.mubr.bf16.mxu0 %v534
  %1290 = vmatmul.mubr.bf16.gmra.mxu0 %v533
  %v1291 = vpop.f32.mrf.mxu0
  %v1292 = vadd.f32 %v253, %v1291
  %v1293 = vpop.f32.mrf.mxu0
  %v1294 = vadd.f32 %v257, %v1293
  %v1295 = vpop.f32.mrf.mxu0
  %v1296 = vadd.f32 %v253, %v1295
  %v1297 = vpop.f32.mrf.mxu0
  %v1298 = vadd.f32 %v257, %v1297
  %1299 = vmatprep.mubr.bf16.mxu0 %v538
  %1300 = vmatmul.mubr.bf16.gmra.mxu0 %v537
  %v1301 = vpop.f32.mrf.mxu0
  %v1302 = vadd.f32 %v253, %v1301
  %v1303 = vpop.f32.mrf.mxu0
  %v1304 = vadd.f32 %v257, %v1303
  %v1305 = vpop.f32.mrf.mxu0
  %v1306 = vadd.f32 %v253, %v1305
  %v1307 = vpop.f32.mrf.mxu0
  %v1308 = vadd.f32 %v257, %v1307
  %1309 = vmatprep.mubr.bf16.mxu0 %v542
  %1310 = vmatmul.mubr.bf16.gmra.mxu0 %v541
  %v1311 = vpop.f32.mrf.mxu0
  %v1312 = vadd.f32 %v253, %v1311
  %v1313 = vpop.f32.mrf.mxu0
  %v1314 = vadd.f32 %v257, %v1313
  %v1315 = vpop.f32.mrf.mxu0
  %v1316 = vadd.f32 %v253, %v1315
  %v1317 = vpop.f32.mrf.mxu0
  %v1318 = vadd.f32 %v257, %v1317
  %1319 = vmatprep.mubr.bf16.mxu0 %v546
  %1320 = vmatmul.mubr.bf16.gmra.mxu0 %v545
  %v1321 = vpop.f32.mrf.mxu0
  %v1322 = vadd.f32 %v253, %v1321
  %v1323 = vpop.f32.mrf.mxu0
  %v1324 = vadd.f32 %v257, %v1323
  %v1325 = vpop.f32.mrf.mxu0
  %v1326 = vadd.f32 %v253, %v1325
  %v1327 = vpop.f32.mrf.mxu0
  %v1328 = vadd.f32 %v257, %v1327
  %1329 = vmatprep.mubr.bf16.mxu0 %v550
  %1330 = vmatmul.mubr.bf16.gmra.mxu0 %v549
  %v1331 = vpop.f32.mrf.mxu0
  %v1332 = vadd.f32 %v253, %v1331
  %v1333 = vpop.f32.mrf.mxu0
  %v1334 = vadd.f32 %v257, %v1333
  %v1335 = vpop.f32.mrf.mxu0
  %v1336 = vadd.f32 %v253, %v1335
  %v1337 = vpop.f32.mrf.mxu0
  %v1338 = vadd.f32 %v257, %v1337
  %1339 = vmatprep.mubr.bf16.mxu0 %v554
  %1340 = vmatmul.mubr.bf16.gmra.mxu0 %v553
  %v1341 = vpop.f32.mrf.mxu0
  %v1342 = vadd.f32 %v253, %v1341
  %v1343 = vpop.f32.mrf.mxu0
  %v1344 = vadd.f32 %v257, %v1343
  %v1345 = vpop.f32.mrf.mxu0
  %v1346 = vadd.f32 %v253, %v1345
  %v1347 = vpop.f32.mrf.mxu0
  %v1348 = vadd.f32 %v257, %v1347
  %1349 = vmatprep.mubr.bf16.mxu0 %v558
  %1350 = vmatmul.mubr.bf16.gmra.mxu0 %v557
  %v1351 = vpop.f32.mrf.mxu0
  %v1352 = vadd.f32 %v253, %v1351
  %v1353 = vpop.f32.mrf.mxu0
  %v1354 = vadd.f32 %v257, %v1353
  %v1355 = vpop.f32.mrf.mxu0
  %v1356 = vadd.f32 %v253, %v1355
  %v1357 = vpop.f32.mrf.mxu0
  %v1358 = vadd.f32 %v257, %v1357
  %1359 = vmatprep.mubr.bf16.mxu0 %v562
  %1360 = vmatmul.mubr.bf16.gmra.mxu0 %v561
  %v1361 = vpop.f32.mrf.mxu0
  %v1362 = vadd.f32 %v253, %v1361
  %v1363 = vpop.f32.mrf.mxu0
  %v1364 = vadd.f32 %v257, %v1363
  %v1365 = vpop.f32.mrf.mxu0
  %v1366 = vadd.f32 %v253, %v1365
  %v1367 = vpop.f32.mrf.mxu0
  %v1368 = vadd.f32 %v257, %v1367
  %1369 = vmatprep.mubr.bf16.mxu0 %v566
  %1370 = vmatmul.mubr.bf16.gmra.mxu0 %v565
  %v1371 = vpop.f32.mrf.mxu0
  %v1372 = vadd.f32 %v253, %v1371
  %v1373 = vpop.f32.mrf.mxu0
  %v1374 = vadd.f32 %v257, %v1373
  %v1375 = vpop.f32.mrf.mxu0
  %v1376 = vadd.f32 %v253, %v1375
  %v1377 = vpop.f32.mrf.mxu0
  %v1378 = vadd.f32 %v257, %v1377
  %1379 = vdwg.mxu0
  %1380 = vmatprep.subr.bf16.mxu0 %v1035
  %1381 = vmatpush1.bf16.msra.mxu0 %v1034
  %1382 = vmatprep.subr.bf16.mxu0 %v1032
  %1383 = vmatpush1.bf16.msra.mxu0 %v1031
  %1384 = vmatprep.subr.bf16.mxu0 %v1029
  %1385 = vmatpush1.bf16.msra.mxu0 %v1028
  %1386 = vmatprep.subr.bf16.mxu0 %v1026
  %1387 = vmatpush1.bf16.msra.mxu0 %v1025
  %1388 = vmatprep.subr.bf16.mxu0 %v1023
  %1389 = vmatpush1.bf16.msra.mxu0 %v1022
  %1390 = vmatprep.subr.bf16.mxu0 %v1020
  %1391 = vmatpush1.bf16.msra.mxu0 %v1019
  %1392 = vmatprep.subr.bf16.mxu0 %v1017
  %1393 = vmatpush1.bf16.msra.mxu0 %v1016
  %1394 = vmatprep.subr.bf16.mxu0 %v1014
  %1395 = vmatpush1.bf16.msra.mxu0 %v1013
  %1396 = vmatprep.subr.bf16.mxu0 %v1059
  %1397 = vmatpush2.bf16.msra.mxu0 %v1058
  %1398 = vmatprep.subr.bf16.mxu0 %v1056
  %1399 = vmatpush2.bf16.msra.mxu0 %v1055
  %1400 = vmatprep.subr.bf16.mxu0 %v1053
  %1401 = vmatpush2.bf16.msra.mxu0 %v1052
  %1402 = vmatprep.subr.bf16.mxu0 %v1050
  %1403 = vmatpush2.bf16.msra.mxu0 %v1049
  %1404 = vmatprep.subr.bf16.mxu0 %v1047
  %1405 = vmatpush2.bf16.msra.mxu0 %v1046
  %1406 = vmatprep.subr.bf16.mxu0 %v1044
  %1407 = vmatpush2.bf16.msra.mxu0 %v1043
  %1408 = vmatprep.subr.bf16.mxu0 %v1041
  %1409 = vmatpush2.bf16.msra.mxu0 %v1040
  %1410 = vmatprep.subr.bf16.mxu0 %v1038
  %1411 = vmatpush2.bf16.msra.mxu0 %v1037
  %1412 = vmatprep.mubr.bf16.mxu0 %v496
  %1413 = vmatmul.mubr.bf16.gmra.mxu0 %v495
  %v1414 = vpop.f32.mrf.mxu0
  %v1415 = vadd.f32 %v1192, %v1414
  %v1416 = vpop.f32.mrf.mxu0
  %v1417 = vadd.f32 %v1194, %v1416
  %v1418 = vpop.f32.mrf.mxu0
  %v1419 = vadd.f32 %v1196, %v1418
  %v1420 = vpop.f32.mrf.mxu0
  %v1421 = vadd.f32 %v1198, %v1420
  %1422 = vmatprep.mubr.bf16.mxu0 %v500
  %1423 = vmatmul.mubr.bf16.gmra.mxu0 %v499
  %v1424 = vpop.f32.mrf.mxu0
  %v1425 = vadd.f32 %v1202, %v1424
  %v1426 = vpop.f32.mrf.mxu0
  %v1427 = vadd.f32 %v1204, %v1426
  %v1428 = vpop.f32.mrf.mxu0
  %v1429 = vadd.f32 %v1206, %v1428
  %v1430 = vpop.f32.mrf.mxu0
  %v1431 = vadd.f32 %v1208, %v1430
  %1432 = vmatprep.mubr.bf16.mxu0 %v504
  %1433 = vmatmul.mubr.bf16.gmra.mxu0 %v503
  %v1434 = vpop.f32.mrf.mxu0
  %v1435 = vadd.f32 %v1212, %v1434
  %v1436 = vpop.f32.mrf.mxu0
  %v1437 = vadd.f32 %v1214, %v1436
  %v1438 = vpop.f32.mrf.mxu0
  %v1439 = vadd.f32 %v1216, %v1438
  %v1440 = vpop.f32.mrf.mxu0
  %v1441 = vadd.f32 %v1218, %v1440
  %1442 = vmatprep.mubr.bf16.mxu0 %v508
  %1443 = vmatmul.mubr.bf16.gmra.mxu0 %v507
  %v1444 = vpop.f32.mrf.mxu0
  %v1445 = vadd.f32 %v1222, %v1444
  %v1446 = vpop.f32.mrf.mxu0
  %v1447 = vadd.f32 %v1224, %v1446
  %v1448 = vpop.f32.mrf.mxu0
  %v1449 = vadd.f32 %v1226, %v1448
  %v1450 = vpop.f32.mrf.mxu0
  %v1451 = vadd.f32 %v1228, %v1450
  %1452 = vmatprep.mubr.bf16.mxu0 %v512
  %1453 = vmatmul.mubr.bf16.gmra.mxu0 %v511
  %v1454 = vpop.f32.mrf.mxu0
  %v1455 = vadd.f32 %v1232, %v1454
  %v1456 = vpop.f32.mrf.mxu0
  %v1457 = vadd.f32 %v1234, %v1456
  %v1458 = vpop.f32.mrf.mxu0
  %v1459 = vadd.f32 %v1236, %v1458
  %v1460 = vpop.f32.mrf.mxu0
  %v1461 = vadd.f32 %v1238, %v1460
  %1462 = vmatprep.mubr.bf16.mxu0 %v516
  %1463 = vmatmul.mubr.bf16.gmra.mxu0 %v515
  %v1464 = vpop.f32.mrf.mxu0
  %v1465 = vadd.f32 %v1242, %v1464
  %v1466 = vpop.f32.mrf.mxu0
  %v1467 = vadd.f32 %v1244, %v1466
  %v1468 = vpop.f32.mrf.mxu0
  %v1469 = vadd.f32 %v1246, %v1468
  %v1470 = vpop.f32.mrf.mxu0
  %v1471 = vadd.f32 %v1248, %v1470
  %1472 = vmatprep.mubr.bf16.mxu0 %v520
  %1473 = vmatmul.mubr.bf16.gmra.mxu0 %v519
  %v1474 = vpop.f32.mrf.mxu0
  %v1475 = vadd.f32 %v1252, %v1474
  %v1476 = vpop.f32.mrf.mxu0
  %v1477 = vadd.f32 %v1254, %v1476
  %v1478 = vpop.f32.mrf.mxu0
  %v1479 = vadd.f32 %v1256, %v1478
  %v1480 = vpop.f32.mrf.mxu0
  %v1481 = vadd.f32 %v1258, %v1480
  %1482 = vmatprep.mubr.bf16.mxu0 %v524
  %1483 = vmatmul.mubr.bf16.gmra.mxu0 %v523
  %v1484 = vpop.f32.mrf.mxu0
  %v1485 = vadd.f32 %v1262, %v1484
  %v1486 = vpop.f32.mrf.mxu0
  %v1487 = vadd.f32 %v1264, %v1486
  %v1488 = vpop.f32.mrf.mxu0
  %v1489 = vadd.f32 %v1266, %v1488
  %v1490 = vpop.f32.mrf.mxu0
  %v1491 = vadd.f32 %v1268, %v1490
  %1492 = vmatprep.mubr.bf16.mxu0 %v528
  %1493 = vmatmul.mubr.bf16.gmra.mxu0 %v527
  %v1494 = vpop.f32.mrf.mxu0
  %v1495 = vadd.f32 %v1272, %v1494
  %v1496 = vpop.f32.mrf.mxu0
  %v1497 = vadd.f32 %v1274, %v1496
  %v1498 = vpop.f32.mrf.mxu0
  %v1499 = vadd.f32 %v1276, %v1498
  %v1500 = vpop.f32.mrf.mxu0
  %v1501 = vadd.f32 %v1278, %v1500
  %1502 = vmatprep.mubr.bf16.mxu0 %v532
  %1503 = vmatmul.mubr.bf16.gmra.mxu0 %v531
  %v1504 = vpop.f32.mrf.mxu0
  %v1505 = vadd.f32 %v1282, %v1504
  %v1506 = vpop.f32.mrf.mxu0
  %v1507 = vadd.f32 %v1284, %v1506
  %v1508 = vpop.f32.mrf.mxu0
  %v1509 = vadd.f32 %v1286, %v1508
  %v1510 = vpop.f32.mrf.mxu0
  %v1511 = vadd.f32 %v1288, %v1510
  %1512 = vmatprep.mubr.bf16.mxu0 %v536
  %1513 = vmatmul.mubr.bf16.gmra.mxu0 %v535
  %v1514 = vpop.f32.mrf.mxu0
  %v1515 = vadd.f32 %v1292, %v1514
  %v1516 = vpop.f32.mrf.mxu0
  %v1517 = vadd.f32 %v1294, %v1516
  %v1518 = vpop.f32.mrf.mxu0
  %v1519 = vadd.f32 %v1296, %v1518
  %v1520 = vpop.f32.mrf.mxu0
  %v1521 = vadd.f32 %v1298, %v1520
  %1522 = vmatprep.mubr.bf16.mxu0 %v540
  %1523 = vmatmul.mubr.bf16.gmra.mxu0 %v539
  %v1524 = vpop.f32.mrf.mxu0
  %v1525 = vadd.f32 %v1302, %v1524
  %v1526 = vpop.f32.mrf.mxu0
  %v1527 = vadd.f32 %v1304, %v1526
  %v1528 = vpop.f32.mrf.mxu0
  %v1529 = vadd.f32 %v1306, %v1528
  %v1530 = vpop.f32.mrf.mxu0
  %v1531 = vadd.f32 %v1308, %v1530
  %1532 = vmatprep.mubr.bf16.mxu0 %v544
  %1533 = vmatmul.mubr.bf16.gmra.mxu0 %v543
  %v1534 = vpop.f32.mrf.mxu0
  %v1535 = vadd.f32 %v1312, %v1534
  %v1536 = vpop.f32.mrf.mxu0
  %v1537 = vadd.f32 %v1314, %v1536
  %v1538 = vpop.f32.mrf.mxu0
  %v1539 = vadd.f32 %v1316, %v1538
  %v1540 = vpop.f32.mrf.mxu0
  %v1541 = vadd.f32 %v1318, %v1540
  %1542 = vmatprep.mubr.bf16.mxu0 %v548
  %1543 = vmatmul.mubr.bf16.gmra.mxu0 %v547
  %v1544 = vpop.f32.mrf.mxu0
  %v1545 = vadd.f32 %v1322, %v1544
  %v1546 = vpop.f32.mrf.mxu0
  %v1547 = vadd.f32 %v1324, %v1546
  %v1548 = vpop.f32.mrf.mxu0
  %v1549 = vadd.f32 %v1326, %v1548
  %v1550 = vpop.f32.mrf.mxu0
  %v1551 = vadd.f32 %v1328, %v1550
  %1552 = vmatprep.mubr.bf16.mxu0 %v552
  %1553 = vmatmul.mubr.bf16.gmra.mxu0 %v551
  %v1554 = vpop.f32.mrf.mxu0
  %v1555 = vadd.f32 %v1332, %v1554
  %v1556 = vpop.f32.mrf.mxu0
  %v1557 = vadd.f32 %v1334, %v1556
  %v1558 = vpop.f32.mrf.mxu0
  %v1559 = vadd.f32 %v1336, %v1558
  %v1560 = vpop.f32.mrf.mxu0
  %v1561 = vadd.f32 %v1338, %v1560
  %1562 = vmatprep.mubr.bf16.mxu0 %v556
  %1563 = vmatmul.mubr.bf16.gmra.mxu0 %v555
  %v1564 = vpop.f32.mrf.mxu0
  %v1565 = vadd.f32 %v1342, %v1564
  %v1566 = vpop.f32.mrf.mxu0
  %v1567 = vadd.f32 %v1344, %v1566
  %v1568 = vpop.f32.mrf.mxu0
  %v1569 = vadd.f32 %v1346, %v1568
  %v1570 = vpop.f32.mrf.mxu0
  %v1571 = vadd.f32 %v1348, %v1570
  %1572 = vmatprep.mubr.bf16.mxu0 %v560
  %1573 = vmatmul.mubr.bf16.gmra.mxu0 %v559
  %v1574 = vpop.f32.mrf.mxu0
  %v1575 = vadd.f32 %v1352, %v1574
  %v1576 = vpop.f32.mrf.mxu0
  %v1577 = vadd.f32 %v1354, %v1576
  %v1578 = vpop.f32.mrf.mxu0
  %v1579 = vadd.f32 %v1356, %v1578
  %v1580 = vpop.f32.mrf.mxu0
  %v1581 = vadd.f32 %v1358, %v1580
  %1582 = vmatprep.mubr.bf16.mxu0 %v564
  %1583 = vmatmul.mubr.bf16.gmra.mxu0 %v563
  %v1584 = vpop.f32.mrf.mxu0
  %v1585 = vadd.f32 %v1362, %v1584
  %v1586 = vpop.f32.mrf.mxu0
  %v1587 = vadd.f32 %v1364, %v1586
  %v1588 = vpop.f32.mrf.mxu0
  %v1589 = vadd.f32 %v1366, %v1588
  %v1590 = vpop.f32.mrf.mxu0
  %v1591 = vadd.f32 %v1368, %v1590
  %1592 = vmatprep.mubr.bf16.mxu0 %v568
  %1593 = vmatmul.mubr.bf16.gmra.mxu0 %v567
  %v1594 = vpop.f32.mrf.mxu0
  %v1595 = vadd.f32 %v1372, %v1594
  %v1596 = vpop.f32.mrf.mxu0
  %v1597 = vadd.f32 %v1374, %v1596
  %v1598 = vpop.f32.mrf.mxu0
  %v1599 = vadd.f32 %v1376, %v1598
  %v1600 = vpop.f32.mrf.mxu0
  %v1601 = vadd.f32 %v1378, %v1600
  %1602 = vdwg.mxu0
  %1603 = vmatprep.subr.bf16.mxu0 0
  %1604 = vmatpush1.bf16.msra.mxu0 %v988
  %1605 = vmatprep.subr.bf16.mxu0 0
  %1606 = vmatpush1.bf16.msra.mxu0 %v985
  %1607 = vmatprep.subr.bf16.mxu0 0
  %1608 = vmatpush1.bf16.msra.mxu0 %v982
  %1609 = vmatprep.subr.bf16.mxu0 0
  %1610 = vmatpush1.bf16.msra.mxu0 %v979
  %1611 = vmatprep.subr.bf16.mxu0 0
  %1612 = vmatpush1.bf16.msra.mxu0 %v976
  %1613 = vmatprep.subr.bf16.mxu0 0
  %1614 = vmatpush1.bf16.msra.mxu0 %v973
  %1615 = vmatprep.subr.bf16.mxu0 0
  %1616 = vmatpush1.bf16.msra.mxu0 %v970
  %1617 = vmatprep.subr.bf16.mxu0 0
  %1618 = vmatpush1.bf16.msra.mxu0 %v967
  %1619 = vmatprep.subr.bf16.mxu0 0
  %1620 = vmatpush2.bf16.msra.mxu0 %v1012
  %1621 = vmatprep.subr.bf16.mxu0 0
  %1622 = vmatpush2.bf16.msra.mxu0 %v1009
  %1623 = vmatprep.subr.bf16.mxu0 0
  %1624 = vmatpush2.bf16.msra.mxu0 %v1006
  %1625 = vmatprep.subr.bf16.mxu0 0
  %1626 = vmatpush2.bf16.msra.mxu0 %v1003
  %1627 = vmatprep.subr.bf16.mxu0 0
  %1628 = vmatpush2.bf16.msra.mxu0 %v1000
  %1629 = vmatprep.subr.bf16.mxu0 0
  %1630 = vmatpush2.bf16.msra.mxu0 %v997
  %1631 = vmatprep.subr.bf16.mxu0 0
  %1632 = vmatpush2.bf16.msra.mxu0 %v994
  %1633 = vmatprep.subr.bf16.mxu0 0
  %1634 = vmatpush2.bf16.msra.mxu0 %v991
  %1635 = vmatprep.mubr.bf16.mxu0 %v494
  %1636 = vmatmul.mubr.bf16.gmra.mxu0 %v493
  %v1637 = vpop.f32.mrf.mxu0
  %v1638 = vadd.f32 %v261, %v1637
  %v1639 = vpop.f32.mrf.mxu0
  %v1640 = vpop.f32.mrf.mxu0
  %v1641 = vadd.f32 %v261, %v1640
  %v1642 = vpop.f32.mrf.mxu0
  %1643 = vmatprep.mubr.bf16.mxu0 %v498
  %1644 = vmatmul.mubr.bf16.gmra.mxu0 %v497
  %v1645 = vpop.f32.mrf.mxu0
  %v1646 = vadd.f32 %v261, %v1645
  %v1647 = vpop.f32.mrf.mxu0
  %v1648 = vpop.f32.mrf.mxu0
  %v1649 = vadd.f32 %v261, %v1648
  %v1650 = vpop.f32.mrf.mxu0
  %1651 = vmatprep.mubr.bf16.mxu0 %v502
  %1652 = vmatmul.mubr.bf16.gmra.mxu0 %v501
  %v1653 = vpop.f32.mrf.mxu0
  %v1654 = vadd.f32 %v261, %v1653
  %v1655 = vpop.f32.mrf.mxu0
  %v1656 = vpop.f32.mrf.mxu0
  %v1657 = vadd.f32 %v261, %v1656
  %v1658 = vpop.f32.mrf.mxu0
  %1659 = vmatprep.mubr.bf16.mxu0 %v506
  %1660 = vmatmul.mubr.bf16.gmra.mxu0 %v505
  %v1661 = vpop.f32.mrf.mxu0
  %v1662 = vadd.f32 %v261, %v1661
  %v1663 = vpop.f32.mrf.mxu0
  %v1664 = vpop.f32.mrf.mxu0
  %v1665 = vadd.f32 %v261, %v1664
  %v1666 = vpop.f32.mrf.mxu0
  %1667 = vmatprep.mubr.bf16.mxu0 %v510
  %1668 = vmatmul.mubr.bf16.gmra.mxu0 %v509
  %v1669 = vpop.f32.mrf.mxu0
  %v1670 = vadd.f32 %v261, %v1669
  %v1671 = vpop.f32.mrf.mxu0
  %v1672 = vpop.f32.mrf.mxu0
  %v1673 = vadd.f32 %v261, %v1672
  %v1674 = vpop.f32.mrf.mxu0
  %1675 = vmatprep.mubr.bf16.mxu0 %v514
  %1676 = vmatmul.mubr.bf16.gmra.mxu0 %v513
  %v1677 = vpop.f32.mrf.mxu0
  %v1678 = vadd.f32 %v261, %v1677
  %v1679 = vpop.f32.mrf.mxu0
  %v1680 = vpop.f32.mrf.mxu0
  %v1681 = vadd.f32 %v261, %v1680
  %v1682 = vpop.f32.mrf.mxu0
  %1683 = vmatprep.mubr.bf16.mxu0 %v518
  %1684 = vmatmul.mubr.bf16.gmra.mxu0 %v517
  %v1685 = vpop.f32.mrf.mxu0
  %v1686 = vadd.f32 %v261, %v1685
  %v1687 = vpop.f32.mrf.mxu0
  %v1688 = vpop.f32.mrf.mxu0
  %v1689 = vadd.f32 %v261, %v1688
  %v1690 = vpop.f32.mrf.mxu0
  %1691 = vmatprep.mubr.bf16.mxu0 %v522
  %1692 = vmatmul.mubr.bf16.gmra.mxu0 %v521
  %v1693 = vpop.f32.mrf.mxu0
  %v1694 = vadd.f32 %v261, %v1693
  %v1695 = vpop.f32.mrf.mxu0
  %v1696 = vpop.f32.mrf.mxu0
  %v1697 = vadd.f32 %v261, %v1696
  %v1698 = vpop.f32.mrf.mxu0
  %1699 = vmatprep.mubr.bf16.mxu0 %v526
  %1700 = vmatmul.mubr.bf16.gmra.mxu0 %v525
  %v1701 = vpop.f32.mrf.mxu0
  %v1702 = vadd.f32 %v261, %v1701
  %v1703 = vpop.f32.mrf.mxu0
  %v1704 = vpop.f32.mrf.mxu0
  %v1705 = vadd.f32 %v261, %v1704
  %v1706 = vpop.f32.mrf.mxu0
  %1707 = vmatprep.mubr.bf16.mxu0 %v530
  %1708 = vmatmul.mubr.bf16.gmra.mxu0 %v529
  %v1709 = vpop.f32.mrf.mxu0
  %v1710 = vadd.f32 %v261, %v1709
  %v1711 = vpop.f32.mrf.mxu0
  %v1712 = vpop.f32.mrf.mxu0
  %v1713 = vadd.f32 %v261, %v1712
  %v1714 = vpop.f32.mrf.mxu0
  %1715 = vmatprep.mubr.bf16.mxu0 %v534
  %1716 = vmatmul.mubr.bf16.gmra.mxu0 %v533
  %v1717 = vpop.f32.mrf.mxu0
  %v1718 = vadd.f32 %v261, %v1717
  %v1719 = vpop.f32.mrf.mxu0
  %v1720 = vpop.f32.mrf.mxu0
  %v1721 = vadd.f32 %v261, %v1720
  %v1722 = vpop.f32.mrf.mxu0
  %1723 = vmatprep.mubr.bf16.mxu0 %v538
  %1724 = vmatmul.mubr.bf16.gmra.mxu0 %v537
  %v1725 = vpop.f32.mrf.mxu0
  %v1726 = vadd.f32 %v261, %v1725
  %v1727 = vpop.f32.mrf.mxu0
  %v1728 = vpop.f32.mrf.mxu0
  %v1729 = vadd.f32 %v261, %v1728
  %v1730 = vpop.f32.mrf.mxu0
  %1731 = vmatprep.mubr.bf16.mxu0 %v542
  %1732 = vmatmul.mubr.bf16.gmra.mxu0 %v541
  %v1733 = vpop.f32.mrf.mxu0
  %v1734 = vadd.f32 %v261, %v1733
  %v1735 = vpop.f32.mrf.mxu0
  %v1736 = vpop.f32.mrf.mxu0
  %v1737 = vadd.f32 %v261, %v1736
  %v1738 = vpop.f32.mrf.mxu0
  %1739 = vmatprep.mubr.bf16.mxu0 %v546
  %1740 = vmatmul.mubr.bf16.gmra.mxu0 %v545
  %v1741 = vpop.f32.mrf.mxu0
  %v1742 = vadd.f32 %v261, %v1741
  %v1743 = vpop.f32.mrf.mxu0
  %v1744 = vpop.f32.mrf.mxu0
  %v1745 = vadd.f32 %v261, %v1744
  %v1746 = vpop.f32.mrf.mxu0
  %1747 = vmatprep.mubr.bf16.mxu0 %v550
  %1748 = vmatmul.mubr.bf16.gmra.mxu0 %v549
  %v1749 = vpop.f32.mrf.mxu0
  %v1750 = vadd.f32 %v261, %v1749
  %v1751 = vpop.f32.mrf.mxu0
  %v1752 = vpop.f32.mrf.mxu0
  %v1753 = vadd.f32 %v261, %v1752
  %v1754 = vpop.f32.mrf.mxu0
  %1755 = vmatprep.mubr.bf16.mxu0 %v554
  %1756 = vmatmul.mubr.bf16.gmra.mxu0 %v553
  %v1757 = vpop.f32.mrf.mxu0
  %v1758 = vadd.f32 %v261, %v1757
  %v1759 = vpop.f32.mrf.mxu0
  %v1760 = vpop.f32.mrf.mxu0
  %v1761 = vadd.f32 %v261, %v1760
  %v1762 = vpop.f32.mrf.mxu0
  %1763 = vmatprep.mubr.bf16.mxu0 %v558
  %1764 = vmatmul.mubr.bf16.gmra.mxu0 %v557
  %v1765 = vpop.f32.mrf.mxu0
  %v1766 = vadd.f32 %v261, %v1765
  %v1767 = vpop.f32.mrf.mxu0
  %v1768 = vpop.f32.mrf.mxu0
  %v1769 = vadd.f32 %v261, %v1768
  %v1770 = vpop.f32.mrf.mxu0
  %1771 = vmatprep.mubr.bf16.mxu0 %v562
  %1772 = vmatmul.mubr.bf16.gmra.mxu0 %v561
  %v1773 = vpop.f32.mrf.mxu0
  %v1774 = vadd.f32 %v261, %v1773
  %v1775 = vpop.f32.mrf.mxu0
  %v1776 = vpop.f32.mrf.mxu0
  %v1777 = vadd.f32 %v261, %v1776
  %v1778 = vpop.f32.mrf.mxu0
  %1779 = vmatprep.mubr.bf16.mxu0 %v566
  %1780 = vmatmul.mubr.bf16.gmra.mxu0 %v565
  %v1781 = vpop.f32.mrf.mxu0
  %v1782 = vadd.f32 %v261, %v1781
  %v1783 = vpop.f32.mrf.mxu0
  %v1784 = vpop.f32.mrf.mxu0
  %v1785 = vadd.f32 %v261, %v1784
  %v1786 = vpop.f32.mrf.mxu0
  %1787 = vdwg.mxu0
  %1788 = vmatprep.subr.bf16.mxu0 0
  %1789 = vmatpush1.bf16.msra.mxu0 %v1036
  %1790 = vmatprep.subr.bf16.mxu0 0
  %1791 = vmatpush1.bf16.msra.mxu0 %v1033
  %1792 = vmatprep.subr.bf16.mxu0 0
  %1793 = vmatpush1.bf16.msra.mxu0 %v1030
  %1794 = vmatprep.subr.bf16.mxu0 0
  %1795 = vmatpush1.bf16.msra.mxu0 %v1027
  %1796 = vmatprep.subr.bf16.mxu0 0
  %1797 = vmatpush1.bf16.msra.mxu0 %v1024
  %1798 = vmatprep.subr.bf16.mxu0 0
  %1799 = vmatpush1.bf16.msra.mxu0 %v1021
  %1800 = vmatprep.subr.bf16.mxu0 0
  %1801 = vmatpush1.bf16.msra.mxu0 %v1018
  %1802 = vmatprep.subr.bf16.mxu0 0
  %1803 = vmatpush1.bf16.msra.mxu0 %v1015
  %1804 = vmatprep.subr.bf16.mxu0 0
  %1805 = vmatpush2.bf16.msra.mxu0 %v1060
  %1806 = vmatprep.subr.bf16.mxu0 0
  %1807 = vmatpush2.bf16.msra.mxu0 %v1057
  %1808 = vmatprep.subr.bf16.mxu0 0
  %1809 = vmatpush2.bf16.msra.mxu0 %v1054
  %1810 = vmatprep.subr.bf16.mxu0 0
  %1811 = vmatpush2.bf16.msra.mxu0 %v1051
  %1812 = vmatprep.subr.bf16.mxu0 0
  %1813 = vmatpush2.bf16.msra.mxu0 %v1048
  %1814 = vmatprep.subr.bf16.mxu0 0
  %1815 = vmatpush2.bf16.msra.mxu0 %v1045
  %1816 = vmatprep.subr.bf16.mxu0 0
  %1817 = vmatpush2.bf16.msra.mxu0 %v1042
  %1818 = vmatprep.subr.bf16.mxu0 0
  %1819 = vmatpush2.bf16.msra.mxu0 %v1039
  %1820 = vmatprep.mubr.bf16.mxu0 %v496
  %1821 = vmatmul.mubr.bf16.gmra.mxu0 %v495
  %v1822 = vpop.f32.mrf.mxu0
  %v1823 = vadd.f32 %v1638, %v1822
  %v1824 = vpop.f32.mrf.mxu0
  %v1825 = vpop.f32.mrf.mxu0
  %v1826 = vadd.f32 %v1641, %v1825
  %v1827 = vpop.f32.mrf.mxu0
  %1828 = vmatprep.mubr.bf16.mxu0 %v500
  %1829 = vmatmul.mubr.bf16.gmra.mxu0 %v499
  %v1830 = vpop.f32.mrf.mxu0
  %v1831 = vadd.f32 %v1646, %v1830
  %v1832 = vpop.f32.mrf.mxu0
  %v1833 = vpop.f32.mrf.mxu0
  %v1834 = vadd.f32 %v1649, %v1833
  %v1835 = vpop.f32.mrf.mxu0
  %1836 = vmatprep.mubr.bf16.mxu0 %v504
  %1837 = vmatmul.mubr.bf16.gmra.mxu0 %v503
  %v1838 = vpop.f32.mrf.mxu0
  %v1839 = vadd.f32 %v1654, %v1838
  %v1840 = vpop.f32.mrf.mxu0
  %v1841 = vpop.f32.mrf.mxu0
  %v1842 = vadd.f32 %v1657, %v1841
  %v1843 = vpop.f32.mrf.mxu0
  %1844 = vmatprep.mubr.bf16.mxu0 %v508
  %1845 = vmatmul.mubr.bf16.gmra.mxu0 %v507
  %v1846 = vpop.f32.mrf.mxu0
  %v1847 = vadd.f32 %v1662, %v1846
  %v1848 = vpop.f32.mrf.mxu0
  %v1849 = vpop.f32.mrf.mxu0
  %v1850 = vadd.f32 %v1665, %v1849
  %v1851 = vpop.f32.mrf.mxu0
  %1852 = vmatprep.mubr.bf16.mxu0 %v512
  %1853 = vmatmul.mubr.bf16.gmra.mxu0 %v511
  %v1854 = vpop.f32.mrf.mxu0
  %v1855 = vadd.f32 %v1670, %v1854
  %v1856 = vpop.f32.mrf.mxu0
  %v1857 = vpop.f32.mrf.mxu0
  %v1858 = vadd.f32 %v1673, %v1857
  %v1859 = vpop.f32.mrf.mxu0
  %1860 = vmatprep.mubr.bf16.mxu0 %v516
  %1861 = vmatmul.mubr.bf16.gmra.mxu0 %v515
  %v1862 = vpop.f32.mrf.mxu0
  %v1863 = vadd.f32 %v1678, %v1862
  %v1864 = vpop.f32.mrf.mxu0
  %v1865 = vpop.f32.mrf.mxu0
  %v1866 = vadd.f32 %v1681, %v1865
  %v1867 = vpop.f32.mrf.mxu0
  %1868 = vmatprep.mubr.bf16.mxu0 %v520
  %1869 = vmatmul.mubr.bf16.gmra.mxu0 %v519
  %v1870 = vpop.f32.mrf.mxu0
  %v1871 = vadd.f32 %v1686, %v1870
  %v1872 = vpop.f32.mrf.mxu0
  %v1873 = vpop.f32.mrf.mxu0
  %v1874 = vadd.f32 %v1689, %v1873
  %v1875 = vpop.f32.mrf.mxu0
  %1876 = vmatprep.mubr.bf16.mxu0 %v524
  %1877 = vmatmul.mubr.bf16.gmra.mxu0 %v523
  %v1878 = vpop.f32.mrf.mxu0
  %v1879 = vadd.f32 %v1694, %v1878
  %v1880 = vpop.f32.mrf.mxu0
  %v1881 = vpop.f32.mrf.mxu0
  %v1882 = vadd.f32 %v1697, %v1881
  %v1883 = vpop.f32.mrf.mxu0
  %1884 = vmatprep.mubr.bf16.mxu0 %v528
  %1885 = vmatmul.mubr.bf16.gmra.mxu0 %v527
  %v1886 = vpop.f32.mrf.mxu0
  %v1887 = vadd.f32 %v1702, %v1886
  %v1888 = vpop.f32.mrf.mxu0
  %v1889 = vpop.f32.mrf.mxu0
  %v1890 = vadd.f32 %v1705, %v1889
  %v1891 = vpop.f32.mrf.mxu0
  %1892 = vmatprep.mubr.bf16.mxu0 %v532
  %1893 = vmatmul.mubr.bf16.gmra.mxu0 %v531
  %v1894 = vpop.f32.mrf.mxu0
  %v1895 = vadd.f32 %v1710, %v1894
  %v1896 = vpop.f32.mrf.mxu0
  %v1897 = vpop.f32.mrf.mxu0
  %v1898 = vadd.f32 %v1713, %v1897
  %v1899 = vpop.f32.mrf.mxu0
  %1900 = vmatprep.mubr.bf16.mxu0 %v536
  %1901 = vmatmul.mubr.bf16.gmra.mxu0 %v535
  %v1902 = vpop.f32.mrf.mxu0
  %v1903 = vadd.f32 %v1718, %v1902
  %v1904 = vpop.f32.mrf.mxu0
  %v1905 = vpop.f32.mrf.mxu0
  %v1906 = vadd.f32 %v1721, %v1905
  %v1907 = vpop.f32.mrf.mxu0
  %1908 = vmatprep.mubr.bf16.mxu0 %v540
  %1909 = vmatmul.mubr.bf16.gmra.mxu0 %v539
  %v1910 = vpop.f32.mrf.mxu0
  %v1911 = vadd.f32 %v1726, %v1910
  %v1912 = vpop.f32.mrf.mxu0
  %v1913 = vpop.f32.mrf.mxu0
  %v1914 = vadd.f32 %v1729, %v1913
  %v1915 = vpop.f32.mrf.mxu0
  %1916 = vmatprep.mubr.bf16.mxu0 %v544
  %1917 = vmatmul.mubr.bf16.gmra.mxu0 %v543
  %v1918 = vpop.f32.mrf.mxu0
  %v1919 = vadd.f32 %v1734, %v1918
  %v1920 = vpop.f32.mrf.mxu0
  %v1921 = vpop.f32.mrf.mxu0
  %v1922 = vadd.f32 %v1737, %v1921
  %v1923 = vpop.f32.mrf.mxu0
  %1924 = vmatprep.mubr.bf16.mxu0 %v548
  %1925 = vmatmul.mubr.bf16.gmra.mxu0 %v547
  %v1926 = vpop.f32.mrf.mxu0
  %v1927 = vadd.f32 %v1742, %v1926
  %v1928 = vpop.f32.mrf.mxu0
  %v1929 = vpop.f32.mrf.mxu0
  %v1930 = vadd.f32 %v1745, %v1929
  %v1931 = vpop.f32.mrf.mxu0
  %1932 = vmatprep.mubr.bf16.mxu0 %v552
  %1933 = vmatmul.mubr.bf16.gmra.mxu0 %v551
  %v1934 = vpop.f32.mrf.mxu0
  %v1935 = vadd.f32 %v1750, %v1934
  %v1936 = vpop.f32.mrf.mxu0
  %v1937 = vpop.f32.mrf.mxu0
  %v1938 = vadd.f32 %v1753, %v1937
  %v1939 = vpop.f32.mrf.mxu0
  %1940 = vmatprep.mubr.bf16.mxu0 %v556
  %1941 = vmatmul.mubr.bf16.gmra.mxu0 %v555
  %v1942 = vpop.f32.mrf.mxu0
  %v1943 = vadd.f32 %v1758, %v1942
  %v1944 = vpop.f32.mrf.mxu0
  %v1945 = vpop.f32.mrf.mxu0
  %v1946 = vadd.f32 %v1761, %v1945
  %v1947 = vpop.f32.mrf.mxu0
  %1948 = vmatprep.mubr.bf16.mxu0 %v560
  %1949 = vmatmul.mubr.bf16.gmra.mxu0 %v559
  %v1950 = vpop.f32.mrf.mxu0
  %v1951 = vadd.f32 %v1766, %v1950
  %v1952 = vpop.f32.mrf.mxu0
  %v1953 = vpop.f32.mrf.mxu0
  %v1954 = vadd.f32 %v1769, %v1953
  %v1955 = vpop.f32.mrf.mxu0
  %1956 = vmatprep.mubr.bf16.mxu0 %v564
  %1957 = vmatmul.mubr.bf16.gmra.mxu0 %v563
  %v1958 = vpop.f32.mrf.mxu0
  %v1959 = vadd.f32 %v1774, %v1958
  %v1960 = vpop.f32.mrf.mxu0
  %v1961 = vpop.f32.mrf.mxu0
  %v1962 = vadd.f32 %v1777, %v1961
  %v1963 = vpop.f32.mrf.mxu0
  %1964 = vmatprep.mubr.bf16.mxu0 %v568
  %1965 = vmatmul.mubr.bf16.gmra.mxu0 %v567
  %v1966 = vpop.f32.mrf.mxu0
  %v1967 = vadd.f32 %v1782, %v1966
  %v1968 = vpop.f32.mrf.mxu0
  %v1969 = vpop.f32.mrf.mxu0
  %v1970 = vadd.f32 %v1785, %v1969
  %v1971 = vpop.f32.mrf.mxu0
  %1972 = vdwg.mxu0
  %v1973 = vmax.f32 %v1415, 0.0
  %v1974 = vmax.f32 %v1417, 0.0
  %v1975 = vmax.f32 %v1823, 0.0
  %v1976 = vmax.f32 %v1419, 0.0
  %v1977 = vmax.f32 %v1421, 0.0
  %v1978 = vmax.f32 %v1826, 0.0
  %v1979 = vmax.f32 %v1425, 0.0
  %v1980 = vmax.f32 %v1427, 0.0
  %v1981 = vmax.f32 %v1831, 0.0
  %v1982 = vmax.f32 %v1429, 0.0
  %v1983 = vmax.f32 %v1431, 0.0
  %v1984 = vmax.f32 %v1834, 0.0
  %v1985 = vmax.f32 %v1435, 0.0
  %v1986 = vmax.f32 %v1437, 0.0
  %v1987 = vmax.f32 %v1839, 0.0
  %v1988 = vmax.f32 %v1439, 0.0
  %v1989 = vmax.f32 %v1441, 0.0
  %v1990 = vmax.f32 %v1842, 0.0
  %v1991 = vmax.f32 %v1445, 0.0
  %v1992 = vmax.f32 %v1447, 0.0
  %v1993 = vmax.f32 %v1847, 0.0
  %v1994 = vmax.f32 %v1449, 0.0
  %v1995 = vmax.f32 %v1451, 0.0
  %v1996 = vmax.f32 %v1850, 0.0
  %v1997 = vmax.f32 %v1455, 0.0
  %v1998 = vmax.f32 %v1457, 0.0
  %v1999 = vmax.f32 %v1855, 0.0
  %v2000 = vmax.f32 %v1459, 0.0
  %v2001 = vmax.f32 %v1461, 0.0
  %v2002 = vmax.f32 %v1858, 0.0
  %v2003 = vmax.f32 %v1465, 0.0
  %v2004 = vmax.f32 %v1467, 0.0
  %v2005 = vmax.f32 %v1863, 0.0
  %v2006 = vmax.f32 %v1469, 0.0
  %v2007 = vmax.f32 %v1471, 0.0
  %v2008 = vmax.f32 %v1866, 0.0
  %v2009 = vmax.f32 %v1475, 0.0
  %v2010 = vmax.f32 %v1477, 0.0
  %v2011 = vmax.f32 %v1871, 0.0
  %v2012 = vmax.f32 %v1479, 0.0
  %v2013 = vmax.f32 %v1481, 0.0
  %v2014 = vmax.f32 %v1874, 0.0
  %v2015 = vmax.f32 %v1485, 0.0
  %v2016 = vmax.f32 %v1487, 0.0
  %v2017 = vmax.f32 %v1879, 0.0
  %v2018 = vmax.f32 %v1489, 0.0
  %v2019 = vmax.f32 %v1491, 0.0
  %v2020 = vmax.f32 %v1882, 0.0
  %v2021 = vmax.f32 %v1495, 0.0
  %v2022 = vmax.f32 %v1497, 0.0
  %v2023 = vmax.f32 %v1887, 0.0
  %v2024 = vmax.f32 %v1499, 0.0
  %v2025 = vmax.f32 %v1501, 0.0
  %v2026 = vmax.f32 %v1890, 0.0
  %v2027 = vmax.f32 %v1505, 0.0
  %v2028 = vmax.f32 %v1507, 0.0
  %v2029 = vmax.f32 %v1895, 0.0
  %v2030 = vmax.f32 %v1509, 0.0
  %v2031 = vmax.f32 %v1511, 0.0
  %v2032 = vmax.f32 %v1898, 0.0
  %v2033 = vmax.f32 %v1515, 0.0
  %v2034 = vmax.f32 %v1517, 0.0
  %v2035 = vmax.f32 %v1903, 0.0
  %v2036 = vmax.f32 %v1519, 0.0
  %v2037 = vmax.f32 %v1521, 0.0
  %v2038 = vmax.f32 %v1906, 0.0
  %v2039 = vmax.f32 %v1525, 0.0
  %v2040 = vmax.f32 %v1527, 0.0
  %v2041 = vmax.f32 %v1911, 0.0
  %v2042 = vmax.f32 %v1529, 0.0
  %v2043 = vmax.f32 %v1531, 0.0
  %v2044 = vmax.f32 %v1914, 0.0
  %v2045 = vmax.f32 %v1535, 0.0
  %v2046 = vmax.f32 %v1537, 0.0
  %v2047 = vmax.f32 %v1919, 0.0
  %v2048 = vmax.f32 %v1539, 0.0
  %v2049 = vmax.f32 %v1541, 0.0
  %v2050 = vmax.f32 %v1922, 0.0
  %v2051 = vmax.f32 %v1545, 0.0
  %v2052 = vmax.f32 %v1547, 0.0
  %v2053 = vmax.f32 %v1927, 0.0
  %v2054 = vmax.f32 %v1549, 0.0
  %v2055 = vmax.f32 %v1551, 0.0
  %v2056 = vmax.f32 %v1930, 0.0
  %v2057 = vmax.f32 %v1555, 0.0
  %v2058 = vmax.f32 %v1557, 0.0
  %v2059 = vmax.f32 %v1935, 0.0
  %v2060 = vmax.f32 %v1559, 0.0
  %v2061 = vmax.f32 %v1561, 0.0
  %v2062 = vmax.f32 %v1938, 0.0
  %v2063 = vmax.f32 %v1565, 0.0
  %v2064 = vmax.f32 %v1567, 0.0
  %v2065 = vmax.f32 %v1943, 0.0
  %v2066 = vmax.f32 %v1569, 0.0
  %v2067 = vmax.f32 %v1571, 0.0
  %v2068 = vmax.f32 %v1946, 0.0
  %v2069 = vmax.f32 %v1575, 0.0
  %v2070 = vmax.f32 %v1577, 0.0
  %v2071 = vmax.f32 %v1951, 0.0
  %v2072 = vmax.f32 %v1579, 0.0
  %v2073 = vmax.f32 %v1581, 0.0
  %v2074 = vmax.f32 %v1954, 0.0
  %v2075 = vmax.f32 %v1585, 0.0
  %v2076 = vmax.f32 %v1587, 0.0
  %v2077 = vmax.f32 %v1959, 0.0
  %v2078 = vmax.f32 %v1589, 0.0
  %v2079 = vmax.f32 %v1591, 0.0
  %v2080 = vmax.f32 %v1962, 0.0
  %v2081 = vmax.f32 %v1595, 0.0
  %v2082 = vmax.f32 %v1597, 0.0
  %v2083 = vmax.f32 %v1967, 0.0
  %v2084 = vmax.f32 %v1599, 0.0
  %v2085 = vmax.f32 %v1601, 0.0
  %v2086 = vmax.f32 %v1970, 0.0
  %v2087 = vpack.c.bf16 %v1976, %v1973
  %v2088 = vpack.c.bf16 %v1977, %v1974
  %v2089 = vpack.c.bf16 %v1978, %v1975
  %v2090 = vpack.c.bf16 %v1982, %v1979
  %v2091 = vpack.c.bf16 %v1983, %v1980
  %v2092 = vpack.c.bf16 %v1984, %v1981
  %v2093 = vpack.c.bf16 %v1988, %v1985
  %v2094 = vpack.c.bf16 %v1989, %v1986
  %v2095 = vpack.c.bf16 %v1990, %v1987
  %v2096 = vpack.c.bf16 %v1994, %v1991
  %v2097 = vpack.c.bf16 %v1995, %v1992
  %v2098 = vpack.c.bf16 %v1996, %v1993
  %v2099 = vpack.c.bf16 %v2000, %v1997
  %v2100 = vpack.c.bf16 %v2001, %v1998
  %v2101 = vpack.c.bf16 %v2002, %v1999
  %v2102 = vpack.c.bf16 %v2006, %v2003
  %v2103 = vpack.c.bf16 %v2007, %v2004
  %v2104 = vpack.c.bf16 %v2008, %v2005
  %v2105 = vpack.c.bf16 %v2012, %v2009
  %v2106 = vpack.c.bf16 %v2013, %v2010
  %v2107 = vpack.c.bf16 %v2014, %v2011
  %v2108 = vpack.c.bf16 %v2018, %v2015
  %v2109 = vpack.c.bf16 %v2019, %v2016
  %v2110 = vpack.c.bf16 %v2020, %v2017
  %v2111 = vpack.c.bf16 %v2024, %v2021
  %v2112 = vpack.c.bf16 %v2025, %v2022
  %v2113 = vpack.c.bf16 %v2026, %v2023
  %v2114 = vpack.c.bf16 %v2030, %v2027
  %v2115 = vpack.c.bf16 %v2031, %v2028
  %v2116 = vpack.c.bf16 %v2032, %v2029
  %v2117 = vpack.c.bf16 %v2036, %v2033
  %v2118 = vpack.c.bf16 %v2037, %v2034
  %v2119 = vpack.c.bf16 %v2038, %v2035
  %v2120 = vpack.c.bf16 %v2042, %v2039
  %v2121 = vpack.c.bf16 %v2043, %v2040
  %v2122 = vpack.c.bf16 %v2044, %v2041
  %v2123 = vpack.c.bf16 %v2048, %v2045
  %v2124 = vpack.c.bf16 %v2049, %v2046
  %v2125 = vpack.c.bf16 %v2050, %v2047
  %v2126 = vpack.c.bf16 %v2054, %v2051
  %v2127 = vpack.c.bf16 %v2055, %v2052
  %v2128 = vpack.c.bf16 %v2056, %v2053
  %v2129 = vpack.c.bf16 %v2060, %v2057
  %v2130 = vpack.c.bf16 %v2061, %v2058
  %v2131 = vpack.c.bf16 %v2062, %v2059
  %v2132 = vpack.c.bf16 %v2066, %v2063
  %v2133 = vpack.c.bf16 %v2067, %v2064
  %v2134 = vpack.c.bf16 %v2068, %v2065
  %v2135 = vpack.c.bf16 %v2072, %v2069
  %v2136 = vpack.c.bf16 %v2073, %v2070
  %v2137 = vpack.c.bf16 %v2074, %v2071
  %v2138 = vpack.c.bf16 %v2078, %v2075
  %v2139 = vpack.c.bf16 %v2079, %v2076
  %v2140 = vpack.c.bf16 %v2080, %v2077
  %v2141 = vpack.c.bf16 %v2084, %v2081
  %v2142 = vpack.c.bf16 %v2085, %v2082
  %v2143 = vpack.c.bf16 %v2086, %v2083
  %v2144 = vld [vmem:[%s3] sm:$0xf]
  %v2145 = vld [vmem:[%s3 + $0x4] sm:$0xf]
  %v2146 = vld [vmem:[%s3 + $0x8] sm:$0xf]
  %v2147 = vld [vmem:[%s3 + $0xc] sm:$0xf]
  %v2148 = vld [vmem:[%s3 + $0x10] sm:$0xf]
  %v2149 = vld [vmem:[%s3 + $0x14] sm:$0xf]
  %v2150 = vld [vmem:[%s3 + $0x18] sm:$0xf]
  %v2151 = vld [vmem:[%s3 + $0x1c] sm:$0xf]
  %v2152 = vld [vmem:[%s3 + $0x20] sm:$0xf]
  %v2153 = vld [vmem:[%s3 + $0x24] sm:$0xf]
  %v2154 = vld [vmem:[%s3 + $0x28] sm:$0xf]
  %v2155 = vld [vmem:[%s3 + $0x2c] sm:$0xf]
  %v2156 = vld [vmem:[%s3 + $0x30] sm:$0xf]
  %v2157 = vld [vmem:[%s3 + $0x34] sm:$0xf]
  %v2158 = vld [vmem:[%s3 + $0x38] sm:$0xf]
  %v2159 = vld [vmem:[%s3 + $0x3c] sm:$0xf]
  %v2160 = vld [vmem:[%s4] sm:$0x1]
  %v2162 = vlaneseq
  %v2163 = vshrl.u32 %v2162, 7
  %v2164 = vsub.s32 0, %v2163
  %v2165 = vrot.slane %v2160, %v2164
  %v2183 = vunpack.c.l.b16 %v2144
  %v2184 = vunpack.c.l.b16 %v2145
  %v2185 = vunpack.c.l.b16 %v2146
  %v2186 = vunpack.c.l.b16 %v2147
  %v2187 = vunpack.c.l.b16 %v2148
  %v2188 = vunpack.c.l.b16 %v2149
  %v2189 = vunpack.c.l.b16 %v2150
  %v2190 = vunpack.c.l.b16 %v2151
  %v2191 = vunpack.c.l.b16 %v2152
  %v2192 = vunpack.c.l.b16 %v2153
  %v2193 = vunpack.c.l.b16 %v2154
  %v2194 = vunpack.c.l.b16 %v2155
  %v2195 = vunpack.c.l.b16 %v2156
  %v2196 = vunpack.c.l.b16 %v2157
  %v2197 = vunpack.c.l.b16 %v2158
  %v2198 = vunpack.c.l.b16 %v2159
  %v2199 = vpack.c.b16 %v2184, %v2183
  %v2200 = vpack.c.b16 %v2186, %v2185
  %v2201 = vpack.c.b16 %v2188, %v2187
  %v2202 = vpack.c.b16 %v2190, %v2189
  %v2203 = vpack.c.b16 %v2192, %v2191
  %v2204 = vpack.c.b16 %v2194, %v2193
  %v2205 = vpack.c.b16 %v2196, %v2195
  %v2206 = vpack.c.b16 %v2198, %v2197
  %2215 = vmatprep.subr.bf16.mxu0 0
  %2216 = vmatpush1.bf16.msra.mxu0 %v2206
  %2217 = vmatprep.subr.bf16.mxu0 0
  %2218 = vmatpush1.bf16.msra.mxu0 %v2205
  %2219 = vmatprep.subr.bf16.mxu0 0
  %2220 = vmatpush1.bf16.msra.mxu0 %v2204
  %2221 = vmatprep.subr.bf16.mxu0 0
  %2222 = vmatpush1.bf16.msra.mxu0 %v2203
  %2223 = vmatprep.subr.bf16.mxu0 0
  %2224 = vmatpush1.bf16.msra.mxu0 %v2202
  %2225 = vmatprep.subr.bf16.mxu0 0
  %2226 = vmatpush1.bf16.msra.mxu0 %v2201
  %2227 = vmatprep.subr.bf16.mxu0 0
  %2228 = vmatpush1.bf16.msra.mxu0 %v2200
  %2229 = vmatprep.subr.bf16.mxu0 0
  %2230 = vmatpush1.bf16.msra.mxu0 %v2199
  %2231 = vmatprep.subr.bf16.mxu0 0
  %2232 = vmatpush2.bf16.msra.mxu0 0
  %2233 = vmatprep.subr.bf16.mxu0 0
  %2234 = vmatpush2.bf16.msra.mxu0 0
  %2235 = vmatprep.subr.bf16.mxu0 0
  %2236 = vmatpush2.bf16.msra.mxu0 0
  %2237 = vmatprep.subr.bf16.mxu0 0
  %2238 = vmatpush2.bf16.msra.mxu0 0
  %2239 = vmatprep.subr.bf16.mxu0 0
  %2240 = vmatpush2.bf16.msra.mxu0 0
  %2241 = vmatprep.subr.bf16.mxu0 0
  %2242 = vmatpush2.bf16.msra.mxu0 0
  %2243 = vmatprep.subr.bf16.mxu0 0
  %2244 = vmatpush2.bf16.msra.mxu0 0
  %2245 = vmatprep.subr.bf16.mxu0 0
  %2246 = vmatpush2.bf16.msra.mxu0 0
  %2247 = vmatprep.mubr.bf16.mxu0 0
  %2248 = vmatmul.mubr.bf16.gmra.mxu0 %v2087
  %v2249 = vpop.f32.mrf.mxu0
  %v2250 = vadd.f32 %v2165, %v2249
  %v2251 = vpop.f32.mrf.mxu0
  %v2252 = vpop.f32.mrf.mxu0
  %v2253 = vadd.f32 %v2165, %v2252
  %v2254 = vpop.f32.mrf.mxu0
  %2255 = vmatprep.mubr.bf16.mxu0 0
  %2256 = vmatmul.mubr.bf16.gmra.mxu0 %v2090
  %v2257 = vpop.f32.mrf.mxu0
  %v2258 = vadd.f32 %v2165, %v2257
  %v2259 = vpop.f32.mrf.mxu0
  %v2260 = vpop.f32.mrf.mxu0
  %v2261 = vadd.f32 %v2165, %v2260
  %v2262 = vpop.f32.mrf.mxu0
  %2263 = vmatprep.mubr.bf16.mxu0 0
  %2264 = vmatmul.mubr.bf16.gmra.mxu0 %v2093
  %v2265 = vpop.f32.mrf.mxu0
  %v2266 = vadd.f32 %v2165, %v2265
  %v2267 = vpop.f32.mrf.mxu0
  %v2268 = vpop.f32.mrf.mxu0
  %v2269 = vadd.f32 %v2165, %v2268
  %v2270 = vpop.f32.mrf.mxu0
  %2271 = vmatprep.mubr.bf16.mxu0 0
  %2272 = vmatmul.mubr.bf16.gmra.mxu0 %v2096
  %v2273 = vpop.f32.mrf.mxu0
  %v2274 = vadd.f32 %v2165, %v2273
  %v2275 = vpop.f32.mrf.mxu0
  %v2276 = vpop.f32.mrf.mxu0
  %v2277 = vadd.f32 %v2165, %v2276
  %v2278 = vpop.f32.mrf.mxu0
  %2279 = vmatprep.mubr.bf16.mxu0 0
  %2280 = vmatmul.mubr.bf16.gmra.mxu0 %v2099
  %v2281 = vpop.f32.mrf.mxu0
  %v2282 = vadd.f32 %v2165, %v2281
  %v2283 = vpop.f32.mrf.mxu0
  %v2284 = vpop.f32.mrf.mxu0
  %v2285 = vadd.f32 %v2165, %v2284
  %v2286 = vpop.f32.mrf.mxu0
  %2287 = vmatprep.mubr.bf16.mxu0 0
  %2288 = vmatmul.mubr.bf16.gmra.mxu0 %v2102
  %v2289 = vpop.f32.mrf.mxu0
  %v2290 = vadd.f32 %v2165, %v2289
  %v2291 = vpop.f32.mrf.mxu0
  %v2292 = vpop.f32.mrf.mxu0
  %v2293 = vadd.f32 %v2165, %v2292
  %v2294 = vpop.f32.mrf.mxu0
  %2295 = vmatprep.mubr.bf16.mxu0 0
  %2296 = vmatmul.mubr.bf16.gmra.mxu0 %v2105
  %v2297 = vpop.f32.mrf.mxu0
  %v2298 = vadd.f32 %v2165, %v2297
  %v2299 = vpop.f32.mrf.mxu0
  %v2300 = vpop.f32.mrf.mxu0
  %v2301 = vadd.f32 %v2165, %v2300
  %v2302 = vpop.f32.mrf.mxu0
  %2303 = vmatprep.mubr.bf16.mxu0 0
  %2304 = vmatmul.mubr.bf16.gmra.mxu0 %v2108
  %v2305 = vpop.f32.mrf.mxu0
  %v2306 = vadd.f32 %v2165, %v2305
  %v2307 = vpop.f32.mrf.mxu0
  %v2308 = vpop.f32.mrf.mxu0
  %v2309 = vadd.f32 %v2165, %v2308
  %v2310 = vpop.f32.mrf.mxu0
  %2311 = vmatprep.mubr.bf16.mxu0 0
  %2312 = vmatmul.mubr.bf16.gmra.mxu0 %v2111
  %v2313 = vpop.f32.mrf.mxu0
  %v2314 = vadd.f32 %v2165, %v2313
  %v2315 = vpop.f32.mrf.mxu0
  %v2316 = vpop.f32.mrf.mxu0
  %v2317 = vadd.f32 %v2165, %v2316
  %v2318 = vpop.f32.mrf.mxu0
  %2319 = vmatprep.mubr.bf16.mxu0 0
  %2320 = vmatmul.mubr.bf16.gmra.mxu0 %v2114
  %v2321 = vpop.f32.mrf.mxu0
  %v2322 = vadd.f32 %v2165, %v2321
  %v2323 = vpop.f32.mrf.mxu0
  %v2324 = vpop.f32.mrf.mxu0
  %v2325 = vadd.f32 %v2165, %v2324
  %v2326 = vpop.f32.mrf.mxu0
  %2327 = vmatprep.mubr.bf16.mxu0 0
  %2328 = vmatmul.mubr.bf16.gmra.mxu0 %v2117
  %v2329 = vpop.f32.mrf.mxu0
  %v2330 = vadd.f32 %v2165, %v2329
  %v2331 = vpop.f32.mrf.mxu0
  %v2332 = vpop.f32.mrf.mxu0
  %v2333 = vadd.f32 %v2165, %v2332
  %v2334 = vpop.f32.mrf.mxu0
  %2335 = vmatprep.mubr.bf16.mxu0 0
  %2336 = vmatmul.mubr.bf16.gmra.mxu0 %v2120
  %v2337 = vpop.f32.mrf.mxu0
  %v2338 = vadd.f32 %v2165, %v2337
  %v2339 = vpop.f32.mrf.mxu0
  %v2340 = vpop.f32.mrf.mxu0
  %v2341 = vadd.f32 %v2165, %v2340
  %v2342 = vpop.f32.mrf.mxu0
  %2343 = vmatprep.mubr.bf16.mxu0 0
  %2344 = vmatmul.mubr.bf16.gmra.mxu0 %v2123
  %v2345 = vpop.f32.mrf.mxu0
  %v2346 = vadd.f32 %v2165, %v2345
  %v2347 = vpop.f32.mrf.mxu0
  %v2348 = vpop.f32.mrf.mxu0
  %v2349 = vadd.f32 %v2165, %v2348
  %v2350 = vpop.f32.mrf.mxu0
  %2351 = vmatprep.mubr.bf16.mxu0 0
  %2352 = vmatmul.mubr.bf16.gmra.mxu0 %v2126
  %v2353 = vpop.f32.mrf.mxu0
  %v2354 = vadd.f32 %v2165, %v2353
  %v2355 = vpop.f32.mrf.mxu0
  %v2356 = vpop.f32.mrf.mxu0
  %v2357 = vadd.f32 %v2165, %v2356
  %v2358 = vpop.f32.mrf.mxu0
  %2359 = vmatprep.mubr.bf16.mxu0 0
  %2360 = vmatmul.mubr.bf16.gmra.mxu0 %v2129
  %v2361 = vpop.f32.mrf.mxu0
  %v2362 = vadd.f32 %v2165, %v2361
  %v2363 = vpop.f32.mrf.mxu0
  %v2364 = vpop.f32.mrf.mxu0
  %v2365 = vadd.f32 %v2165, %v2364
  %v2366 = vpop.f32.mrf.mxu0
  %2367 = vmatprep.mubr.bf16.mxu0 0
  %2368 = vmatmul.mubr.bf16.gmra.mxu0 %v2132
  %v2369 = vpop.f32.mrf.mxu0
  %v2370 = vadd.f32 %v2165, %v2369
  %v2371 = vpop.f32.mrf.mxu0
  %v2372 = vpop.f32.mrf.mxu0
  %v2373 = vadd.f32 %v2165, %v2372
  %v2374 = vpop.f32.mrf.mxu0
  %2375 = vmatprep.mubr.bf16.mxu0 0
  %2376 = vmatmul.mubr.bf16.gmra.mxu0 %v2135
  %v2377 = vpop.f32.mrf.mxu0
  %v2378 = vadd.f32 %v2165, %v2377
  %v2379 = vpop.f32.mrf.mxu0
  %v2380 = vpop.f32.mrf.mxu0
  %v2381 = vadd.f32 %v2165, %v2380
  %v2382 = vpop.f32.mrf.mxu0
  %2383 = vmatprep.mubr.bf16.mxu0 0
  %2384 = vmatmul.mubr.bf16.gmra.mxu0 %v2138
  %v2385 = vpop.f32.mrf.mxu0
  %v2386 = vadd.f32 %v2165, %v2385
  %v2387 = vpop.f32.mrf.mxu0
  %v2388 = vpop.f32.mrf.mxu0
  %v2389 = vadd.f32 %v2165, %v2388
  %v2390 = vpop.f32.mrf.mxu0
  %2391 = vmatprep.mubr.bf16.mxu0 0
  %2392 = vmatmul.mubr.bf16.gmra.mxu0 %v2141
  %v2393 = vpop.f32.mrf.mxu0
  %v2394 = vadd.f32 %v2165, %v2393
  %v2395 = vpop.f32.mrf.mxu0
  %v2396 = vpop.f32.mrf.mxu0
  %v2397 = vadd.f32 %v2165, %v2396
  %v2398 = vpop.f32.mrf.mxu0
  %2399 = vdwg.mxu0
  %v2400 = vpack.c.bf16 %v2253, %v2250
  %v2401 = vpack.c.bf16 %v2261, %v2258
  %v2402 = vpack.c.bf16 %v2269, %v2266
  %v2403 = vpack.c.bf16 %v2277, %v2274
  %v2404 = vpack.c.bf16 %v2285, %v2282
  %v2405 = vpack.c.bf16 %v2293, %v2290
  %v2406 = vpack.c.bf16 %v2301, %v2298
  %v2407 = vpack.c.bf16 %v2309, %v2306
  %v2408 = vpack.c.bf16 %v2317, %v2314
  %v2409 = vpack.c.bf16 %v2325, %v2322
  %v2410 = vpack.c.bf16 %v2333, %v2330
  %v2411 = vpack.c.bf16 %v2341, %v2338
  %v2412 = vpack.c.bf16 %v2349, %v2346
  %v2413 = vpack.c.bf16 %v2357, %v2354
  %v2414 = vpack.c.bf16 %v2365, %v2362
  %v2415 = vpack.c.bf16 %v2373, %v2370
  %v2416 = vpack.c.bf16 %v2381, %v2378
  %v2417 = vpack.c.bf16 %v2389, %v2386
  %v2418 = vpack.c.bf16 %v2397, %v2394
  %v2438 = vunpack.c.l.b16 %v2400
  %v2439 = vunpack.c.h.b16 %v2400
  %v2440 = vunpack.c.l.b16 %v2401
  %v2441 = vunpack.c.h.b16 %v2401
  %v2442 = vunpack.c.l.b16 %v2402
  %v2443 = vunpack.c.h.b16 %v2402
  %v2444 = vunpack.c.l.b16 %v2403
  %v2445 = vunpack.c.h.b16 %v2403
  %v2446 = vunpack.c.l.b16 %v2404
  %v2447 = vunpack.c.h.b16 %v2404
  %v2448 = vunpack.c.l.b16 %v2405
  %v2449 = vunpack.c.h.b16 %v2405
  %v2450 = vunpack.c.l.b16 %v2406
  %v2451 = vunpack.c.h.b16 %v2406
  %v2452 = vunpack.c.l.b16 %v2407
  %v2453 = vunpack.c.h.b16 %v2407
  %v2454 = vunpack.c.l.b16 %v2408
  %v2455 = vunpack.c.h.b16 %v2408
  %v2456 = vunpack.c.l.b16 %v2409
  %v2457 = vunpack.c.h.b16 %v2409
  %v2458 = vunpack.c.l.b16 %v2410
  %v2459 = vunpack.c.h.b16 %v2410
  %v2460 = vunpack.c.l.b16 %v2411
  %v2461 = vunpack.c.h.b16 %v2411
  %v2462 = vunpack.c.l.b16 %v2412
  %v2463 = vunpack.c.h.b16 %v2412
  %v2464 = vunpack.c.l.b16 %v2413
  %v2465 = vunpack.c.h.b16 %v2413
  %v2466 = vunpack.c.l.b16 %v2414
  %v2467 = vunpack.c.h.b16 %v2414
  %v2468 = vunpack.c.l.b16 %v2415
  %v2469 = vunpack.c.h.b16 %v2415
  %v2470 = vunpack.c.l.b16 %v2416
  %v2471 = vunpack.c.h.b16 %v2416
  %v2472 = vunpack.c.l.b16 %v2417
  %v2473 = vunpack.c.h.b16 %v2417
  %v2474 = vunpack.c.l.b16 %v2418
  %v2475 = vunpack.c.h.b16 %v2418
  %v2476 = vpack.c.b16 %v2438, %v2438
  %v2477 = vpack.c.b16 %v2439, %v2439
  %v2478 = vpack.c.b16 %v2440, %v2440
  %v2479 = vpack.c.b16 %v2441, %v2441
  %v2480 = vpack.c.b16 %v2442, %v2442
  %v2481 = vpack.c.b16 %v2443, %v2443
  %v2482 = vpack.c.b16 %v2444, %v2444
  %v2483 = vpack.c.b16 %v2445, %v2445
  %v2484 = vpack.c.b16 %v2446, %v2446
  %v2485 = vpack.c.b16 %v2447, %v2447
  %v2486 = vpack.c.b16 %v2448, %v2448
  %v2487 = vpack.c.b16 %v2449, %v2449
  %v2488 = vpack.c.b16 %v2450, %v2450
  %v2489 = vpack.c.b16 %v2451, %v2451
  %v2490 = vpack.c.b16 %v2452, %v2452
  %v2491 = vpack.c.b16 %v2453, %v2453
  %v2492 = vpack.c.b16 %v2454, %v2454
  %v2493 = vpack.c.b16 %v2455, %v2455
  %v2494 = vpack.c.b16 %v2456, %v2456
  %v2495 = vpack.c.b16 %v2457, %v2457
  %v2496 = vpack.c.b16 %v2458, %v2458
  %v2497 = vpack.c.b16 %v2459, %v2459
  %v2498 = vpack.c.b16 %v2460, %v2460
  %v2499 = vpack.c.b16 %v2461, %v2461
  %v2500 = vpack.c.b16 %v2462, %v2462
  %v2501 = vpack.c.b16 %v2463, %v2463
  %v2502 = vpack.c.b16 %v2464, %v2464
  %v2503 = vpack.c.b16 %v2465, %v2465
  %v2504 = vpack.c.b16 %v2466, %v2466
  %v2505 = vpack.c.b16 %v2467, %v2467
  %v2506 = vpack.c.b16 %v2468, %v2468
  %v2507 = vpack.c.b16 %v2469, %v2469
  %v2508 = vpack.c.b16 %v2470, %v2470
  %v2509 = vpack.c.b16 %v2471, %v2471
  %v2510 = vpack.c.b16 %v2472, %v2472
  %v2511 = vpack.c.b16 %v2473, %v2473
  %v2512 = vpack.c.b16 %v2474, %v2474
  %v2513 = vpack.c.b16 %v2475, %v2475
  %2552 = vst [vmem:[%s12] sm:$0xf] %v2476
  %2553 = vst [vmem:[%s12 + $0x4] sm:$0xf] %v2477
  %2554 = vst [vmem:[%s12 + $0x8] sm:$0xf] %v2478
  %2555 = vst [vmem:[%s12 + $0xc] sm:$0xf] %v2479
  %2556 = vst [vmem:[%s12 + $0x10] sm:$0xf] %v2480
  %2557 = vst [vmem:[%s12 + $0x14] sm:$0xf] %v2481
  %2558 = vst [vmem:[%s12 + $0x18] sm:$0xf] %v2482
  %2559 = vst [vmem:[%s12 + $0x1c] sm:$0xf] %v2483
  %2560 = vst [vmem:[%s12 + $0x20] sm:$0xf] %v2484
  %2561 = vst [vmem:[%s12 + $0x24] sm:$0xf] %v2485
  %2562 = vst [vmem:[%s12 + $0x28] sm:$0xf] %v2486
  %2563 = vst [vmem:[%s12 + $0x2c] sm:$0xf] %v2487
  %2564 = vst [vmem:[%s12 + $0x30] sm:$0xf] %v2488
  %2565 = vst [vmem:[%s12 + $0x34] sm:$0xf] %v2489
  %2566 = vst [vmem:[%s12 + $0x38] sm:$0xf] %v2490
  %2567 = vst [vmem:[%s12 + $0x3c] sm:$0xf] %v2491
  %2568 = vst [vmem:[%s12 + $0x40] sm:$0xf] %v2492
  %2569 = vst [vmem:[%s12 + $0x44] sm:$0xf] %v2493
  %2570 = vst [vmem:[%s12 + $0x48] sm:$0xf] %v2494
  %2571 = vst [vmem:[%s12 + $0x4c] sm:$0xf] %v2495
  %2572 = vst [vmem:[%s12 + $0x50] sm:$0xf] %v2496
  %2573 = vst [vmem:[%s12 + $0x54] sm:$0xf] %v2497
  %2574 = vst [vmem:[%s12 + $0x58] sm:$0xf] %v2498
  %2575 = vst [vmem:[%s12 + $0x5c] sm:$0xf] %v2499
  %2576 = vst [vmem:[%s12 + $0x60] sm:$0xf] %v2500
  %2577 = vst [vmem:[%s12 + $0x64] sm:$0xf] %v2501
  %2578 = vst [vmem:[%s12 + $0x68] sm:$0xf] %v2502
  %2579 = vst [vmem:[%s12 + $0x6c] sm:$0xf] %v2503
  %2580 = vst [vmem:[%s12 + $0x70] sm:$0xf] %v2504
  %2581 = vst [vmem:[%s12 + $0x74] sm:$0xf] %v2505
  %2582 = vst [vmem:[%s12 + $0x78] sm:$0xf] %v2506
  %2583 = vst [vmem:[%s12 + $0x7c] sm:$0xf] %v2507
  %2584 = vst [vmem:[%s12 + $0x80] sm:$0xf] %v2508
  %2585 = vst [vmem:[%s12 + $0x84] sm:$0xf] %v2509
  %2586 = vst [vmem:[%s12 + $0x88] sm:$0xf] %v2510
  %2587 = vst [vmem:[%s12 + $0x8c] sm:$0xf] %v2511
  %2588 = vst [vmem:[%s12 + $0x90] sm:$0xf] %v2512
  %2589 = vst [vmem:[%s12 + $0x94] sm:$0xf] %v2513
  %v2590 = vld [vmem:[%s5] sm:$0xff]
  %v2591 = vld [vmem:[%s5 + $0x8] sm:$0xff]
  %v2592 = vld [vmem:[%s5 + $0x10] sm:$0xff]
  %v2593 = vld [vmem:[%s5 + $0x18] sm:$0xff]
  %v2594 = vld [vmem:[%s5 + $0x20] sm:$0xff]
  %v2595 = vld [vmem:[%s5 + $0x28] sm:$0xff]
  %v2596 = vld [vmem:[%s5 + $0x30] sm:$0xff]
  %v2597 = vld [vmem:[%s5 + $0x38] sm:$0xff]
  %v2598 = vld [vmem:[%s5 + $0x40] sm:$0xff]
  %v2599 = vld [vmem:[%s5 + $0x48] sm:$0xff]
  %v2600 = vld [vmem:[%s5 + $0x50] sm:$0xff]
  %v2601 = vld [vmem:[%s5 + $0x58] sm:$0xff]
  %v2602 = vld [vmem:[%s5 + $0x60] sm:$0xff]
  %v2603 = vld [vmem:[%s5 + $0x68] sm:$0xff]
  %v2604 = vld [vmem:[%s5 + $0x70] sm:$0xff]
  %v2605 = vld [vmem:[%s5 + $0x78] sm:$0xff]
  %v2606 = vld [vmem:[%s6] sm:$0x3]
  %v2608 = vlaneseq
  %v2609 = vshrl.u32 %v2608, 7
  %v2610 = vsub.s32 0, %v2609
  %v2611 = vrot.slane %v2606, %v2610
  %v2612 = vlaneseq
  %v2613 = vshrl.u32 %v2612, 7
  %v2614 = vsub.s32 1, %v2613
  %v2615 = vrot.slane %v2606, %v2614
  %v2634 = vunpack.c.l.b16 %v2590
  %v2635 = vunpack.c.h.b16 %v2590
  %v2636 = vunpack.c.l.b16 %v2591
  %v2637 = vunpack.c.h.b16 %v2591
  %v2638 = vunpack.c.l.b16 %v2592
  %v2639 = vunpack.c.h.b16 %v2592
  %v2640 = vunpack.c.l.b16 %v2593
  %v2641 = vunpack.c.h.b16 %v2593
  %v2642 = vunpack.c.l.b16 %v2594
  %v2643 = vunpack.c.h.b16 %v2594
  %v2644 = vunpack.c.l.b16 %v2595
  %v2645 = vunpack.c.h.b16 %v2595
  %v2646 = vunpack.c.l.b16 %v2596
  %v2647 = vunpack.c.h.b16 %v2596
  %v2648 = vunpack.c.l.b16 %v2597
  %v2649 = vunpack.c.h.b16 %v2597
  %v2650 = vunpack.c.l.b16 %v2598
  %v2651 = vunpack.c.h.b16 %v2598
  %v2652 = vunpack.c.l.b16 %v2599
  %v2653 = vunpack.c.h.b16 %v2599
  %v2654 = vunpack.c.l.b16 %v2600
  %v2655 = vunpack.c.h.b16 %v2600
  %v2656 = vunpack.c.l.b16 %v2601
  %v2657 = vunpack.c.h.b16 %v2601
  %v2658 = vunpack.c.l.b16 %v2602
  %v2659 = vunpack.c.h.b16 %v2602
  %v2660 = vunpack.c.l.b16 %v2603
  %v2661 = vunpack.c.h.b16 %v2603
  %v2662 = vunpack.c.l.b16 %v2604
  %v2663 = vunpack.c.h.b16 %v2604
  %v2664 = vunpack.c.l.b16 %v2605
  %v2665 = vunpack.c.h.b16 %v2605
  %v2666 = vpack.c.b16 %v2636, %v2634
  %v2667 = vpack.c.b16 %v2637, %v2635
  %v2668 = vpack.c.b16 %v2640, %v2638
  %v2669 = vpack.c.b16 %v2641, %v2639
  %v2670 = vpack.c.b16 %v2644, %v2642
  %v2671 = vpack.c.b16 %v2645, %v2643
  %v2672 = vpack.c.b16 %v2648, %v2646
  %v2673 = vpack.c.b16 %v2649, %v2647
  %v2674 = vpack.c.b16 %v2652, %v2650
  %v2675 = vpack.c.b16 %v2653, %v2651
  %v2676 = vpack.c.b16 %v2656, %v2654
  %v2677 = vpack.c.b16 %v2657, %v2655
  %v2678 = vpack.c.b16 %v2660, %v2658
  %v2679 = vpack.c.b16 %v2661, %v2659
  %v2680 = vpack.c.b16 %v2664, %v2662
  %v2681 = vpack.c.b16 %v2665, %v2663
  %2698 = vmatprep.subr.bf16.mxu0 %v2681
  %2699 = vmatpush1.bf16.msra.mxu0 %v2680
  %2700 = vmatprep.subr.bf16.mxu0 %v2679
  %2701 = vmatpush1.bf16.msra.mxu0 %v2678
  %2702 = vmatprep.subr.bf16.mxu0 %v2677
  %2703 = vmatpush1.bf16.msra.mxu0 %v2676
  %2704 = vmatprep.subr.bf16.mxu0 %v2675
  %2705 = vmatpush1.bf16.msra.mxu0 %v2674
  %2706 = vmatprep.subr.bf16.mxu0 %v2673
  %2707 = vmatpush1.bf16.msra.mxu0 %v2672
  %2708 = vmatprep.subr.bf16.mxu0 %v2671
  %2709 = vmatpush1.bf16.msra.mxu0 %v2670
  %2710 = vmatprep.subr.bf16.mxu0 %v2669
  %2711 = vmatpush1.bf16.msra.mxu0 %v2668
  %2712 = vmatprep.subr.bf16.mxu0 %v2667
  %2713 = vmatpush1.bf16.msra.mxu0 %v2666
  %2714 = vmatprep.subr.bf16.mxu0 0
  %2715 = vmatpush2.bf16.msra.mxu0 0
  %2716 = vmatprep.subr.bf16.mxu0 0
  %2717 = vmatpush2.bf16.msra.mxu0 0
  %2718 = vmatprep.subr.bf16.mxu0 0
  %2719 = vmatpush2.bf16.msra.mxu0 0
  %2720 = vmatprep.subr.bf16.mxu0 0
  %2721 = vmatpush2.bf16.msra.mxu0 0
  %2722 = vmatprep.subr.bf16.mxu0 0
  %2723 = vmatpush2.bf16.msra.mxu0 0
  %2724 = vmatprep.subr.bf16.mxu0 0
  %2725 = vmatpush2.bf16.msra.mxu0 0
  %2726 = vmatprep.subr.bf16.mxu0 0
  %2727 = vmatpush2.bf16.msra.mxu0 0
  %2728 = vmatprep.subr.bf16.mxu0 0
  %2729 = vmatpush2.bf16.msra.mxu0 0
  %2730 = vmatprep.mubr.bf16.mxu0 0
  %2731 = vmatmul.mubr.bf16.gmra.mxu0 %v2089
  %v2732 = vpop.f32.mrf.mxu0
  %v2733 = vadd.f32 %v2611, %v2732
  %v2734 = vpop.f32.mrf.mxu0
  %v2735 = vadd.f32 %v2615, %v2734
  %v2736 = vpop.f32.mrf.mxu0
  %v2737 = vadd.f32 %v2611, %v2736
  %v2738 = vpop.f32.mrf.mxu0
  %v2739 = vadd.f32 %v2615, %v2738
  %2740 = vmatprep.mubr.bf16.mxu0 0
  %2741 = vmatmul.mubr.bf16.gmra.mxu0 %v2092
  %v2742 = vpop.f32.mrf.mxu0
  %v2743 = vadd.f32 %v2611, %v2742
  %v2744 = vpop.f32.mrf.mxu0
  %v2745 = vadd.f32 %v2615, %v2744
  %v2746 = vpop.f32.mrf.mxu0
  %v2747 = vadd.f32 %v2611, %v2746
  %v2748 = vpop.f32.mrf.mxu0
  %v2749 = vadd.f32 %v2615, %v2748
  %2750 = vmatprep.mubr.bf16.mxu0 0
  %2751 = vmatmul.mubr.bf16.gmra.mxu0 %v2095
  %v2752 = vpop.f32.mrf.mxu0
  %v2753 = vadd.f32 %v2611, %v2752
  %v2754 = vpop.f32.mrf.mxu0
  %v2755 = vadd.f32 %v2615, %v2754
  %v2756 = vpop.f32.mrf.mxu0
  %v2757 = vadd.f32 %v2611, %v2756
  %v2758 = vpop.f32.mrf.mxu0
  %v2759 = vadd.f32 %v2615, %v2758
  %2760 = vmatprep.mubr.bf16.mxu0 0
  %2761 = vmatmul.mubr.bf16.gmra.mxu0 %v2098
  %v2762 = vpop.f32.mrf.mxu0
  %v2763 = vadd.f32 %v2611, %v2762
  %v2764 = vpop.f32.mrf.mxu0
  %v2765 = vadd.f32 %v2615, %v2764
  %v2766 = vpop.f32.mrf.mxu0
  %v2767 = vadd.f32 %v2611, %v2766
  %v2768 = vpop.f32.mrf.mxu0
  %v2769 = vadd.f32 %v2615, %v2768
  %2770 = vmatprep.mubr.bf16.mxu0 0
  %2771 = vmatmul.mubr.bf16.gmra.mxu0 %v2101
  %v2772 = vpop.f32.mrf.mxu0
  %v2773 = vadd.f32 %v2611, %v2772
  %v2774 = vpop.f32.mrf.mxu0
  %v2775 = vadd.f32 %v2615, %v2774
  %v2776 = vpop.f32.mrf.mxu0
  %v2777 = vadd.f32 %v2611, %v2776
  %v2778 = vpop.f32.mrf.mxu0
  %v2779 = vadd.f32 %v2615, %v2778
  %2780 = vmatprep.mubr.bf16.mxu0 0
  %2781 = vmatmul.mubr.bf16.gmra.mxu0 %v2104
  %v2782 = vpop.f32.mrf.mxu0
  %v2783 = vadd.f32 %v2611, %v2782
  %v2784 = vpop.f32.mrf.mxu0
  %v2785 = vadd.f32 %v2615, %v2784
  %v2786 = vpop.f32.mrf.mxu0
  %v2787 = vadd.f32 %v2611, %v2786
  %v2788 = vpop.f32.mrf.mxu0
  %v2789 = vadd.f32 %v2615, %v2788
  %2790 = vmatprep.mubr.bf16.mxu0 0
  %2791 = vmatmul.mubr.bf16.gmra.mxu0 %v2107
  %v2792 = vpop.f32.mrf.mxu0
  %v2793 = vadd.f32 %v2611, %v2792
  %v2794 = vpop.f32.mrf.mxu0
  %v2795 = vadd.f32 %v2615, %v2794
  %v2796 = vpop.f32.mrf.mxu0
  %v2797 = vadd.f32 %v2611, %v2796
  %v2798 = vpop.f32.mrf.mxu0
  %v2799 = vadd.f32 %v2615, %v2798
  %2800 = vmatprep.mubr.bf16.mxu0 0
  %2801 = vmatmul.mubr.bf16.gmra.mxu0 %v2110
  %v2802 = vpop.f32.mrf.mxu0
  %v2803 = vadd.f32 %v2611, %v2802
  %v2804 = vpop.f32.mrf.mxu0
  %v2805 = vadd.f32 %v2615, %v2804
  %v2806 = vpop.f32.mrf.mxu0
  %v2807 = vadd.f32 %v2611, %v2806
  %v2808 = vpop.f32.mrf.mxu0
  %v2809 = vadd.f32 %v2615, %v2808
  %2810 = vmatprep.mubr.bf16.mxu0 0
  %2811 = vmatmul.mubr.bf16.gmra.mxu0 %v2113
  %v2812 = vpop.f32.mrf.mxu0
  %v2813 = vadd.f32 %v2611, %v2812
  %v2814 = vpop.f32.mrf.mxu0
  %v2815 = vadd.f32 %v2615, %v2814
  %v2816 = vpop.f32.mrf.mxu0
  %v2817 = vadd.f32 %v2611, %v2816
  %v2818 = vpop.f32.mrf.mxu0
  %v2819 = vadd.f32 %v2615, %v2818
  %2820 = vmatprep.mubr.bf16.mxu0 0
  %2821 = vmatmul.mubr.bf16.gmra.mxu0 %v2116
  %v2822 = vpop.f32.mrf.mxu0
  %v2823 = vadd.f32 %v2611, %v2822
  %v2824 = vpop.f32.mrf.mxu0
  %v2825 = vadd.f32 %v2615, %v2824
  %v2826 = vpop.f32.mrf.mxu0
  %v2827 = vadd.f32 %v2611, %v2826
  %v2828 = vpop.f32.mrf.mxu0
  %v2829 = vadd.f32 %v2615, %v2828
  %2830 = vmatprep.mubr.bf16.mxu0 0
  %2831 = vmatmul.mubr.bf16.gmra.mxu0 %v2119
  %v2832 = vpop.f32.mrf.mxu0
  %v2833 = vadd.f32 %v2611, %v2832
  %v2834 = vpop.f32.mrf.mxu0
  %v2835 = vadd.f32 %v2615, %v2834
  %v2836 = vpop.f32.mrf.mxu0
  %v2837 = vadd.f32 %v2611, %v2836
  %v2838 = vpop.f32.mrf.mxu0
  %v2839 = vadd.f32 %v2615, %v2838
  %2840 = vmatprep.mubr.bf16.mxu0 0
  %2841 = vmatmul.mubr.bf16.gmra.mxu0 %v2122
  %v2842 = vpop.f32.mrf.mxu0
  %v2843 = vadd.f32 %v2611, %v2842
  %v2844 = vpop.f32.mrf.mxu0
  %v2845 = vadd.f32 %v2615, %v2844
  %v2846 = vpop.f32.mrf.mxu0
  %v2847 = vadd.f32 %v2611, %v2846
  %v2848 = vpop.f32.mrf.mxu0
  %v2849 = vadd.f32 %v2615, %v2848
  %2850 = vmatprep.mubr.bf16.mxu0 0
  %2851 = vmatmul.mubr.bf16.gmra.mxu0 %v2125
  %v2852 = vpop.f32.mrf.mxu0
  %v2853 = vadd.f32 %v2611, %v2852
  %v2854 = vpop.f32.mrf.mxu0
  %v2855 = vadd.f32 %v2615, %v2854
  %v2856 = vpop.f32.mrf.mxu0
  %v2857 = vadd.f32 %v2611, %v2856
  %v2858 = vpop.f32.mrf.mxu0
  %v2859 = vadd.f32 %v2615, %v2858
  %2860 = vmatprep.mubr.bf16.mxu0 0
  %2861 = vmatmul.mubr.bf16.gmra.mxu0 %v2128
  %v2862 = vpop.f32.mrf.mxu0
  %v2863 = vadd.f32 %v2611, %v2862
  %v2864 = vpop.f32.mrf.mxu0
  %v2865 = vadd.f32 %v2615, %v2864
  %v2866 = vpop.f32.mrf.mxu0
  %v2867 = vadd.f32 %v2611, %v2866
  %v2868 = vpop.f32.mrf.mxu0
  %v2869 = vadd.f32 %v2615, %v2868
  %2870 = vmatprep.mubr.bf16.mxu0 0
  %2871 = vmatmul.mubr.bf16.gmra.mxu0 %v2131
  %v2872 = vpop.f32.mrf.mxu0
  %v2873 = vadd.f32 %v2611, %v2872
  %v2874 = vpop.f32.mrf.mxu0
  %v2875 = vadd.f32 %v2615, %v2874
  %v2876 = vpop.f32.mrf.mxu0
  %v2877 = vadd.f32 %v2611, %v2876
  %v2878 = vpop.f32.mrf.mxu0
  %v2879 = vadd.f32 %v2615, %v2878
  %2880 = vmatprep.mubr.bf16.mxu0 0
  %2881 = vmatmul.mubr.bf16.gmra.mxu0 %v2134
  %v2882 = vpop.f32.mrf.mxu0
  %v2883 = vadd.f32 %v2611, %v2882
  %v2884 = vpop.f32.mrf.mxu0
  %v2885 = vadd.f32 %v2615, %v2884
  %v2886 = vpop.f32.mrf.mxu0
  %v2887 = vadd.f32 %v2611, %v2886
  %v2888 = vpop.f32.mrf.mxu0
  %v2889 = vadd.f32 %v2615, %v2888
  %2890 = vmatprep.mubr.bf16.mxu0 0
  %2891 = vmatmul.mubr.bf16.gmra.mxu0 %v2137
  %v2892 = vpop.f32.mrf.mxu0
  %v2893 = vadd.f32 %v2611, %v2892
  %v2894 = vpop.f32.mrf.mxu0
  %v2895 = vadd.f32 %v2615, %v2894
  %v2896 = vpop.f32.mrf.mxu0
  %v2897 = vadd.f32 %v2611, %v2896
  %v2898 = vpop.f32.mrf.mxu0
  %v2899 = vadd.f32 %v2615, %v2898
  %2900 = vmatprep.mubr.bf16.mxu0 0
  %2901 = vmatmul.mubr.bf16.gmra.mxu0 %v2140
  %v2902 = vpop.f32.mrf.mxu0
  %v2903 = vadd.f32 %v2611, %v2902
  %v2904 = vpop.f32.mrf.mxu0
  %v2905 = vadd.f32 %v2615, %v2904
  %v2906 = vpop.f32.mrf.mxu0
  %v2907 = vadd.f32 %v2611, %v2906
  %v2908 = vpop.f32.mrf.mxu0
  %v2909 = vadd.f32 %v2615, %v2908
  %2910 = vmatprep.mubr.bf16.mxu0 0
  %2911 = vmatmul.mubr.bf16.gmra.mxu0 %v2143
  %v2912 = vpop.f32.mrf.mxu0
  %v2913 = vadd.f32 %v2611, %v2912
  %v2914 = vpop.f32.mrf.mxu0
  %v2915 = vadd.f32 %v2615, %v2914
  %v2916 = vpop.f32.mrf.mxu0
  %v2917 = vadd.f32 %v2611, %v2916
  %v2918 = vpop.f32.mrf.mxu0
  %v2919 = vadd.f32 %v2615, %v2918
  %2920 = vdwg.mxu0
  %v2921 = vpack.c.bf16 %v2737, %v2733
  %v2922 = vpack.c.bf16 %v2739, %v2735
  %v2923 = vpack.c.bf16 %v2747, %v2743
  %v2924 = vpack.c.bf16 %v2749, %v2745
  %v2925 = vpack.c.bf16 %v2757, %v2753
  %v2926 = vpack.c.bf16 %v2759, %v2755
  %v2927 = vpack.c.bf16 %v2767, %v2763
  %v2928 = vpack.c.bf16 %v2769, %v2765
  %v2929 = vpack.c.bf16 %v2777, %v2773
  %v2930 = vpack.c.bf16 %v2779, %v2775
  %v2931 = vpack.c.bf16 %v2787, %v2783
  %v2932 = vpack.c.bf16 %v2789, %v2785
  %v2933 = vpack.c.bf16 %v2797, %v2793
  %v2934 = vpack.c.bf16 %v2799, %v2795
  %v2935 = vpack.c.bf16 %v2807, %v2803
  %v2936 = vpack.c.bf16 %v2809, %v2805
  %v2937 = vpack.c.bf16 %v2817, %v2813
  %v2938 = vpack.c.bf16 %v2819, %v2815
  %v2939 = vpack.c.bf16 %v2827, %v2823
  %v2940 = vpack.c.bf16 %v2829, %v2825
  %v2941 = vpack.c.bf16 %v2837, %v2833
  %v2942 = vpack.c.bf16 %v2839, %v2835
  %v2943 = vpack.c.bf16 %v2847, %v2843
  %v2944 = vpack.c.bf16 %v2849, %v2845
  %v2945 = vpack.c.bf16 %v2857, %v2853
  %v2946 = vpack.c.bf16 %v2859, %v2855
  %v2947 = vpack.c.bf16 %v2867, %v2863
  %v2948 = vpack.c.bf16 %v2869, %v2865
  %v2949 = vpack.c.bf16 %v2877, %v2873
  %v2950 = vpack.c.bf16 %v2879, %v2875
  %v2951 = vpack.c.bf16 %v2887, %v2883
  %v2952 = vpack.c.bf16 %v2889, %v2885
  %v2953 = vpack.c.bf16 %v2897, %v2893
  %v2954 = vpack.c.bf16 %v2899, %v2895
  %v2955 = vpack.c.bf16 %v2907, %v2903
  %v2956 = vpack.c.bf16 %v2909, %v2905
  %v2957 = vpack.c.bf16 %v2917, %v2913
  %v2958 = vpack.c.bf16 %v2919, %v2915
  %v2997 = vunpack.c.l.b16 %v2921
  %v2998 = vunpack.c.l.b16 %v2922
  %v2999 = vunpack.c.h.b16 %v2921
  %v3000 = vunpack.c.h.b16 %v2922
  %v3001 = vunpack.c.l.b16 %v2923
  %v3002 = vunpack.c.l.b16 %v2924
  %v3003 = vunpack.c.h.b16 %v2923
  %v3004 = vunpack.c.h.b16 %v2924
  %v3005 = vunpack.c.l.b16 %v2925
  %v3006 = vunpack.c.l.b16 %v2926
  %v3007 = vunpack.c.h.b16 %v2925
  %v3008 = vunpack.c.h.b16 %v2926
  %v3009 = vunpack.c.l.b16 %v2927
  %v3010 = vunpack.c.l.b16 %v2928
  %v3011 = vunpack.c.h.b16 %v2927
  %v3012 = vunpack.c.h.b16 %v2928
  %v3013 = vunpack.c.l.b16 %v2929
  %v3014 = vunpack.c.l.b16 %v2930
  %v3015 = vunpack.c.h.b16 %v2929
  %v3016 = vunpack.c.h.b16 %v2930
  %v3017 = vunpack.c.l.b16 %v2931
  %v3018 = vunpack.c.l.b16 %v2932
  %v3019 = vunpack.c.h.b16 %v2931
  %v3020 = vunpack.c.h.b16 %v2932
  %v3021 = vunpack.c.l.b16 %v2933
  %v3022 = vunpack.c.l.b16 %v2934
  %v3023 = vunpack.c.h.b16 %v2933
  %v3024 = vunpack.c.h.b16 %v2934
  %v3025 = vunpack.c.l.b16 %v2935
  %v3026 = vunpack.c.l.b16 %v2936
  %v3027 = vunpack.c.h.b16 %v2935
  %v3028 = vunpack.c.h.b16 %v2936
  %v3029 = vunpack.c.l.b16 %v2937
  %v3030 = vunpack.c.l.b16 %v2938
  %v3031 = vunpack.c.h.b16 %v2937
  %v3032 = vunpack.c.h.b16 %v2938
  %v3033 = vunpack.c.l.b16 %v2939
  %v3034 = vunpack.c.l.b16 %v2940
  %v3035 = vunpack.c.h.b16 %v2939
  %v3036 = vunpack.c.h.b16 %v2940
  %v3037 = vunpack.c.l.b16 %v2941
  %v3038 = vunpack.c.l.b16 %v2942
  %v3039 = vunpack.c.h.b16 %v2941
  %v3040 = vunpack.c.h.b16 %v2942
  %v3041 = vunpack.c.l.b16 %v2943
  %v3042 = vunpack.c.l.b16 %v2944
  %v3043 = vunpack.c.h.b16 %v2943
  %v3044 = vunpack.c.h.b16 %v2944
  %v3045 = vunpack.c.l.b16 %v2945
  %v3046 = vunpack.c.l.b16 %v2946
  %v3047 = vunpack.c.h.b16 %v2945
  %v3048 = vunpack.c.h.b16 %v2946
  %v3049 = vunpack.c.l.b16 %v2947
  %v3050 = vunpack.c.l.b16 %v2948
  %v3051 = vunpack.c.h.b16 %v2947
  %v3052 = vunpack.c.h.b16 %v2948
  %v3053 = vunpack.c.l.b16 %v2949
  %v3054 = vunpack.c.l.b16 %v2950
  %v3055 = vunpack.c.h.b16 %v2949
  %v3056 = vunpack.c.h.b16 %v2950
  %v3057 = vunpack.c.l.b16 %v2951
  %v3058 = vunpack.c.l.b16 %v2952
  %v3059 = vunpack.c.h.b16 %v2951
  %v3060 = vunpack.c.h.b16 %v2952
  %v3061 = vunpack.c.l.b16 %v2953
  %v3062 = vunpack.c.l.b16 %v2954
  %v3063 = vunpack.c.h.b16 %v2953
  %v3064 = vunpack.c.h.b16 %v2954
  %v3065 = vunpack.c.l.b16 %v2955
  %v3066 = vunpack.c.l.b16 %v2956
  %v3067 = vunpack.c.h.b16 %v2955
  %v3068 = vunpack.c.h.b16 %v2956
  %v3069 = vunpack.c.l.b16 %v2957
  %v3070 = vunpack.c.l.b16 %v2958
  %v3071 = vunpack.c.h.b16 %v2957
  %v3072 = vunpack.c.h.b16 %v2958
  %v3073 = vpack.c.b16 %v2998, %v2997
  %v3074 = vpack.c.b16 %v3000, %v2999
  %v3075 = vpack.c.b16 %v3002, %v3001
  %v3076 = vpack.c.b16 %v3004, %v3003
  %v3077 = vpack.c.b16 %v3006, %v3005
  %v3078 = vpack.c.b16 %v3008, %v3007
  %v3079 = vpack.c.b16 %v3010, %v3009
  %v3080 = vpack.c.b16 %v3012, %v3011
  %v3081 = vpack.c.b16 %v3014, %v3013
  %v3082 = vpack.c.b16 %v3016, %v3015
  %v3083 = vpack.c.b16 %v3018, %v3017
  %v3084 = vpack.c.b16 %v3020, %v3019
  %v3085 = vpack.c.b16 %v3022, %v3021
  %v3086 = vpack.c.b16 %v3024, %v3023
  %v3087 = vpack.c.b16 %v3026, %v3025
  %v3088 = vpack.c.b16 %v3028, %v3027
  %v3089 = vpack.c.b16 %v3030, %v3029
  %v3090 = vpack.c.b16 %v3032, %v3031
  %v3091 = vpack.c.b16 %v3034, %v3033
  %v3092 = vpack.c.b16 %v3036, %v3035
  %v3093 = vpack.c.b16 %v3038, %v3037
  %v3094 = vpack.c.b16 %v3040, %v3039
  %v3095 = vpack.c.b16 %v3042, %v3041
  %v3096 = vpack.c.b16 %v3044, %v3043
  %v3097 = vpack.c.b16 %v3046, %v3045
  %v3098 = vpack.c.b16 %v3048, %v3047
  %v3099 = vpack.c.b16 %v3050, %v3049
  %v3100 = vpack.c.b16 %v3052, %v3051
  %v3101 = vpack.c.b16 %v3054, %v3053
  %v3102 = vpack.c.b16 %v3056, %v3055
  %v3103 = vpack.c.b16 %v3058, %v3057
  %v3104 = vpack.c.b16 %v3060, %v3059
  %v3105 = vpack.c.b16 %v3062, %v3061
  %v3106 = vpack.c.b16 %v3064, %v3063
  %v3107 = vpack.c.b16 %v3066, %v3065
  %v3108 = vpack.c.b16 %v3068, %v3067
  %v3109 = vpack.c.b16 %v3070, %v3069
  %v3110 = vpack.c.b16 %v3072, %v3071
  %3149 = vst [vmem:[%s13] sm:$0xff] %v3073
  %3150 = vst [vmem:[%s13 + $0x8] sm:$0xff] %v3074
  %3151 = vst [vmem:[%s13 + $0x10] sm:$0xff] %v3075
  %3152 = vst [vmem:[%s13 + $0x18] sm:$0xff] %v3076
  %3153 = vst [vmem:[%s13 + $0x20] sm:$0xff] %v3077
  %3154 = vst [vmem:[%s13 + $0x28] sm:$0xff] %v3078
  %3155 = vst [vmem:[%s13 + $0x30] sm:$0xff] %v3079
  %3156 = vst [vmem:[%s13 + $0x38] sm:$0xff] %v3080
  %3157 = vst [vmem:[%s13 + $0x40] sm:$0xff] %v3081
  %3158 = vst [vmem:[%s13 + $0x48] sm:$0xff] %v3082
  %3159 = vst [vmem:[%s13 + $0x50] sm:$0xff] %v3083
  %3160 = vst [vmem:[%s13 + $0x58] sm:$0xff] %v3084
  %3161 = vst [vmem:[%s13 + $0x60] sm:$0xff] %v3085
  %3162 = vst [vmem:[%s13 + $0x68] sm:$0xff] %v3086
  %3163 = vst [vmem:[%s13 + $0x70] sm:$0xff] %v3087
  %3164 = vst [vmem:[%s13 + $0x78] sm:$0xff] %v3088
  %3165 = vst [vmem:[%s13 + $0x80] sm:$0xff] %v3089
  %3166 = vst [vmem:[%s13 + $0x88] sm:$0xff] %v3090
  %3167 = vst [vmem:[%s13 + $0x90] sm:$0xff] %v3091
  %3168 = vst [vmem:[%s13 + $0x98] sm:$0xff] %v3092
  %3169 = vst [vmem:[%s13 + $0xa0] sm:$0xff] %v3093
  %3170 = vst [vmem:[%s13 + $0xa8] sm:$0xff] %v3094
  %3171 = vst [vmem:[%s13 + $0xb0] sm:$0xff] %v3095
  %3172 = vst [vmem:[%s13 + $0xb8] sm:$0xff] %v3096
  %3173 = vst [vmem:[%s13 + $0xc0] sm:$0xff] %v3097
  %3174 = vst [vmem:[%s13 + $0xc8] sm:$0xff] %v3098
  %3175 = vst [vmem:[%s13 + $0xd0] sm:$0xff] %v3099
  %3176 = vst [vmem:[%s13 + $0xd8] sm:$0xff] %v3100
  %3177 = vst [vmem:[%s13 + $0xe0] sm:$0xff] %v3101
  %3178 = vst [vmem:[%s13 + $0xe8] sm:$0xff] %v3102
  %3179 = vst [vmem:[%s13 + $0xf0] sm:$0xff] %v3103
  %3180 = vst [vmem:[%s13 + $0xf8] sm:$0xff] %v3104
  %3181 = vst [vmem:[%s13 + $0x100] sm:$0xff] %v3105
  %3182 = vst [vmem:[%s13 + $0x108] sm:$0xff] %v3106
  %3183 = vst [vmem:[%s13 + $0x110] sm:$0xff] %v3107
  %3184 = vst [vmem:[%s13 + $0x118] sm:$0xff] %v3108
  %3185 = vst [vmem:[%s13 + $0x120] sm:$0xff] %v3109
  %3186 = vst [vmem:[%s13 + $0x128] sm:$0xff] %v3110
  %v3187 = vld [vmem:[%s7] sm:$0xf]
  %v3188 = vld [vmem:[%s7 + $0x4] sm:$0xf]
  %v3189 = vld [vmem:[%s7 + $0x8] sm:$0xf]
  %v3190 = vld [vmem:[%s7 + $0xc] sm:$0xf]
  %v3191 = vld [vmem:[%s7 + $0x10] sm:$0xf]
  %v3192 = vld [vmem:[%s7 + $0x14] sm:$0xf]
  %v3193 = vld [vmem:[%s7 + $0x18] sm:$0xf]
  %v3194 = vld [vmem:[%s7 + $0x1c] sm:$0xf]
  %v3195 = vld [vmem:[%s7 + $0x20] sm:$0xf]
  %v3196 = vld [vmem:[%s7 + $0x24] sm:$0xf]
  %v3197 = vld [vmem:[%s7 + $0x28] sm:$0xf]
  %v3198 = vld [vmem:[%s7 + $0x2c] sm:$0xf]
  %v3199 = vld [vmem:[%s7 + $0x30] sm:$0xf]
  %v3200 = vld [vmem:[%s7 + $0x34] sm:$0xf]
  %v3201 = vld [vmem:[%s7 + $0x38] sm:$0xf]
  %v3202 = vld [vmem:[%s7 + $0x3c] sm:$0xf]
  %v3203 = vld [vmem:[%s7 + $0x40] sm:$0xf]
  %v3204 = vld [vmem:[%s7 + $0x44] sm:$0xf]
  %v3205 = vld [vmem:[%s7 + $0x48] sm:$0xf]
  %v3206 = vld [vmem:[%s7 + $0x4c] sm:$0xf]
  %v3207 = vld [vmem:[%s7 + $0x50] sm:$0xf]
  %v3208 = vld [vmem:[%s7 + $0x54] sm:$0xf]
  %v3209 = vld [vmem:[%s7 + $0x58] sm:$0xf]
  %v3210 = vld [vmem:[%s7 + $0x5c] sm:$0xf]
  %v3211 = vld [vmem:[%s7 + $0x60] sm:$0xf]
  %v3212 = vld [vmem:[%s7 + $0x64] sm:$0xf]
  %v3213 = vld [vmem:[%s7 + $0x68] sm:$0xf]
  %v3214 = vld [vmem:[%s7 + $0x6c] sm:$0xf]
  %v3215 = vld [vmem:[%s7 + $0x70] sm:$0xf]
  %v3216 = vld [vmem:[%s7 + $0x74] sm:$0xf]
  %v3217 = vld [vmem:[%s7 + $0x78] sm:$0xf]
  %v3218 = vld [vmem:[%s7 + $0x7c] sm:$0xf]
  %v3219 = vld [vmem:[%s7 + $0x80] sm:$0xf]
  %v3220 = vld [vmem:[%s7 + $0x84] sm:$0xf]
  %v3221 = vld [vmem:[%s7 + $0x88] sm:$0xf]
  %v3222 = vld [vmem:[%s7 + $0x8c] sm:$0xf]
  %v3223 = vld [vmem:[%s7 + $0x90] sm:$0xf]
  %v3224 = vld [vmem:[%s7 + $0x94] sm:$0xf]
  %v3225 = vld [vmem:[%s7 + $0x98] sm:$0xf]
  %v3226 = vld [vmem:[%s7 + $0x9c] sm:$0xf]
  %v3227 = vld [vmem:[%s7 + $0xa0] sm:$0xf]
  %v3228 = vld [vmem:[%s7 + $0xa4] sm:$0xf]
  %v3229 = vld [vmem:[%s7 + $0xa8] sm:$0xf]
  %v3230 = vld [vmem:[%s7 + $0xac] sm:$0xf]
  %v3231 = vld [vmem:[%s7 + $0xb0] sm:$0xf]
  %v3232 = vld [vmem:[%s7 + $0xb4] sm:$0xf]
  %v3233 = vld [vmem:[%s7 + $0xb8] sm:$0xf]
  %v3234 = vld [vmem:[%s7 + $0xbc] sm:$0xf]
  %v3235 = vld [vmem:[%s8] sm:$0x1]
  %v3237 = vlaneseq
  %v3238 = vshrl.u32 %v3237, 7
  %v3239 = vsub.s32 0, %v3238
  %v3240 = vrot.slane %v3235, %v3239
  %v3290 = vunpack.c.l.b16 %v3187
  %v3291 = vunpack.c.l.b16 %v3188
  %v3292 = vunpack.c.l.b16 %v3189
  %v3293 = vunpack.c.l.b16 %v3190
  %v3294 = vunpack.c.l.b16 %v3191
  %v3295 = vunpack.c.l.b16 %v3192
  %v3296 = vunpack.c.l.b16 %v3193
  %v3297 = vunpack.c.l.b16 %v3194
  %v3298 = vunpack.c.l.b16 %v3195
  %v3299 = vunpack.c.l.b16 %v3196
  %v3300 = vunpack.c.l.b16 %v3197
  %v3301 = vunpack.c.l.b16 %v3198
  %v3302 = vunpack.c.l.b16 %v3199
  %v3303 = vunpack.c.l.b16 %v3200
  %v3304 = vunpack.c.l.b16 %v3201
  %v3305 = vunpack.c.l.b16 %v3202
  %v3306 = vunpack.c.l.b16 %v3203
  %v3307 = vunpack.c.l.b16 %v3204
  %v3308 = vunpack.c.l.b16 %v3205
  %v3309 = vunpack.c.l.b16 %v3206
  %v3310 = vunpack.c.l.b16 %v3207
  %v3311 = vunpack.c.l.b16 %v3208
  %v3312 = vunpack.c.l.b16 %v3209
  %v3313 = vunpack.c.l.b16 %v3210
  %v3314 = vunpack.c.l.b16 %v3211
  %v3315 = vunpack.c.l.b16 %v3212
  %v3316 = vunpack.c.l.b16 %v3213
  %v3317 = vunpack.c.l.b16 %v3214
  %v3318 = vunpack.c.l.b16 %v3215
  %v3319 = vunpack.c.l.b16 %v3216
  %v3320 = vunpack.c.l.b16 %v3217
  %v3321 = vunpack.c.l.b16 %v3218
  %v3322 = vunpack.c.l.b16 %v3219
  %v3323 = vunpack.c.l.b16 %v3220
  %v3324 = vunpack.c.l.b16 %v3221
  %v3325 = vunpack.c.l.b16 %v3222
  %v3326 = vunpack.c.l.b16 %v3223
  %v3327 = vunpack.c.l.b16 %v3224
  %v3328 = vunpack.c.l.b16 %v3225
  %v3329 = vunpack.c.l.b16 %v3226
  %v3330 = vunpack.c.l.b16 %v3227
  %v3331 = vunpack.c.l.b16 %v3228
  %v3332 = vunpack.c.l.b16 %v3229
  %v3333 = vunpack.c.l.b16 %v3230
  %v3334 = vunpack.c.l.b16 %v3231
  %v3335 = vunpack.c.l.b16 %v3232
  %v3336 = vunpack.c.l.b16 %v3233
  %v3337 = vunpack.c.l.b16 %v3234
  %v3338 = vpack.c.b16 %v3291, %v3290
  %v3339 = vpack.c.b16 %v3293, %v3292
  %v3340 = vpack.c.b16 %v3295, %v3294
  %v3341 = vpack.c.b16 %v3297, %v3296
  %v3342 = vpack.c.b16 %v3299, %v3298
  %v3343 = vpack.c.b16 %v3301, %v3300
  %v3344 = vpack.c.b16 %v3303, %v3302
  %v3345 = vpack.c.b16 %v3305, %v3304
  %v3346 = vpack.c.b16 %v3307, %v3306
  %v3347 = vpack.c.b16 %v3309, %v3308
  %v3348 = vpack.c.b16 %v3311, %v3310
  %v3349 = vpack.c.b16 %v3313, %v3312
  %v3350 = vpack.c.b16 %v3315, %v3314
  %v3351 = vpack.c.b16 %v3317, %v3316
  %v3352 = vpack.c.b16 %v3319, %v3318
  %v3353 = vpack.c.b16 %v3321, %v3320
  %v3354 = vpack.c.b16 %v3323, %v3322
  %v3355 = vpack.c.b16 %v3325, %v3324
  %v3356 = vpack.c.b16 %v3327, %v3326
  %v3357 = vpack.c.b16 %v3329, %v3328
  %v3358 = vpack.c.b16 %v3331, %v3330
  %v3359 = vpack.c.b16 %v3333, %v3332
  %v3360 = vpack.c.b16 %v3335, %v3334
  %v3361 = vpack.c.b16 %v3337, %v3336
  %3386 = vmatprep.subr.bf16.mxu0 0
  %3387 = vmatpush1.bf16.msra.mxu0 %v3345
  %3388 = vmatprep.subr.bf16.mxu0 0
  %3389 = vmatpush1.bf16.msra.mxu0 %v3344
  %3390 = vmatprep.subr.bf16.mxu0 0
  %3391 = vmatpush1.bf16.msra.mxu0 %v3343
  %3392 = vmatprep.subr.bf16.mxu0 0
  %3393 = vmatpush1.bf16.msra.mxu0 %v3342
  %3394 = vmatprep.subr.bf16.mxu0 0
  %3395 = vmatpush1.bf16.msra.mxu0 %v3341
  %3396 = vmatprep.subr.bf16.mxu0 0
  %3397 = vmatpush1.bf16.msra.mxu0 %v3340
  %3398 = vmatprep.subr.bf16.mxu0 0
  %3399 = vmatpush1.bf16.msra.mxu0 %v3339
  %3400 = vmatprep.subr.bf16.mxu0 0
  %3401 = vmatpush1.bf16.msra.mxu0 %v3338
  %3402 = vmatprep.subr.bf16.mxu0 0
  %3403 = vmatpush2.bf16.msra.mxu0 %v3353
  %3404 = vmatprep.subr.bf16.mxu0 0
  %3405 = vmatpush2.bf16.msra.mxu0 %v3352
  %3406 = vmatprep.subr.bf16.mxu0 0
  %3407 = vmatpush2.bf16.msra.mxu0 %v3351
  %3408 = vmatprep.subr.bf16.mxu0 0
  %3409 = vmatpush2.bf16.msra.mxu0 %v3350
  %3410 = vmatprep.subr.bf16.mxu0 0
  %3411 = vmatpush2.bf16.msra.mxu0 %v3349
  %3412 = vmatprep.subr.bf16.mxu0 0
  %3413 = vmatpush2.bf16.msra.mxu0 %v3348
  %3414 = vmatprep.subr.bf16.mxu0 0
  %3415 = vmatpush2.bf16.msra.mxu0 %v3347
  %3416 = vmatprep.subr.bf16.mxu0 0
  %3417 = vmatpush2.bf16.msra.mxu0 %v3346
  %3418 = vmatprep.mubr.bf16.mxu0 %v2088
  %3419 = vmatmul.mubr.bf16.gmra.mxu0 %v2087
  %v3420 = vpop.f32.mrf.mxu0
  %v3421 = vadd.f32 %v3240, %v3420
  %v3422 = vpop.f32.mrf.mxu0
  %v3423 = vpop.f32.mrf.mxu0
  %v3424 = vadd.f32 %v3240, %v3423
  %v3425 = vpop.f32.mrf.mxu0
  %3426 = vmatprep.mubr.bf16.mxu0 %v2091
  %3427 = vmatmul.mubr.bf16.gmra.mxu0 %v2090
  %v3428 = vpop.f32.mrf.mxu0
  %v3429 = vadd.f32 %v3240, %v3428
  %v3430 = vpop.f32.mrf.mxu0
  %v3431 = vpop.f32.mrf.mxu0
  %v3432 = vadd.f32 %v3240, %v3431
  %v3433 = vpop.f32.mrf.mxu0
  %3434 = vmatprep.mubr.bf16.mxu0 %v2094
  %3435 = vmatmul.mubr.bf16.gmra.mxu0 %v2093
  %v3436 = vpop.f32.mrf.mxu0
  %v3437 = vadd.f32 %v3240, %v3436
  %v3438 = vpop.f32.mrf.mxu0
  %v3439 = vpop.f32.mrf.mxu0
  %v3440 = vadd.f32 %v3240, %v3439
  %v3441 = vpop.f32.mrf.mxu0
  %3442 = vmatprep.mubr.bf16.mxu0 %v2097
  %3443 = vmatmul.mubr.bf16.gmra.mxu0 %v2096
  %v3444 = vpop.f32.mrf.mxu0
  %v3445 = vadd.f32 %v3240, %v3444
  %v3446 = vpop.f32.mrf.mxu0
  %v3447 = vpop.f32.mrf.mxu0
  %v3448 = vadd.f32 %v3240, %v3447
  %v3449 = vpop.f32.mrf.mxu0
  %3450 = vmatprep.mubr.bf16.mxu0 %v2100
  %3451 = vmatmul.mubr.bf16.gmra.mxu0 %v2099
  %v3452 = vpop.f32.mrf.mxu0
  %v3453 = vadd.f32 %v3240, %v3452
  %v3454 = vpop.f32.mrf.mxu0
  %v3455 = vpop.f32.mrf.mxu0
  %v3456 = vadd.f32 %v3240, %v3455
  %v3457 = vpop.f32.mrf.mxu0
  %3458 = vmatprep.mubr.bf16.mxu0 %v2103
  %3459 = vmatmul.mubr.bf16.gmra.mxu0 %v2102
  %v3460 = vpop.f32.mrf.mxu0
  %v3461 = vadd.f32 %v3240, %v3460
  %v3462 = vpop.f32.mrf.mxu0
  %v3463 = vpop.f32.mrf.mxu0
  %v3464 = vadd.f32 %v3240, %v3463
  %v3465 = vpop.f32.mrf.mxu0
  %3466 = vmatprep.mubr.bf16.mxu0 %v2106
  %3467 = vmatmul.mubr.bf16.gmra.mxu0 %v2105
  %v3468 = vpop.f32.mrf.mxu0
  %v3469 = vadd.f32 %v3240, %v3468
  %v3470 = vpop.f32.mrf.mxu0
  %v3471 = vpop.f32.mrf.mxu0
  %v3472 = vadd.f32 %v3240, %v3471
  %v3473 = vpop.f32.mrf.mxu0
  %3474 = vmatprep.mubr.bf16.mxu0 %v2109
  %3475 = vmatmul.mubr.bf16.gmra.mxu0 %v2108
  %v3476 = vpop.f32.mrf.mxu0
  %v3477 = vadd.f32 %v3240, %v3476
  %v3478 = vpop.f32.mrf.mxu0
  %v3479 = vpop.f32.mrf.mxu0
  %v3480 = vadd.f32 %v3240, %v3479
  %v3481 = vpop.f32.mrf.mxu0
  %3482 = vmatprep.mubr.bf16.mxu0 %v2112
  %3483 = vmatmul.mubr.bf16.gmra.mxu0 %v2111
  %v3484 = vpop.f32.mrf.mxu0
  %v3485 = vadd.f32 %v3240, %v3484
  %v3486 = vpop.f32.mrf.mxu0
  %v3487 = vpop.f32.mrf.mxu0
  %v3488 = vadd.f32 %v3240, %v3487
  %v3489 = vpop.f32.mrf.mxu0
  %3490 = vmatprep.mubr.bf16.mxu0 %v2115
  %3491 = vmatmul.mubr.bf16.gmra.mxu0 %v2114
  %v3492 = vpop.f32.mrf.mxu0
  %v3493 = vadd.f32 %v3240, %v3492
  %v3494 = vpop.f32.mrf.mxu0
  %v3495 = vpop.f32.mrf.mxu0
  %v3496 = vadd.f32 %v3240, %v3495
  %v3497 = vpop.f32.mrf.mxu0
  %3498 = vmatprep.mubr.bf16.mxu0 %v2118
  %3499 = vmatmul.mubr.bf16.gmra.mxu0 %v2117
  %v3500 = vpop.f32.mrf.mxu0
  %v3501 = vadd.f32 %v3240, %v3500
  %v3502 = vpop.f32.mrf.mxu0
  %v3503 = vpop.f32.mrf.mxu0
  %v3504 = vadd.f32 %v3240, %v3503
  %v3505 = vpop.f32.mrf.mxu0
  %3506 = vmatprep.mubr.bf16.mxu0 %v2121
  %3507 = vmatmul.mubr.bf16.gmra.mxu0 %v2120
  %v3508 = vpop.f32.mrf.mxu0
  %v3509 = vadd.f32 %v3240, %v3508
  %v3510 = vpop.f32.mrf.mxu0
  %v3511 = vpop.f32.mrf.mxu0
  %v3512 = vadd.f32 %v3240, %v3511
  %v3513 = vpop.f32.mrf.mxu0
  %3514 = vmatprep.mubr.bf16.mxu0 %v2124
  %3515 = vmatmul.mubr.bf16.gmra.mxu0 %v2123
  %v3516 = vpop.f32.mrf.mxu0
  %v3517 = vadd.f32 %v3240, %v3516
  %v3518 = vpop.f32.mrf.mxu0
  %v3519 = vpop.f32.mrf.mxu0
  %v3520 = vadd.f32 %v3240, %v3519
  %v3521 = vpop.f32.mrf.mxu0
  %3522 = vmatprep.mubr.bf16.mxu0 %v2127
  %3523 = vmatmul.mubr.bf16.gmra.mxu0 %v2126
  %v3524 = vpop.f32.mrf.mxu0
  %v3525 = vadd.f32 %v3240, %v3524
  %v3526 = vpop.f32.mrf.mxu0
  %v3527 = vpop.f32.mrf.mxu0
  %v3528 = vadd.f32 %v3240, %v3527
  %v3529 = vpop.f32.mrf.mxu0
  %3530 = vmatprep.mubr.bf16.mxu0 %v2130
  %3531 = vmatmul.mubr.bf16.gmra.mxu0 %v2129
  %v3532 = vpop.f32.mrf.mxu0
  %v3533 = vadd.f32 %v3240, %v3532
  %v3534 = vpop.f32.mrf.mxu0
  %v3535 = vpop.f32.mrf.mxu0
  %v3536 = vadd.f32 %v3240, %v3535
  %v3537 = vpop.f32.mrf.mxu0
  %3538 = vmatprep.mubr.bf16.mxu0 %v2133
  %3539 = vmatmul.mubr.bf16.gmra.mxu0 %v2132
  %v3540 = vpop.f32.mrf.mxu0
  %v3541 = vadd.f32 %v3240, %v3540
  %v3542 = vpop.f32.mrf.mxu0
  %v3543 = vpop.f32.mrf.mxu0
  %v3544 = vadd.f32 %v3240, %v3543
  %v3545 = vpop.f32.mrf.mxu0
  %3546 = vmatprep.mubr.bf16.mxu0 %v2136
  %3547 = vmatmul.mubr.bf16.gmra.mxu0 %v2135
  %v3548 = vpop.f32.mrf.mxu0
  %v3549 = vadd.f32 %v3240, %v3548
  %v3550 = vpop.f32.mrf.mxu0
  %v3551 = vpop.f32.mrf.mxu0
  %v3552 = vadd.f32 %v3240, %v3551
  %v3553 = vpop.f32.mrf.mxu0
  %3554 = vmatprep.mubr.bf16.mxu0 %v2139
  %3555 = vmatmul.mubr.bf16.gmra.mxu0 %v2138
  %v3556 = vpop.f32.mrf.mxu0
  %v3557 = vadd.f32 %v3240, %v3556
  %v3558 = vpop.f32.mrf.mxu0
  %v3559 = vpop.f32.mrf.mxu0
  %v3560 = vadd.f32 %v3240, %v3559
  %v3561 = vpop.f32.mrf.mxu0
  %3562 = vmatprep.mubr.bf16.mxu0 %v2142
  %3563 = vmatmul.mubr.bf16.gmra.mxu0 %v2141
  %v3564 = vpop.f32.mrf.mxu0
  %v3565 = vadd.f32 %v3240, %v3564
  %v3566 = vpop.f32.mrf.mxu0
  %v3567 = vpop.f32.mrf.mxu0
  %v3568 = vadd.f32 %v3240, %v3567
  %v3569 = vpop.f32.mrf.mxu0
  %3570 = vdwg.mxu0
  %3571 = vmatprep.subr.bf16.mxu0 0
  %3572 = vmatpush1.bf16.msra.mxu0 %v3361
  %3573 = vmatprep.subr.bf16.mxu0 0
  %3574 = vmatpush1.bf16.msra.mxu0 %v3360
  %3575 = vmatprep.subr.bf16.mxu0 0
  %3576 = vmatpush1.bf16.msra.mxu0 %v3359
  %3577 = vmatprep.subr.bf16.mxu0 0
  %3578 = vmatpush1.bf16.msra.mxu0 %v3358
  %3579 = vmatprep.subr.bf16.mxu0 0
  %3580 = vmatpush1.bf16.msra.mxu0 %v3357
  %3581 = vmatprep.subr.bf16.mxu0 0
  %3582 = vmatpush1.bf16.msra.mxu0 %v3356
  %3583 = vmatprep.subr.bf16.mxu0 0
  %3584 = vmatpush1.bf16.msra.mxu0 %v3355
  %3585 = vmatprep.subr.bf16.mxu0 0
  %3586 = vmatpush1.bf16.msra.mxu0 %v3354
  %3587 = vmatprep.subr.bf16.mxu0 0
  %3588 = vmatpush2.bf16.msra.mxu0 0
  %3589 = vmatprep.subr.bf16.mxu0 0
  %3590 = vmatpush2.bf16.msra.mxu0 0
  %3591 = vmatprep.subr.bf16.mxu0 0
  %3592 = vmatpush2.bf16.msra.mxu0 0
  %3593 = vmatprep.subr.bf16.mxu0 0
  %3594 = vmatpush2.bf16.msra.mxu0 0
  %3595 = vmatprep.subr.bf16.mxu0 0
  %3596 = vmatpush2.bf16.msra.mxu0 0
  %3597 = vmatprep.subr.bf16.mxu0 0
  %3598 = vmatpush2.bf16.msra.mxu0 0
  %3599 = vmatprep.subr.bf16.mxu0 0
  %3600 = vmatpush2.bf16.msra.mxu0 0
  %3601 = vmatprep.subr.bf16.mxu0 0
  %3602 = vmatpush2.bf16.msra.mxu0 0
  %3603 = vmatprep.mubr.bf16.mxu0 0
  %3604 = vmatmul.mubr.bf16.gmra.mxu0 %v2089
  %v3605 = vpop.f32.mrf.mxu0
  %v3606 = vadd.f32 %v3421, %v3605
  %v3607 = vpop.f32.mrf.mxu0
  %v3608 = vpop.f32.mrf.mxu0
  %v3609 = vadd.f32 %v3424, %v3608
  %v3610 = vpop.f32.mrf.mxu0
  %3611 = vmatprep.mubr.bf16.mxu0 0
  %3612 = vmatmul.mubr.bf16.gmra.mxu0 %v2092
  %v3613 = vpop.f32.mrf.mxu0
  %v3614 = vadd.f32 %v3429, %v3613
  %v3615 = vpop.f32.mrf.mxu0
  %v3616 = vpop.f32.mrf.mxu0
  %v3617 = vadd.f32 %v3432, %v3616
  %v3618 = vpop.f32.mrf.mxu0
  %3619 = vmatprep.mubr.bf16.mxu0 0
  %3620 = vmatmul.mubr.bf16.gmra.mxu0 %v2095
  %v3621 = vpop.f32.mrf.mxu0
  %v3622 = vadd.f32 %v3437, %v3621
  %v3623 = vpop.f32.mrf.mxu0
  %v3624 = vpop.f32.mrf.mxu0
  %v3625 = vadd.f32 %v3440, %v3624
  %v3626 = vpop.f32.mrf.mxu0
  %3627 = vmatprep.mubr.bf16.mxu0 0
  %3628 = vmatmul.mubr.bf16.gmra.mxu0 %v2098
  %v3629 = vpop.f32.mrf.mxu0
  %v3630 = vadd.f32 %v3445, %v3629
  %v3631 = vpop.f32.mrf.mxu0
  %v3632 = vpop.f32.mrf.mxu0
  %v3633 = vadd.f32 %v3448, %v3632
  %v3634 = vpop.f32.mrf.mxu0
  %3635 = vmatprep.mubr.bf16.mxu0 0
  %3636 = vmatmul.mubr.bf16.gmra.mxu0 %v2101
  %v3637 = vpop.f32.mrf.mxu0
  %v3638 = vadd.f32 %v3453, %v3637
  %v3639 = vpop.f32.mrf.mxu0
  %v3640 = vpop.f32.mrf.mxu0
  %v3641 = vadd.f32 %v3456, %v3640
  %v3642 = vpop.f32.mrf.mxu0
  %3643 = vmatprep.mubr.bf16.mxu0 0
  %3644 = vmatmul.mubr.bf16.gmra.mxu0 %v2104
  %v3645 = vpop.f32.mrf.mxu0
  %v3646 = vadd.f32 %v3461, %v3645
  %v3647 = vpop.f32.mrf.mxu0
  %v3648 = vpop.f32.mrf.mxu0
  %v3649 = vadd.f32 %v3464, %v3648
  %v3650 = vpop.f32.mrf.mxu0
  %3651 = vmatprep.mubr.bf16.mxu0 0
  %3652 = vmatmul.mubr.bf16.gmra.mxu0 %v2107
  %v3653 = vpop.f32.mrf.mxu0
  %v3654 = vadd.f32 %v3469, %v3653
  %v3655 = vpop.f32.mrf.mxu0
  %v3656 = vpop.f32.mrf.mxu0
  %v3657 = vadd.f32 %v3472, %v3656
  %v3658 = vpop.f32.mrf.mxu0
  %3659 = vmatprep.mubr.bf16.mxu0 0
  %3660 = vmatmul.mubr.bf16.gmra.mxu0 %v2110
  %v3661 = vpop.f32.mrf.mxu0
  %v3662 = vadd.f32 %v3477, %v3661
  %v3663 = vpop.f32.mrf.mxu0
  %v3664 = vpop.f32.mrf.mxu0
  %v3665 = vadd.f32 %v3480, %v3664
  %v3666 = vpop.f32.mrf.mxu0
  %3667 = vmatprep.mubr.bf16.mxu0 0
  %3668 = vmatmul.mubr.bf16.gmra.mxu0 %v2113
  %v3669 = vpop.f32.mrf.mxu0
  %v3670 = vadd.f32 %v3485, %v3669
  %v3671 = vpop.f32.mrf.mxu0
  %v3672 = vpop.f32.mrf.mxu0
  %v3673 = vadd.f32 %v3488, %v3672
  %v3674 = vpop.f32.mrf.mxu0
  %3675 = vmatprep.mubr.bf16.mxu0 0
  %3676 = vmatmul.mubr.bf16.gmra.mxu0 %v2116
  %v3677 = vpop.f32.mrf.mxu0
  %v3678 = vadd.f32 %v3493, %v3677
  %v3679 = vpop.f32.mrf.mxu0
  %v3680 = vpop.f32.mrf.mxu0
  %v3681 = vadd.f32 %v3496, %v3680
  %v3682 = vpop.f32.mrf.mxu0
  %3683 = vmatprep.mubr.bf16.mxu0 0
  %3684 = vmatmul.mubr.bf16.gmra.mxu0 %v2119
  %v3685 = vpop.f32.mrf.mxu0
  %v3686 = vadd.f32 %v3501, %v3685
  %v3687 = vpop.f32.mrf.mxu0
  %v3688 = vpop.f32.mrf.mxu0
  %v3689 = vadd.f32 %v3504, %v3688
  %v3690 = vpop.f32.mrf.mxu0
  %3691 = vmatprep.mubr.bf16.mxu0 0
  %3692 = vmatmul.mubr.bf16.gmra.mxu0 %v2122
  %v3693 = vpop.f32.mrf.mxu0
  %v3694 = vadd.f32 %v3509, %v3693
  %v3695 = vpop.f32.mrf.mxu0
  %v3696 = vpop.f32.mrf.mxu0
  %v3697 = vadd.f32 %v3512, %v3696
  %v3698 = vpop.f32.mrf.mxu0
  %3699 = vmatprep.mubr.bf16.mxu0 0
  %3700 = vmatmul.mubr.bf16.gmra.mxu0 %v2125
  %v3701 = vpop.f32.mrf.mxu0
  %v3702 = vadd.f32 %v3517, %v3701
  %v3703 = vpop.f32.mrf.mxu0
  %v3704 = vpop.f32.mrf.mxu0
  %v3705 = vadd.f32 %v3520, %v3704
  %v3706 = vpop.f32.mrf.mxu0
  %3707 = vmatprep.mubr.bf16.mxu0 0
  %3708 = vmatmul.mubr.bf16.gmra.mxu0 %v2128
  %v3709 = vpop.f32.mrf.mxu0
  %v3710 = vadd.f32 %v3525, %v3709
  %v3711 = vpop.f32.mrf.mxu0
  %v3712 = vpop.f32.mrf.mxu0
  %v3713 = vadd.f32 %v3528, %v3712
  %v3714 = vpop.f32.mrf.mxu0
  %3715 = vmatprep.mubr.bf16.mxu0 0
  %3716 = vmatmul.mubr.bf16.gmra.mxu0 %v2131
  %v3717 = vpop.f32.mrf.mxu0
  %v3718 = vadd.f32 %v3533, %v3717
  %v3719 = vpop.f32.mrf.mxu0
  %v3720 = vpop.f32.mrf.mxu0
  %v3721 = vadd.f32 %v3536, %v3720
  %v3722 = vpop.f32.mrf.mxu0
  %3723 = vmatprep.mubr.bf16.mxu0 0
  %3724 = vmatmul.mubr.bf16.gmra.mxu0 %v2134
  %v3725 = vpop.f32.mrf.mxu0
  %v3726 = vadd.f32 %v3541, %v3725
  %v3727 = vpop.f32.mrf.mxu0
  %v3728 = vpop.f32.mrf.mxu0
  %v3729 = vadd.f32 %v3544, %v3728
  %v3730 = vpop.f32.mrf.mxu0
  %3731 = vmatprep.mubr.bf16.mxu0 0
  %3732 = vmatmul.mubr.bf16.gmra.mxu0 %v2137
  %v3733 = vpop.f32.mrf.mxu0
  %v3734 = vadd.f32 %v3549, %v3733
  %v3735 = vpop.f32.mrf.mxu0
  %v3736 = vpop.f32.mrf.mxu0
  %v3737 = vadd.f32 %v3552, %v3736
  %v3738 = vpop.f32.mrf.mxu0
  %3739 = vmatprep.mubr.bf16.mxu0 0
  %3740 = vmatmul.mubr.bf16.gmra.mxu0 %v2140
  %v3741 = vpop.f32.mrf.mxu0
  %v3742 = vadd.f32 %v3557, %v3741
  %v3743 = vpop.f32.mrf.mxu0
  %v3744 = vpop.f32.mrf.mxu0
  %v3745 = vadd.f32 %v3560, %v3744
  %v3746 = vpop.f32.mrf.mxu0
  %3747 = vmatprep.mubr.bf16.mxu0 0
  %3748 = vmatmul.mubr.bf16.gmra.mxu0 %v2143
  %v3749 = vpop.f32.mrf.mxu0
  %v3750 = vadd.f32 %v3565, %v3749
  %v3751 = vpop.f32.mrf.mxu0
  %v3752 = vpop.f32.mrf.mxu0
  %v3753 = vadd.f32 %v3568, %v3752
  %v3754 = vpop.f32.mrf.mxu0
  %3755 = vdwg.mxu0
  %v3756 = vmax.f32 %v3606, 0.0
  %v3757 = vmax.f32 %v3609, 0.0
  %v3758 = vmax.f32 %v3614, 0.0
  %v3759 = vmax.f32 %v3617, 0.0
  %v3760 = vmax.f32 %v3622, 0.0
  %v3761 = vmax.f32 %v3625, 0.0
  %v3762 = vmax.f32 %v3630, 0.0
  %v3763 = vmax.f32 %v3633, 0.0
  %v3764 = vmax.f32 %v3638, 0.0
  %v3765 = vmax.f32 %v3641, 0.0
  %v3766 = vmax.f32 %v3646, 0.0
  %v3767 = vmax.f32 %v3649, 0.0
  %v3768 = vmax.f32 %v3654, 0.0
  %v3769 = vmax.f32 %v3657, 0.0
  %v3770 = vmax.f32 %v3662, 0.0
  %v3771 = vmax.f32 %v3665, 0.0
  %v3772 = vmax.f32 %v3670, 0.0
  %v3773 = vmax.f32 %v3673, 0.0
  %v3774 = vmax.f32 %v3678, 0.0
  %v3775 = vmax.f32 %v3681, 0.0
  %v3776 = vmax.f32 %v3686, 0.0
  %v3777 = vmax.f32 %v3689, 0.0
  %v3778 = vmax.f32 %v3694, 0.0
  %v3779 = vmax.f32 %v3697, 0.0
  %v3780 = vmax.f32 %v3702, 0.0
  %v3781 = vmax.f32 %v3705, 0.0
  %v3782 = vmax.f32 %v3710, 0.0
  %v3783 = vmax.f32 %v3713, 0.0
  %v3784 = vmax.f32 %v3718, 0.0
  %v3785 = vmax.f32 %v3721, 0.0
  %v3786 = vmax.f32 %v3726, 0.0
  %v3787 = vmax.f32 %v3729, 0.0
  %v3788 = vmax.f32 %v3734, 0.0
  %v3789 = vmax.f32 %v3737, 0.0
  %v3790 = vmax.f32 %v3742, 0.0
  %v3791 = vmax.f32 %v3745, 0.0
  %v3792 = vmax.f32 %v3750, 0.0
  %v3793 = vmax.f32 %v3753, 0.0
  %v3794 = vld [vmem:[%s9] sm:$0x1]
  %v3796 = vlaneseq
  %v3797 = vshrl.u32 %v3796, 7
  %v3798 = vsub.s32 0, %v3797
  %v3799 = vrot.slane %v3794, %v3798
  %v3801 = vmul.f32 %v3756, %v3799
  %v3802 = vmul.f32 %v3757, %v3799
  %v3803 = vmul.f32 %v3758, %v3799
  %v3804 = vmul.f32 %v3759, %v3799
  %v3805 = vmul.f32 %v3760, %v3799
  %v3806 = vmul.f32 %v3761, %v3799
  %v3807 = vmul.f32 %v3762, %v3799
  %v3808 = vmul.f32 %v3763, %v3799
  %v3809 = vmul.f32 %v3764, %v3799
  %v3810 = vmul.f32 %v3765, %v3799
  %v3811 = vmul.f32 %v3766, %v3799
  %v3812 = vmul.f32 %v3767, %v3799
  %v3813 = vmul.f32 %v3768, %v3799
  %v3814 = vmul.f32 %v3769, %v3799
  %v3815 = vmul.f32 %v3770, %v3799
  %v3816 = vmul.f32 %v3771, %v3799
  %v3817 = vmul.f32 %v3772, %v3799
  %v3818 = vmul.f32 %v3773, %v3799
  %v3819 = vmul.f32 %v3774, %v3799
  %v3820 = vmul.f32 %v3775, %v3799
  %v3821 = vmul.f32 %v3776, %v3799
  %v3822 = vmul.f32 %v3777, %v3799
  %v3823 = vmul.f32 %v3778, %v3799
  %v3824 = vmul.f32 %v3779, %v3799
  %v3825 = vmul.f32 %v3780, %v3799
  %v3826 = vmul.f32 %v3781, %v3799
  %v3827 = vmul.f32 %v3782, %v3799
  %v3828 = vmul.f32 %v3783, %v3799
  %v3829 = vmul.f32 %v3784, %v3799
  %v3830 = vmul.f32 %v3785, %v3799
  %v3831 = vmul.f32 %v3786, %v3799
  %v3832 = vmul.f32 %v3787, %v3799
  %v3833 = vmul.f32 %v3788, %v3799
  %v3834 = vmul.f32 %v3789, %v3799
  %v3835 = vmul.f32 %v3790, %v3799
  %v3836 = vmul.f32 %v3791, %v3799
  %v3837 = vmul.f32 %v3792, %v3799
  %v3838 = vmul.f32 %v3793, %v3799
  %3839 = vadd.xlane.f32.xlu0 %v3801
  %v3840 = vpop.xlane.xlu0 %3839
  %3841 = vadd.xlane.f32.xlu0 %v3802
  %v3842 = vpop.xlane.xlu0 %3841
  %3843 = vadd.xlane.f32.xlu0 %v3803
  %v3844 = vpop.xlane.xlu0 %3843
  %3845 = vadd.xlane.f32.xlu0 %v3804
  %v3846 = vpop.xlane.xlu0 %3845
  %3847 = vadd.xlane.f32.xlu0 %v3805
  %v3848 = vpop.xlane.xlu0 %3847
  %3849 = vadd.xlane.f32.xlu0 %v3806
  %v3850 = vpop.xlane.xlu0 %3849
  %3851 = vadd.xlane.f32.xlu0 %v3807
  %v3852 = vpop.xlane.xlu0 %3851
  %3853 = vadd.xlane.f32.xlu0 %v3808
  %v3854 = vpop.xlane.xlu0 %3853
  %3855 = vadd.xlane.f32.xlu0 %v3809
  %v3856 = vpop.xlane.xlu0 %3855
  %3857 = vadd.xlane.f32.xlu0 %v3810
  %v3858 = vpop.xlane.xlu0 %3857
  %3859 = vadd.xlane.f32.xlu0 %v3811
  %v3860 = vpop.xlane.xlu0 %3859
  %3861 = vadd.xlane.f32.xlu0 %v3812
  %v3862 = vpop.xlane.xlu0 %3861
  %3863 = vadd.xlane.f32.xlu0 %v3813
  %v3864 = vpop.xlane.xlu0 %3863
  %3865 = vadd.xlane.f32.xlu0 %v3814
  %v3866 = vpop.xlane.xlu0 %3865
  %3867 = vadd.xlane.f32.xlu0 %v3815
  %v3868 = vpop.xlane.xlu0 %3867
  %3869 = vadd.xlane.f32.xlu0 %v3816
  %v3870 = vpop.xlane.xlu0 %3869
  %3871 = vadd.xlane.f32.xlu0 %v3817
  %v3872 = vpop.xlane.xlu0 %3871
  %3873 = vadd.xlane.f32.xlu0 %v3818
  %v3874 = vpop.xlane.xlu0 %3873
  %3875 = vadd.xlane.f32.xlu0 %v3819
  %v3876 = vpop.xlane.xlu0 %3875
  %3877 = vadd.xlane.f32.xlu0 %v3820
  %v3878 = vpop.xlane.xlu0 %3877
  %3879 = vadd.xlane.f32.xlu0 %v3821
  %v3880 = vpop.xlane.xlu0 %3879
  %3881 = vadd.xlane.f32.xlu0 %v3822
  %v3882 = vpop.xlane.xlu0 %3881
  %3883 = vadd.xlane.f32.xlu0 %v3823
  %v3884 = vpop.xlane.xlu0 %3883
  %3885 = vadd.xlane.f32.xlu0 %v3824
  %v3886 = vpop.xlane.xlu0 %3885
  %3887 = vadd.xlane.f32.xlu0 %v3825
  %v3888 = vpop.xlane.xlu0 %3887
  %3889 = vadd.xlane.f32.xlu0 %v3826
  %v3890 = vpop.xlane.xlu0 %3889
  %3891 = vadd.xlane.f32.xlu0 %v3827
  %v3892 = vpop.xlane.xlu0 %3891
  %3893 = vadd.xlane.f32.xlu0 %v3828
  %v3894 = vpop.xlane.xlu0 %3893
  %3895 = vadd.xlane.f32.xlu0 %v3829
  %v3896 = vpop.xlane.xlu0 %3895
  %3897 = vadd.xlane.f32.xlu0 %v3830
  %v3898 = vpop.xlane.xlu0 %3897
  %3899 = vadd.xlane.f32.xlu0 %v3831
  %v3900 = vpop.xlane.xlu0 %3899
  %3901 = vadd.xlane.f32.xlu0 %v3832
  %v3902 = vpop.xlane.xlu0 %3901
  %3903 = vadd.xlane.f32.xlu0 %v3833
  %v3904 = vpop.xlane.xlu0 %3903
  %3905 = vadd.xlane.f32.xlu0 %v3834
  %v3906 = vpop.xlane.xlu0 %3905
  %3907 = vadd.xlane.f32.xlu0 %v3835
  %v3908 = vpop.xlane.xlu0 %3907
  %3909 = vadd.xlane.f32.xlu0 %v3836
  %v3910 = vpop.xlane.xlu0 %3909
  %3911 = vadd.xlane.f32.xlu0 %v3837
  %v3912 = vpop.xlane.xlu0 %3911
  %3913 = vadd.xlane.f32.xlu0 %v3838
  %v3914 = vpop.xlane.xlu0 %3913
  %v3915 = vld [vmem:[#allocation2] sm:$0x1]
  %v3917 = vlaneseq
  %v3918 = vshrl.u32 %v3917, 7
  %v3919 = vsub.s32 0, %v3918
  %v3920 = vrot.slane %v3915, %v3919
  %v3922 = vadd.f32 %v3840, %v3920
  %v3923 = vadd.f32 %v3842, %v3920
  %v3924 = vadd.f32 %v3844, %v3920
  %v3925 = vadd.f32 %v3846, %v3920
  %v3926 = vadd.f32 %v3848, %v3920
  %v3927 = vadd.f32 %v3850, %v3920
  %v3928 = vadd.f32 %v3852, %v3920
  %v3929 = vadd.f32 %v3854, %v3920
  %v3930 = vadd.f32 %v3856, %v3920
  %v3931 = vadd.f32 %v3858, %v3920
  %v3932 = vadd.f32 %v3860, %v3920
  %v3933 = vadd.f32 %v3862, %v3920
  %v3934 = vadd.f32 %v3864, %v3920
  %v3935 = vadd.f32 %v3866, %v3920
  %v3936 = vadd.f32 %v3868, %v3920
  %v3937 = vadd.f32 %v3870, %v3920
  %v3938 = vadd.f32 %v3872, %v3920
  %v3939 = vadd.f32 %v3874, %v3920
  %v3940 = vadd.f32 %v3876, %v3920
  %v3941 = vadd.f32 %v3878, %v3920
  %v3942 = vadd.f32 %v3880, %v3920
  %v3943 = vadd.f32 %v3882, %v3920
  %v3944 = vadd.f32 %v3884, %v3920
  %v3945 = vadd.f32 %v3886, %v3920
  %v3946 = vadd.f32 %v3888, %v3920
  %v3947 = vadd.f32 %v3890, %v3920
  %v3948 = vadd.f32 %v3892, %v3920
  %v3949 = vadd.f32 %v3894, %v3920
  %v3950 = vadd.f32 %v3896, %v3920
  %v3951 = vadd.f32 %v3898, %v3920
  %v3952 = vadd.f32 %v3900, %v3920
  %v3953 = vadd.f32 %v3902, %v3920
  %v3954 = vadd.f32 %v3904, %v3920
  %v3955 = vadd.f32 %v3906, %v3920
  %v3956 = vadd.f32 %v3908, %v3920
  %v3957 = vadd.f32 %v3910, %v3920
  %v3958 = vadd.f32 %v3912, %v3920
  %v3959 = vadd.f32 %v3914, %v3920
  %vm3960 = vcmask 7168
  %3961 = vst.msk [vmem:[%s11] sm:$0xff] %vm3960, %v3922
  %3962 = vst.msk [vmem:[%s11 + $0x8] sm:$0xff] %vm3960, %v3923
  %3963 = vst.msk [vmem:[%s11 + $0x10] sm:$0xff] %vm3960, %v3924
  %3964 = vst.msk [vmem:[%s11 + $0x18] sm:$0xff] %vm3960, %v3925
  %3965 = vst.msk [vmem:[%s11 + $0x20] sm:$0xff] %vm3960, %v3926
  %3966 = vst.msk [vmem:[%s11 + $0x28] sm:$0xff] %vm3960, %v3927
  %3967 = vst.msk [vmem:[%s11 + $0x30] sm:$0xff] %vm3960, %v3928
  %3968 = vst.msk [vmem:[%s11 + $0x38] sm:$0xff] %vm3960, %v3929
  %3969 = vst.msk [vmem:[%s11 + $0x40] sm:$0xff] %vm3960, %v3930
  %3970 = vst.msk [vmem:[%s11 + $0x48] sm:$0xff] %vm3960, %v3931
  %3971 = vst.msk [vmem:[%s11 + $0x50] sm:$0xff] %vm3960, %v3932
  %3972 = vst.msk [vmem:[%s11 + $0x58] sm:$0xff] %vm3960, %v3933
  %3973 = vst.msk [vmem:[%s11 + $0x60] sm:$0xff] %vm3960, %v3934
  %3974 = vst.msk [vmem:[%s11 + $0x68] sm:$0xff] %vm3960, %v3935
  %3975 = vst.msk [vmem:[%s11 + $0x70] sm:$0xff] %vm3960, %v3936
  %3976 = vst.msk [vmem:[%s11 + $0x78] sm:$0xff] %vm3960, %v3937
  %3977 = vst.msk [vmem:[%s11 + $0x80] sm:$0xff] %vm3960, %v3938
  %3978 = vst.msk [vmem:[%s11 + $0x88] sm:$0xff] %vm3960, %v3939
  %3979 = vst.msk [vmem:[%s11 + $0x90] sm:$0xff] %vm3960, %v3940
  %3980 = vst.msk [vmem:[%s11 + $0x98] sm:$0xff] %vm3960, %v3941
  %3981 = vst.msk [vmem:[%s11 + $0xa0] sm:$0xff] %vm3960, %v3942
  %3982 = vst.msk [vmem:[%s11 + $0xa8] sm:$0xff] %vm3960, %v3943
  %3983 = vst.msk [vmem:[%s11 + $0xb0] sm:$0xff] %vm3960, %v3944
  %3984 = vst.msk [vmem:[%s11 + $0xb8] sm:$0xff] %vm3960, %v3945
  %3985 = vst.msk [vmem:[%s11 + $0xc0] sm:$0xff] %vm3960, %v3946
  %3986 = vst.msk [vmem:[%s11 + $0xc8] sm:$0xff] %vm3960, %v3947
  %3987 = vst.msk [vmem:[%s11 + $0xd0] sm:$0xff] %vm3960, %v3948
  %3988 = vst.msk [vmem:[%s11 + $0xd8] sm:$0xff] %vm3960, %v3949
  %3989 = vst.msk [vmem:[%s11 + $0xe0] sm:$0xff] %vm3960, %v3950
  %3990 = vst.msk [vmem:[%s11 + $0xe8] sm:$0xff] %vm3960, %v3951
  %3991 = vst.msk [vmem:[%s11 + $0xf0] sm:$0xff] %vm3960, %v3952
  %3992 = vst.msk [vmem:[%s11 + $0xf8] sm:$0xff] %vm3960, %v3953
  %3993 = vst.msk [vmem:[%s11 + $0x100] sm:$0xff] %vm3960, %v3954
  %3994 = vst.msk [vmem:[%s11 + $0x108] sm:$0xff] %vm3960, %v3955
  %3995 = vst.msk [vmem:[%s11 + $0x110] sm:$0xff] %vm3960, %v3956
  %3996 = vst.msk [vmem:[%s11 + $0x118] sm:$0xff] %vm3960, %v3957
  %3997 = vst.msk [vmem:[%s11 + $0x120] sm:$0xff] %vm3960, %v3958
  %3998 = vst.msk [vmem:[%s11 + $0x128] sm:$0xff] %vm3960, %v3959
  // Predicated region
  $region46: #{_lambda_.1} parent=0 // pred_check
    _
  $region47: #{_lambda_.1} parent=0 // pred_check_branch
    %4000 = sbr.rel (0) target = $region49
  $region48: #{_lambda_.1} parent=0 // pred_region
    _
  $region49: #{_lambda_.1} parent=0 // pred_fallthru
    _
  // Predicated region
  $region50: #{_lambda_.1} parent=0 // pred_check
    _
  $region51: #{_lambda_.1} parent=0 // pred_check_branch
    %4002 = sbr.rel (0) target = $region53
  $region52: #{_lambda_.1} parent=0 // pred_region
    _
  $region53: #{_lambda_.1} parent=0 // pred_fallthru
    _
  // Predicated region
  $region54: #{_lambda_.1} parent=0 // pred_check
    _
  $region55: #{_lambda_.1} parent=0 // pred_check_branch
    %4004 = sbr.rel (0) target = $region57
  $region56: #{_lambda_.1} parent=0 // pred_region
    _
  $region57: #{_lambda_.1} parent=0 // pred_fallthru
    _
  // Predicated region
  $region58: #{_lambda_.1} parent=0 // pred_check
    _
  $region59: #{_lambda_.1} parent=0 // pred_check_branch
    %4006 = sbr.rel (0) target = $region61
  $region60: #{_lambda_.1} parent=0 // pred_region
    _
  $region61: #{_lambda_.1} parent=0 // pred_fallthru
    _
  // Predicated region
  $region62: #{_lambda_.1} parent=0 // pred_check
    _
  $region63: #{_lambda_.1} parent=0 // pred_check_branch
    %4008 = sbr.rel (0) target = $region65
  $region64: #{_lambda_.1} parent=0 // pred_region
    _
  $region65: #{_lambda_.1} parent=0 // pred_fallthru
    _
  // Predicated region
  $region66: #{_lambda_.1} parent=0 // pred_check
    _
  $region67: #{_lambda_.1} parent=0 // pred_check_branch
    %4010 = sbr.rel (0) target = $region69
  $region68: #{_lambda_.1} parent=0 // pred_region
    _
  $region69: #{_lambda_.1} parent=0 // pred_fallthru
    _

</llo_original>
